<compile_context>
chip_gen: v5e
topology: v5e:2x2
jax: 0.10.0
libtpu: 0.0.40
codegen_flags: <defaults>
</compile_context>

<pallas_src>
import functools

import jax
import jax.numpy as jnp
from jax.experimental import pallas as pl
from jax.experimental.pallas import tpu as pltpu


# ----------------------------------------------------------------------------
# Fused Pallas kernel: entire StackGNN forward
# ----------------------------------------------------------------------------
def _stack_gnn_fused_kernel(*refs, n_gn, n_head, ehid):
    """refs = [nf, ef, src_col, dst_col, dst_row, *flat_params, out]."""
    out_ref = refs[-1]
    nf_ref, ef_ref, src_ref, dstc_ref, dstr_ref = refs[:5]
    p = refs[5:-1]

    f32 = jnp.float32
    bf16 = jnp.bfloat16

    h = nf_ref[...]                       # [N, nin] f32
    e = ef_ref[...]                       # [E, ein] f32
    src_c = src_ref[...]                  # [E, 1] int32
    dst_c = dstc_ref[...]                 # [E, 1] int32
    dst_r = dstr_ref[...]                 # [1, E] int32

    num_edges = src_c.shape[0]
    num_nodes = h.shape[0]

    # In-register 0/1 incidence built from indices (no [E,N] HBM inputs).
    # Exact in bf16 (values are 0/1); used only as MXU gather operands.
    iota_en = jax.lax.broadcasted_iota(jnp.int32, (num_edges, num_nodes), 1)
    S = jnp.where(iota_en == src_c, 1.0, 0.0).astype(bf16)     # [E, N]
    D = jnp.where(iota_en == dst_c, 1.0, 0.0).astype(bf16)     # [E, N]
    iota_ne = jax.lax.broadcasted_iota(jnp.int32, (num_nodes, num_edges), 0)
    DT = jnp.where(iota_ne == dst_r, 1.0, 0.0)                 # [N, E] f32 (exact agg)

    idx = 0

    def nxt():
        nonlocal idx
        r = p[idx]
        idx += 1
        return r[...]

    for _ in range(n_gn):
        ew1s, ew1d, ew1e, eb1 = nxt(), nxt(), nxt(), nxt()     # bf16 W, f32 b
        ew2, eb2 = nxt(), nxt()            # fused [H, Zpad]: [e'|logit|ones|0]
        nw1h, nw1a, nb1 = nxt(), nxt(), nxt()
        nw2, nb2 = nxt(), nxt()

        # ---- edge update: MLP([h_src, h_dst, e]) with split weights (no concat)
        hb = h.astype(bf16)
        h_src = jnp.dot(S, hb, preferred_element_type=f32)     # [E, nin]
        h_dst = jnp.dot(D, hb, preferred_element_type=f32)     # [E, nin]
        y = (jnp.dot(h_src.astype(bf16), ew1s, preferred_element_type=f32)
             + jnp.dot(h_dst.astype(bf16), ew1d, preferred_element_type=f32)
             + jnp.dot(e.astype(bf16), ew1e, preferred_element_type=f32) + eb1)
        y = jnp.maximum(y, 0.0)
        # fused last edge-MLP layer: z = [e' | attn logit | ones | zero pad]
        z = jnp.dot(y.astype(bf16), ew2, preferred_element_type=f32) + eb2
        e_new = z[:, :ehid]                                    # [E, ehid]
        logit = z[:, ehid:ehid + 1]                            # [E, 1]

        # ---- softmax over incoming edges per destination
        # global-max stabilizer (algebraically identical after normalization)
        m = jnp.max(logit, axis=0, keepdims=True)              # [1, 1]
        ex = jnp.exp(logit - m)                                # [E, 1]
        packed = ex * z                                        # [E, Zpad]
        # single MXU push: numerator (e' cols) + denominator (ones col)
        agg = jnp.dot(DT, packed, preferred_element_type=f32)  # [N, Zpad]
        numer = agg[:, :ehid]                                  # [N, ehid]
        denom = agg[:, ehid + 1:ehid + 2]                      # [N, 1]
        inv = pl.reciprocal(jnp.maximum(denom, 1e-20), approx=True)
        aggregated = numer * inv                               # [N, ehid]

        # ---- node update: MLP([h, aggregated]) with split weights (no concat)
        hy = (jnp.dot(h.astype(bf16), nw1h, preferred_element_type=f32)
              + jnp.dot(aggregated.astype(bf16), nw1a, preferred_element_type=f32)
              + nb1)
        hy = jnp.maximum(hy, 0.0)
        h = jnp.dot(hy.astype(bf16), nw2, preferred_element_type=f32) + nb2
        e = e_new

    # ---- node regression head (predict_edge=False branch); last layer padded
    x = h
    for li in range(n_head):
        w, b = nxt(), nxt()
        x = jnp.dot(x.astype(bf16), w, preferred_element_type=f32) + b
        if li < n_head - 1:
            x = jnp.maximum(x, 0.0)
    out_ref[...] = x.astype(out_ref.dtype)                     # lane-dense [N, 128]


def stack_gnn_forward(flat_params, nf, ef, src_col, dst_col, dst_row,
                      *, n_gn, n_head, ehid, nf_outdim):
    n_nodes = nf.shape[0]
    out_pad = flat_params[-2].shape[1]                         # padded head width
    inputs = [nf, ef, src_col, dst_col, dst_row] + list(flat_params)
    kernel = functools.partial(_stack_gnn_fused_kernel,
                               n_gn=n_gn, n_head=n_head, ehid=ehid)
    in_specs = [pl.BlockSpec(a.shape, lambda i: (0, 0)) for a in inputs]

    # VMEM budget sized from the actual resident footprint (+ headroom), capped
    # below v7x's 64 MiB physical VMEM.
    total_bytes = sum(int(a.size) * a.dtype.itemsize for a in inputs)
    total_bytes += n_nodes * out_pad * 4
    vmem_limit = int(min(64 << 20, max(8 << 20, 4 * total_bytes)))

    out = pl.pallas_call(
        kernel,
        out_shape=jax.ShapeDtypeStruct((n_nodes, out_pad), jnp.float32),
        grid=(1,),
        in_specs=in_specs,
        out_specs=pl.BlockSpec((n_nodes, out_pad), lambda i: (0, 0)),
        compiler_params=pltpu.CompilerParams(
            dimension_semantics=("arbitrary",),
            vmem_limit_bytes=vmem_limit),
    )(*inputs)
    return out[:, :nf_outdim]


fwd = jax.jit(stack_gnn_forward,
              static_argnames=("n_gn", "n_head", "ehid", "nf_outdim"))


# ----------------------------------------------------------------------------
# Parameter init (deterministic, in-script) + packing for the fused kernel
# ----------------------------------------------------------------------------
def init_mlp(key, dims):
    params = []
    keys = jax.random.split(key, len(dims) - 1)
    for k, din, dout in zip(keys, dims[:-1], dims[1:]):
        kw, kb = jax.random.split(k)
        w = jax.random.normal(kw, (din, dout), jnp.float32) / jnp.sqrt(float(din))
        b = 0.1 * jax.random.normal(kb, (1, dout), jnp.float32)
        params.append((w, b))
    return params


def init_gn_layer(key, nin, ein, nhid, ehid, mlp_neurons):
    k1, k2, k3 = jax.random.split(key, 3)
    return dict(
        edge=init_mlp(k1, [2 * nin + ein] + list(mlp_neurons) + [ehid]),
        attn=init_mlp(k2, [ehid, 1]),
        node=init_mlp(k3, [nin + ehid] + list(mlp_neurons) + [nhid]),
    )


def init_stack_gnn(key, nf_dim, ef_dim, hnf_dim, hef_dim, nf_outdim, n_layers,
                   mlp_num_neurons=(128,), reg_num_neurons=(64, 32)):
    assert n_layers >= 1
    num_hidden_gn = n_layers - 1
    keys = jax.random.split(key, num_hidden_gn + 3)
    layers = [init_gn_layer(keys[0], nf_dim, ef_dim, hnf_dim, hef_dim, mlp_num_neurons)]
    for i in range(num_hidden_gn):
        layers.append(init_gn_layer(keys[1 + i], hnf_dim, hef_dim, hnf_dim, hef_dim,
                                    mlp_num_neurons))
    layers.append(init_gn_layer(keys[1 + num_hidden_gn], hnf_dim, hef_dim, hnf_dim,
                                hef_dim, mlp_num_neurons))
    node_nn = init_mlp(keys[-1], [hnf_dim] + list(reg_num_neurons) + [nf_outdim])
    return dict(gn_layers=layers, node_nn=node_nn)


def _bf16(x):
    return x.astype(jnp.bfloat16)


def pack_gn_layer(layer, nin, ein, ehid, z_pad):
    """Split first-layer weights by input block, fold the attn Linear into the
    last edge-MLP layer, append a ones-column (weight 0 / bias 1), and zero-pad
    to a 128-lane-aligned width.  Weights -> bf16, biases stay f32."""
    assert len(layer["edge"]) == 2 and len(layer["node"]) == 2
    (ew1, eb1), (ew2, eb2) = layer["edge"]
    (wa, ba), = layer["attn"]                      # [ehid, 1], [1, 1]
    (nw1, nb1), (nw2, nb2) = layer["node"]
    hdim = ew2.shape[0]
    # fused columns: [e_new (ehid) | attn logit (1) | ones (1) | zero pad]
    ew2f = jnp.zeros((hdim, z_pad), jnp.float32)
    ew2f = ew2f.at[:, :ehid].set(ew2)
    ew2f = ew2f.at[:, ehid:ehid + 1].set(ew2 @ wa)
    eb2f = jnp.zeros((1, z_pad), jnp.float32)
    eb2f = eb2f.at[:, :ehid].set(eb2)
    eb2f = eb2f.at[:, ehid:ehid + 1].set(eb2 @ wa + ba)
    eb2f = eb2f.at[:, ehid + 1].set(1.0)           # ones column from the bias
    return [_bf16(ew1[:nin]), _bf16(ew1[nin:2 * nin]), _bf16(ew1[2 * nin:]), eb1,
            _bf16(ew2f), eb2f,
            _bf16(nw1[:nin]), _bf16(nw1[nin:]), nb1,
            _bf16(nw2), nb2]


def flatten_params(params, nf_dim, ef_dim, hnf_dim, hef_dim, z_pad, out_pad):
    flat = []
    dims = [(nf_dim, ef_dim)] + [(hnf_dim, hef_dim)] * (len(params["gn_layers"]) - 1)
    for layer, (nin, ein) in zip(params["gn_layers"], dims):
        flat += pack_gn_layer(layer, nin, ein, hef_dim, z_pad)
    head = list(params["node_nn"])
    # lane-dense final output: zero-pad the last head layer to out_pad columns
    w_last, b_last = head[-1]
    dout = w_last.shape[1]
    w_pad = jnp.zeros((w_last.shape[0], out_pad), jnp.float32).at[:, :dout].set(w_last)
    b_pad = jnp.zeros((1, out_pad), jnp.float32).at[:, :dout].set(b_last)
    head = head[:-1] + [(w_pad, b_pad)]
    for w, b in head:
        flat += [_bf16(w), b]
    return flat


# ----------------------------------------------------------------------------
# Pure-JAX f32 reference (unfused, unfolded, per-dst max) for a sanity check
# ----------------------------------------------------------------------------
def reference_forward(params, nf, ef, src, dst, n_nodes):
    def mlp(x, ps):
        for i, (w, b) in enumerate(ps):
            x = x @ w + b
            if i < len(ps) - 1:
                x = jax.nn.relu(x)
        return x

    h, e = nf, ef
    D = jax.nn.one_hot(dst, n_nodes, dtype=jnp.float32)       # [E, N]
    for layer in params["gn_layers"]:
        x = jnp.concatenate([h[src], h[dst], e], axis=-1)
        e_new = mlp(x, layer["edge"])
        wa, ba = layer["attn"][0]
        logit = e_new @ wa + ba                               # [E, 1]
        masked = jnp.where(D > 0, logit, -1e30)
        m = masked.max(axis=0, keepdims=True)
        m_e = (D * m).sum(axis=1, keepdims=True)
        ex = jnp.exp(logit - m_e)
        denom = D.T @ ex
        numer = D.T @ (ex * e_new)
        agg = numer / jnp.maximum(denom, 1e-20)
        h = mlp(jnp.concatenate([h, agg], axis=-1), layer["node"])
        e = e_new
    return mlp(h, params["node_nn"])


# ----------------------------------------------------------------------------
if __name__ == "__main__":
    key = jax.random.PRNGKey(0)
    k_nf, k_ef, k_src, k_dst, k_params = jax.random.split(key, 5)

    # small synthetic graph; 128-lane-aligned hidden widths per the perf review
    N_NODES, N_EDGES = 8, 16
    NF_DIM, EF_DIM = 6, 4
    HNF_DIM, HEF_DIM = 128, 128
    NF_OUTDIM = 3
    N_LAYERS = 2
    OUT_PAD = 128                                       # lane-dense output slab
    Z_PAD = ((HEF_DIM + 2 + 127) // 128) * 128          # fused edge slab width

    nf = jax.random.normal(k_nf, (N_NODES, NF_DIM), jnp.float32)
    ef = jax.random.normal(k_ef, (N_EDGES, EF_DIM), jnp.float32)
    src = jax.random.randint(k_src, (N_EDGES,), 0, N_NODES)
    dst = jax.random.randint(k_dst, (N_EDGES,), 0, N_NODES)
    src_col = src.astype(jnp.int32).reshape(N_EDGES, 1)
    dst_col = dst.astype(jnp.int32).reshape(N_EDGES, 1)
    dst_row = dst.astype(jnp.int32).reshape(1, N_EDGES)

    params = init_stack_gnn(
        k_params, NF_DIM, EF_DIM, HNF_DIM, HEF_DIM, NF_OUTDIM, N_LAYERS,
        mlp_num_neurons=(128,), reg_num_neurons=(64, 32),
    )
    flat = flatten_params(params, NF_DIM, EF_DIM, HNF_DIM, HEF_DIM, Z_PAD, OUT_PAD)
    n_gn = len(params["gn_layers"])        # 3 = input + (n_layers-1) hidden + output
    n_head = len(params["node_nn"])        # 3

    out = fwd(flat, nf, ef, src_col, dst_col, dst_row,
              n_gn=n_gn, n_head=n_head, ehid=HEF_DIM, nf_outdim=NF_OUTDIM)
    jax.block_until_ready(out)

    assert out.shape == (N_NODES, NF_OUTDIM)
    assert out.dtype == jnp.float32
    assert bool(jnp.all(jnp.isfinite(out)))

    # sanity check against the unfused pure-f32 reference (bf16 MXU operands in
    # the kernel -> loose tolerance)
    ref = reference_forward(params, nf, ef, src, dst, N_NODES)
    jax.block_until_ready(ref)
    max_err = float(jnp.max(jnp.abs(out - ref)))
    rel_err = float(jnp.linalg.norm(out - ref) / (jnp.linalg.norm(ref) + 1e-12))
    assert max_err < 2.5e-1 and rel_err < 1e-1, (max_err, rel_err)

    print("KERNEL_OK")
</pallas_src>

<mosaic_0001>
module attributes {stable_mosaic.version = 11 : i64} {
  func.func @_stack_gnn_fused_kernel(%arg0: i32, %arg1: memref<8x6xf32, #tpu.memory_space<vmem>>, %arg2: memref<16x4xf32, #tpu.memory_space<vmem>>, %arg3: memref<16x1xi32, #tpu.memory_space<vmem>>, %arg4: memref<16x1xi32, #tpu.memory_space<vmem>>, %arg5: memref<1x16xi32, #tpu.memory_space<vmem>>, %arg6: memref<6x128xbf16, #tpu.memory_space<vmem>>, %arg7: memref<6x128xbf16, #tpu.memory_space<vmem>>, %arg8: memref<4x128xbf16, #tpu.memory_space<vmem>>, %arg9: memref<1x128xf32, #tpu.memory_space<vmem>>, %arg10: memref<128x256xbf16, #tpu.memory_space<vmem>>, %arg11: memref<1x256xf32, #tpu.memory_space<vmem>>, %arg12: memref<6x128xbf16, #tpu.memory_space<vmem>>, %arg13: memref<128x128xbf16, #tpu.memory_space<vmem>>, %arg14: memref<1x128xf32, #tpu.memory_space<vmem>>, %arg15: memref<128x128xbf16, #tpu.memory_space<vmem>>, %arg16: memref<1x128xf32, #tpu.memory_space<vmem>>, %arg17: memref<128x128xbf16, #tpu.memory_space<vmem>>, %arg18: memref<128x128xbf16, #tpu.memory_space<vmem>>, %arg19: memref<128x128xbf16, #tpu.memory_space<vmem>>, %arg20: memref<1x128xf32, #tpu.memory_space<vmem>>, %arg21: memref<128x256xbf16, #tpu.memory_space<vmem>>, %arg22: memref<1x256xf32, #tpu.memory_space<vmem>>, %arg23: memref<128x128xbf16, #tpu.memory_space<vmem>>, %arg24: memref<128x128xbf16, #tpu.memory_space<vmem>>, %arg25: memref<1x128xf32, #tpu.memory_space<vmem>>, %arg26: memref<128x128xbf16, #tpu.memory_space<vmem>>, %arg27: memref<1x128xf32, #tpu.memory_space<vmem>>, %arg28: memref<128x128xbf16, #tpu.memory_space<vmem>>, %arg29: memref<128x128xbf16, #tpu.memory_space<vmem>>, %arg30: memref<128x128xbf16, #tpu.memory_space<vmem>>, %arg31: memref<1x128xf32, #tpu.memory_space<vmem>>, %arg32: memref<128x256xbf16, #tpu.memory_space<vmem>>, %arg33: memref<1x256xf32, #tpu.memory_space<vmem>>, %arg34: memref<128x128xbf16, #tpu.memory_space<vmem>>, %arg35: memref<128x128xbf16, #tpu.memory_space<vmem>>, %arg36: memref<1x128xf32, #tpu.memory_space<vmem>>, %arg37: memref<128x128xbf16, #tpu.memory_space<vmem>>, %arg38: memref<1x128xf32, #tpu.memory_space<vmem>>, %arg39: memref<128x64xbf16, #tpu.memory_space<vmem>>, %arg40: memref<1x64xf32, #tpu.memory_space<vmem>>, %arg41: memref<64x32xbf16, #tpu.memory_space<vmem>>, %arg42: memref<1x32xf32, #tpu.memory_space<vmem>>, %arg43: memref<32x128xbf16, #tpu.memory_space<vmem>>, %arg44: memref<1x128xf32, #tpu.memory_space<vmem>>, %arg45: memref<8x128xf32, #tpu.memory_space<vmem>>) attributes {dimension_semantics = [#tpu.dimension_semantics<arbitrary>], iteration_bounds = array<i64: 1>, scalar_prefetch = 0 : i64, scratch_operands = 0 : i64, tpu.core_type = #tpu.core_type<tc>, window_params = [{pipeline_mode = #tpu.pipeline_mode<synchronous>, transform_indices = @transform_0, window_bounds = array<i64: 8, 6>}, {pipeline_mode = #tpu.pipeline_mode<synchronous>, transform_indices = @transform_1, window_bounds = array<i64: 16, 4>}, {pipeline_mode = #tpu.pipeline_mode<synchronous>, transform_indices = @transform_2, window_bounds = array<i64: 16, 1>}, {pipeline_mode = #tpu.pipeline_mode<synchronous>, transform_indices = @transform_3, window_bounds = array<i64: 16, 1>}, {pipeline_mode = #tpu.pipeline_mode<synchronous>, transform_indices = @transform_4, window_bounds = array<i64: 1, 16>}, {pipeline_mode = #tpu.pipeline_mode<synchronous>, transform_indices = @transform_5, window_bounds = array<i64: 6, 128>}, {pipeline_mode = #tpu.pipeline_mode<synchronous>, transform_indices = @transform_6, window_bounds = array<i64: 6, 128>}, {pipeline_mode = #tpu.pipeline_mode<synchronous>, transform_indices = @transform_7, window_bounds = array<i64: 4, 128>}, {pipeline_mode = #tpu.pipeline_mode<synchronous>, transform_indices = @transform_8, window_bounds = array<i64: 1, 128>}, {pipeline_mode = #tpu.pipeline_mode<synchronous>, transform_indices = @transform_9, window_bounds = array<i64: 128, 256>}, {pipeline_mode = #tpu.pipeline_mode<synchronous>, transform_indices = @transform_10, window_bounds = array<i64: 1, 256>}, {pipeline_mode = #tpu.pipeline_mode<synchronous>, transform_indices = @transform_11, window_bounds = array<i64: 6, 128>}, {pipeline_mode = #tpu.pipeline_mode<synchronous>, transform_indices = @transform_12, window_bounds = array<i64: 128, 128>}, {pipeline_mode = #tpu.pipeline_mode<synchronous>, transform_indices = @transform_13, window_bounds = array<i64: 1, 128>}, {pipeline_mode = #tpu.pipeline_mode<synchronous>, transform_indices = @transform_14, window_bounds = array<i64: 128, 128>}, {pipeline_mode = #tpu.pipeline_mode<synchronous>, transform_indices = @transform_15, window_bounds = array<i64: 1, 128>}, {pipeline_mode = #tpu.pipeline_mode<synchronous>, transform_indices = @transform_16, window_bounds = array<i64: 128, 128>}, {pipeline_mode = #tpu.pipeline_mode<synchronous>, transform_indices = @transform_17, window_bounds = array<i64: 128, 128>}, {pipeline_mode = #tpu.pipeline_mode<synchronous>, transform_indices = @transform_18, window_bounds = array<i64: 128, 128>}, {pipeline_mode = #tpu.pipeline_mode<synchronous>, transform_indices = @transform_19, window_bounds = array<i64: 1, 128>}, {pipeline_mode = #tpu.pipeline_mode<synchronous>, transform_indices = @transform_20, window_bounds = array<i64: 128, 256>}, {pipeline_mode = #tpu.pipeline_mode<synchronous>, transform_indices = @transform_21, window_bounds = array<i64: 1, 256>}, {pipeline_mode = #tpu.pipeline_mode<synchronous>, transform_indices = @transform_22, window_bounds = array<i64: 128, 128>}, {pipeline_mode = #tpu.pipeline_mode<synchronous>, transform_indices = @transform_23, window_bounds = array<i64: 128, 128>}, {pipeline_mode = #tpu.pipeline_mode<synchronous>, transform_indices = @transform_24, window_bounds = array<i64: 1, 128>}, {pipeline_mode = #tpu.pipeline_mode<synchronous>, transform_indices = @transform_25, window_bounds = array<i64: 128, 128>}, {pipeline_mode = #tpu.pipeline_mode<synchronous>, transform_indices = @transform_26, window_bounds = array<i64: 1, 128>}, {pipeline_mode = #tpu.pipeline_mode<synchronous>, transform_indices = @transform_27, window_bounds = array<i64: 128, 128>}, {pipeline_mode = #tpu.pipeline_mode<synchronous>, transform_indices = @transform_28, window_bounds = array<i64: 128, 128>}, {pipeline_mode = #tpu.pipeline_mode<synchronous>, transform_indices = @transform_29, window_bounds = array<i64: 128, 128>}, {pipeline_mode = #tpu.pipeline_mode<synchronous>, transform_indices = @transform_30, window_bounds = array<i64: 1, 128>}, {pipeline_mode = #tpu.pipeline_mode<synchronous>, transform_indices = @transform_31, window_bounds = array<i64: 128, 256>}, {pipeline_mode = #tpu.pipeline_mode<synchronous>, transform_indices = @transform_32, window_bounds = array<i64: 1, 256>}, {pipeline_mode = #tpu.pipeline_mode<synchronous>, transform_indices = @transform_33, window_bounds = array<i64: 128, 128>}, {pipeline_mode = #tpu.pipeline_mode<synchronous>, transform_indices = @transform_34, window_bounds = array<i64: 128, 128>}, {pipeline_mode = #tpu.pipeline_mode<synchronous>, transform_indices = @transform_35, window_bounds = array<i64: 1, 128>}, {pipeline_mode = #tpu.pipeline_mode<synchronous>, transform_indices = @transform_36, window_bounds = array<i64: 128, 128>}, {pipeline_mode = #tpu.pipeline_mode<synchronous>, transform_indices = @transform_37, window_bounds = array<i64: 1, 128>}, {pipeline_mode = #tpu.pipeline_mode<synchronous>, transform_indices = @transform_38, window_bounds = array<i64: 128, 64>}, {pipeline_mode = #tpu.pipeline_mode<synchronous>, transform_indices = @transform_39, window_bounds = array<i64: 1, 64>}, {pipeline_mode = #tpu.pipeline_mode<synchronous>, transform_indices = @transform_40, window_bounds = array<i64: 64, 32>}, {pipeline_mode = #tpu.pipeline_mode<synchronous>, transform_indices = @transform_41, window_bounds = array<i64: 1, 32>}, {pipeline_mode = #tpu.pipeline_mode<synchronous>, transform_indices = @transform_42, window_bounds = array<i64: 32, 128>}, {pipeline_mode = #tpu.pipeline_mode<synchronous>, transform_indices = @transform_43, window_bounds = array<i64: 1, 128>}, {pipeline_mode = #tpu.pipeline_mode<synchronous>, transform_indices = @transform_44, window_bounds = array<i64: 8, 128>}]} {
    %c0 = arith.constant 0 : index
    %c0_0 = arith.constant 0 : index
    %0 = vector.load %arg1[%c0, %c0_0] : memref<8x6xf32, #tpu.memory_space<vmem>>, vector<8x6xf32>
    %c0_1 = arith.constant 0 : index
    %c0_2 = arith.constant 0 : index
    %1 = vector.load %arg2[%c0_1, %c0_2] : memref<16x4xf32, #tpu.memory_space<vmem>>, vector<16x4xf32>
    %c0_3 = arith.constant 0 : index
    %c0_4 = arith.constant 0 : index
    %2 = vector.load %arg3[%c0_3, %c0_4] : memref<16x1xi32, #tpu.memory_space<vmem>>, vector<16x1xi32>
    %c0_5 = arith.constant 0 : index
    %c0_6 = arith.constant 0 : index
    %3 = vector.load %arg4[%c0_5, %c0_6] : memref<16x1xi32, #tpu.memory_space<vmem>>, vector<16x1xi32>
    %c0_7 = arith.constant 0 : index
    %c0_8 = arith.constant 0 : index
    %4 = vector.load %arg5[%c0_7, %c0_8] : memref<1x16xi32, #tpu.memory_space<vmem>>, vector<1x16xi32>
    %5 = tpu.iota {dimensions = array<i32: 1>} : vector<16x8xi32>
    %6 = vector.broadcast %2 : vector<16x1xi32> to vector<16x8xi32>
    %7 = arith.cmpi eq, %5, %6 : vector<16x8xi32>
    %cst = arith.constant 1.000000e+00 : f32
    %cst_9 = arith.constant 0.000000e+00 : f32
    %8 = vector.broadcast %cst : f32 to vector<16x8xf32>
    %9 = vector.broadcast %cst_9 : f32 to vector<16x8xf32>
    %10 = arith.select %7, %8, %9 : vector<16x8xi1>, vector<16x8xf32>
    %11 = arith.truncf %10 : vector<16x8xf32> to vector<16x8xbf16>
    %12 = vector.broadcast %3 : vector<16x1xi32> to vector<16x8xi32>
    %13 = arith.cmpi eq, %5, %12 : vector<16x8xi32>
    %cst_10 = arith.constant 1.000000e+00 : f32
    %cst_11 = arith.constant 0.000000e+00 : f32
    %14 = vector.broadcast %cst_10 : f32 to vector<16x8xf32>
    %15 = vector.broadcast %cst_11 : f32 to vector<16x8xf32>
    %16 = arith.select %13, %14, %15 : vector<16x8xi1>, vector<16x8xf32>
    %17 = arith.truncf %16 : vector<16x8xf32> to vector<16x8xbf16>
    %18 = tpu.iota {dimensions = array<i32: 0>} : vector<8x16xi32>
    %19 = vector.broadcast %4 : vector<1x16xi32> to vector<8x16xi32>
    %20 = arith.cmpi eq, %18, %19 : vector<8x16xi32>
    %cst_12 = arith.constant 1.000000e+00 : f32
    %cst_13 = arith.constant 0.000000e+00 : f32
    %21 = vector.broadcast %cst_12 : f32 to vector<8x16xf32>
    %22 = vector.broadcast %cst_13 : f32 to vector<8x16xf32>
    %23 = arith.select %20, %21, %22 : vector<8x16xi1>, vector<8x16xf32>
    %c0_14 = arith.constant 0 : index
    %c0_15 = arith.constant 0 : index
    %24 = vector.load %arg6[%c0_14, %c0_15] : memref<6x128xbf16, #tpu.memory_space<vmem>>, vector<6x128xbf16>
    %c0_16 = arith.constant 0 : index
    %c0_17 = arith.constant 0 : index
    %25 = vector.load %arg7[%c0_16, %c0_17] : memref<6x128xbf16, #tpu.memory_space<vmem>>, vector<6x128xbf16>
    %c0_18 = arith.constant 0 : index
    %c0_19 = arith.constant 0 : index
    %26 = vector.load %arg8[%c0_18, %c0_19] : memref<4x128xbf16, #tpu.memory_space<vmem>>, vector<4x128xbf16>
    %c0_20 = arith.constant 0 : index
    %c0_21 = arith.constant 0 : index
    %27 = vector.load %arg9[%c0_20, %c0_21] : memref<1x128xf32, #tpu.memory_space<vmem>>, vector<1x128xf32>
    %c0_22 = arith.constant 0 : index
    %c0_23 = arith.constant 0 : index
    %28 = vector.load %arg10[%c0_22, %c0_23] : memref<128x256xbf16, #tpu.memory_space<vmem>>, vector<128x256xbf16>
    %c0_24 = arith.constant 0 : index
    %c0_25 = arith.constant 0 : index
    %29 = vector.load %arg11[%c0_24, %c0_25] : memref<1x256xf32, #tpu.memory_space<vmem>>, vector<1x256xf32>
    %c0_26 = arith.constant 0 : index
    %c0_27 = arith.constant 0 : index
    %30 = vector.load %arg12[%c0_26, %c0_27] : memref<6x128xbf16, #tpu.memory_space<vmem>>, vector<6x128xbf16>
    %c0_28 = arith.constant 0 : index
    %c0_29 = arith.constant 0 : index
    %31 = vector.load %arg13[%c0_28, %c0_29] : memref<128x128xbf16, #tpu.memory_space<vmem>>, vector<128x128xbf16>
    %c0_30 = arith.constant 0 : index
    %c0_31 = arith.constant 0 : index
    %32 = vector.load %arg14[%c0_30, %c0_31] : memref<1x128xf32, #tpu.memory_space<vmem>>, vector<1x128xf32>
    %c0_32 = arith.constant 0 : index
    %c0_33 = arith.constant 0 : index
    %33 = vector.load %arg15[%c0_32, %c0_33] : memref<128x128xbf16, #tpu.memory_space<vmem>>, vector<128x128xbf16>
    %c0_34 = arith.constant 0 : index
    %c0_35 = arith.constant 0 : index
    %34 = vector.load %arg16[%c0_34, %c0_35] : memref<1x128xf32, #tpu.memory_space<vmem>>, vector<1x128xf32>
    %35 = arith.truncf %0 : vector<8x6xf32> to vector<8x6xbf16>
    %cst_36 = arith.constant dense<0.000000e+00> : vector<16x6xf32>
    %36 = tpu.matmul %11, %35, %cst_36 {dimension_numbers = #tpu.dot_dimension_numbers<[1], [0], [0], [1], [0, 0, 1, 1], [], []>} : vector<16x8xbf16>, vector<8x6xbf16>, vector<16x6xf32> -> vector<16x6xf32>
    %cst_37 = arith.constant dense<0.000000e+00> : vector<16x6xf32>
    %37 = tpu.matmul %17, %35, %cst_37 {dimension_numbers = #tpu.dot_dimension_numbers<[1], [0], [0], [1], [0, 0, 1, 1], [], []>} : vector<16x8xbf16>, vector<8x6xbf16>, vector<16x6xf32> -> vector<16x6xf32>
    %38 = arith.truncf %36 : vector<16x6xf32> to vector<16x6xbf16>
    %cst_38 = arith.constant dense<0.000000e+00> : vector<16x128xf32>
    %39 = tpu.matmul %38, %24, %cst_38 {dimension_numbers = #tpu.dot_dimension_numbers<[1], [0], [0], [1], [0, 0, 1, 1], [], []>} : vector<16x6xbf16>, vector<6x128xbf16>, vector<16x128xf32> -> vector<16x128xf32>
    %40 = arith.truncf %37 : vector<16x6xf32> to vector<16x6xbf16>
    %cst_39 = arith.constant dense<0.000000e+00> : vector<16x128xf32>
    %41 = tpu.matmul %40, %25, %cst_39 {dimension_numbers = #tpu.dot_dimension_numbers<[1], [0], [0], [1], [0, 0, 1, 1], [], []>} : vector<16x6xbf16>, vector<6x128xbf16>, vector<16x128xf32> -> vector<16x128xf32>
    %42 = arith.addf %39, %41 : vector<16x128xf32>
    %43 = arith.truncf %1 : vector<16x4xf32> to vector<16x4xbf16>
    %cst_40 = arith.constant dense<0.000000e+00> : vector<16x128xf32>
    %44 = tpu.matmul %43, %26, %cst_40 {dimension_numbers = #tpu.dot_dimension_numbers<[1], [0], [0], [1], [0, 0, 1, 1], [], []>} : vector<16x4xbf16>, vector<4x128xbf16>, vector<16x128xf32> -> vector<16x128xf32>
    %45 = arith.addf %42, %44 : vector<16x128xf32>
    %46 = vector.broadcast %27 : vector<1x128xf32> to vector<16x128xf32>
    %47 = arith.addf %45, %46 : vector<16x128xf32>
    %cst_41 = arith.constant 0.000000e+00 : f32
    %48 = vector.broadcast %cst_41 : f32 to vector<16x128xf32>
    %49 = arith.maximumf %47, %48 : vector<16x128xf32>
    %50 = arith.truncf %49 : vector<16x128xf32> to vector<16x128xbf16>
    %cst_42 = arith.constant dense<0.000000e+00> : vector<16x256xf32>
    %51 = tpu.matmul %50, %28, %cst_42 {dimension_numbers = #tpu.dot_dimension_numbers<[1], [0], [0], [1], [0, 0, 1, 1], [], []>} : vector<16x128xbf16>, vector<128x256xbf16>, vector<16x256xf32> -> vector<16x256xf32>
    %52 = vector.broadcast %29 : vector<1x256xf32> to vector<16x256xf32>
    %53 = arith.addf %51, %52 : vector<16x256xf32>
    %54 = vector.extract_strided_slice %53 {offsets = [0, 0], sizes = [16, 128], strides = [1, 1]} : vector<16x256xf32> to vector<16x128xf32>
    %55 = vector.extract_strided_slice %53 {offsets = [0, 128], sizes = [16, 1], strides = [1, 1]} : vector<16x256xf32> to vector<16x1xf32>
    %cst_43 = arith.constant dense<0xFF800000> : vector<1xf32>
    %56 = vector.multi_reduction <maximumf>, %55, %cst_43 [0] : vector<16x1xf32> to vector<1xf32>
    %57 = vector.shape_cast %56 : vector<1xf32> to vector<1x1xf32>
    %58 = vector.broadcast %57 : vector<1x1xf32> to vector<16x1xf32>
    %59 = arith.subf %55, %58 : vector<16x1xf32>
    %60 = math.exp %59 : vector<16x1xf32>
    %61 = vector.broadcast %60 : vector<16x1xf32> to vector<16x256xf32>
    %62 = arith.mulf %61, %53 : vector<16x256xf32>
    %cst_44 = arith.constant dense<0.000000e+00> : vector<8x256xf32>
    %63 = tpu.matmul %23, %62, %cst_44 {dimension_numbers = #tpu.dot_dimension_numbers<[1], [0], [0], [1], [0, 0, 1, 1], [], []>} : vector<8x16xf32>, vector<16x256xf32>, vector<8x256xf32> -> vector<8x256xf32>
    %64 = vector.extract_strided_slice %63 {offsets = [0, 0], sizes = [8, 128], strides = [1, 1]} : vector<8x256xf32> to vector<8x128xf32>
    %65 = vector.extract_strided_slice %63 {offsets = [0, 129], sizes = [8, 1], strides = [1, 1]} : vector<8x256xf32> to vector<8x1xf32>
    %cst_45 = arith.constant 9.99999968E-21 : f32
    %66 = vector.broadcast %cst_45 : f32 to vector<8x1xf32>
    %67 = arith.maximumf %65, %66 : vector<8x1xf32>
    %68 = tpu.reciprocal %67 {approx = true} : vector<8x1xf32> -> vector<8x1xf32>
    %69 = vector.broadcast %68 : vector<8x1xf32> to vector<8x128xf32>
    %70 = arith.mulf %64, %69 : vector<8x128xf32>
    %71 = arith.truncf %0 : vector<8x6xf32> to vector<8x6xbf16>
    %cst_46 = arith.constant dense<0.000000e+00> : vector<8x128xf32>
    %72 = tpu.matmul %71, %30, %cst_46 {dimension_numbers = #tpu.dot_dimension_numbers<[1], [0], [0], [1], [0, 0, 1, 1], [], []>} : vector<8x6xbf16>, vector<6x128xbf16>, vector<8x128xf32> -> vector<8x128xf32>
    %73 = arith.truncf %70 : vector<8x128xf32> to vector<8x128xbf16>
    %cst_47 = arith.constant dense<0.000000e+00> : vector<8x128xf32>
    %74 = tpu.matmul %73, %31, %cst_47 {dimension_numbers = #tpu.dot_dimension_numbers<[1], [0], [0], [1], [0, 0, 1, 1], [], []>} : vector<8x128xbf16>, vector<128x128xbf16>, vector<8x128xf32> -> vector<8x128xf32>
    %75 = arith.addf %72, %74 : vector<8x128xf32>
    %76 = vector.broadcast %32 : vector<1x128xf32> to vector<8x128xf32>
    %77 = arith.addf %75, %76 : vector<8x128xf32>
    %cst_48 = arith.constant 0.000000e+00 : f32
    %78 = vector.broadcast %cst_48 : f32 to vector<8x128xf32>
    %79 = arith.maximumf %77, %78 : vector<8x128xf32>
    %80 = arith.truncf %79 : vector<8x128xf32> to vector<8x128xbf16>
    %cst_49 = arith.constant dense<0.000000e+00> : vector<8x128xf32>
    %81 = tpu.matmul %80, %33, %cst_49 {dimension_numbers = #tpu.dot_dimension_numbers<[1], [0], [0], [1], [0, 0, 1, 1], [], []>} : vector<8x128xbf16>, vector<128x128xbf16>, vector<8x128xf32> -> vector<8x128xf32>
    %82 = vector.broadcast %34 : vector<1x128xf32> to vector<8x128xf32>
    %83 = arith.addf %81, %82 : vector<8x128xf32>
    %c0_50 = arith.constant 0 : index
    %c0_51 = arith.constant 0 : index
    %84 = vector.load %arg17[%c0_50, %c0_51] : memref<128x128xbf16, #tpu.memory_space<vmem>>, vector<128x128xbf16>
    %c0_52 = arith.constant 0 : index
    %c0_53 = arith.constant 0 : index
    %85 = vector.load %arg18[%c0_52, %c0_53] : memref<128x128xbf16, #tpu.memory_space<vmem>>, vector<128x128xbf16>
    %c0_54 = arith.constant 0 : index
    %c0_55 = arith.constant 0 : index
    %86 = vector.load %arg19[%c0_54, %c0_55] : memref<128x128xbf16, #tpu.memory_space<vmem>>, vector<128x128xbf16>
    %c0_56 = arith.constant 0 : index
    %c0_57 = arith.constant 0 : index
    %87 = vector.load %arg20[%c0_56, %c0_57] : memref<1x128xf32, #tpu.memory_space<vmem>>, vector<1x128xf32>
    %c0_58 = arith.constant 0 : index
    %c0_59 = arith.constant 0 : index
    %88 = vector.load %arg21[%c0_58, %c0_59] : memref<128x256xbf16, #tpu.memory_space<vmem>>, vector<128x256xbf16>
    %c0_60 = arith.constant 0 : index
    %c0_61 = arith.constant 0 : index
    %89 = vector.load %arg22[%c0_60, %c0_61] : memref<1x256xf32, #tpu.memory_space<vmem>>, vector<1x256xf32>
    %c0_62 = arith.constant 0 : index
    %c0_63 = arith.constant 0 : index
    %90 = vector.load %arg23[%c0_62, %c0_63] : memref<128x128xbf16, #tpu.memory_space<vmem>>, vector<128x128xbf16>
    %c0_64 = arith.constant 0 : index
    %c0_65 = arith.constant 0 : index
    %91 = vector.load %arg24[%c0_64, %c0_65] : memref<128x128xbf16, #tpu.memory_space<vmem>>, vector<128x128xbf16>
    %c0_66 = arith.constant 0 : index
    %c0_67 = arith.constant 0 : index
    %92 = vector.load %arg25[%c0_66, %c0_67] : memref<1x128xf32, #tpu.memory_space<vmem>>, vector<1x128xf32>
    %c0_68 = arith.constant 0 : index
    %c0_69 = arith.constant 0 : index
    %93 = vector.load %arg26[%c0_68, %c0_69] : memref<128x128xbf16, #tpu.memory_space<vmem>>, vector<128x128xbf16>
    %c0_70 = arith.constant 0 : index
    %c0_71 = arith.constant 0 : index
    %94 = vector.load %arg27[%c0_70, %c0_71] : memref<1x128xf32, #tpu.memory_space<vmem>>, vector<1x128xf32>
    %95 = arith.truncf %83 : vector<8x128xf32> to vector<8x128xbf16>
    %cst_72 = arith.constant dense<0.000000e+00> : vector<16x128xf32>
    %96 = tpu.matmul %11, %95, %cst_72 {dimension_numbers = #tpu.dot_dimension_numbers<[1], [0], [0], [1], [0, 0, 1, 1], [], []>} : vector<16x8xbf16>, vector<8x128xbf16>, vector<16x128xf32> -> vector<16x128xf32>
    %cst_73 = arith.constant dense<0.000000e+00> : vector<16x128xf32>
    %97 = tpu.matmul %17, %95, %cst_73 {dimension_numbers = #tpu.dot_dimension_numbers<[1], [0], [0], [1], [0, 0, 1, 1], [], []>} : vector<16x8xbf16>, vector<8x128xbf16>, vector<16x128xf32> -> vector<16x128xf32>
    %98 = arith.truncf %96 : vector<16x128xf32> to vector<16x128xbf16>
    %cst_74 = arith.constant dense<0.000000e+00> : vector<16x128xf32>
    %99 = tpu.matmul %98, %84, %cst_74 {dimension_numbers = #tpu.dot_dimension_numbers<[1], [0], [0], [1], [0, 0, 1, 1], [], []>} : vector<16x128xbf16>, vector<128x128xbf16>, vector<16x128xf32> -> vector<16x128xf32>
    %100 = arith.truncf %97 : vector<16x128xf32> to vector<16x128xbf16>
    %cst_75 = arith.constant dense<0.000000e+00> : vector<16x128xf32>
    %101 = tpu.matmul %100, %85, %cst_75 {dimension_numbers = #tpu.dot_dimension_numbers<[1], [0], [0], [1], [0, 0, 1, 1], [], []>} : vector<16x128xbf16>, vector<128x128xbf16>, vector<16x128xf32> -> vector<16x128xf32>
    %102 = arith.addf %99, %101 : vector<16x128xf32>
    %103 = arith.truncf %54 : vector<16x128xf32> to vector<16x128xbf16>
    %cst_76 = arith.constant dense<0.000000e+00> : vector<16x128xf32>
    %104 = tpu.matmul %103, %86, %cst_76 {dimension_numbers = #tpu.dot_dimension_numbers<[1], [0], [0], [1], [0, 0, 1, 1], [], []>} : vector<16x128xbf16>, vector<128x128xbf16>, vector<16x128xf32> -> vector<16x128xf32>
    %105 = arith.addf %102, %104 : vector<16x128xf32>
    %106 = vector.broadcast %87 : vector<1x128xf32> to vector<16x128xf32>
    %107 = arith.addf %105, %106 : vector<16x128xf32>
    %cst_77 = arith.constant 0.000000e+00 : f32
    %108 = vector.broadcast %cst_77 : f32 to vector<16x128xf32>
    %109 = arith.maximumf %107, %108 : vector<16x128xf32>
    %110 = arith.truncf %109 : vector<16x128xf32> to vector<16x128xbf16>
    %cst_78 = arith.constant dense<0.000000e+00> : vector<16x256xf32>
    %111 = tpu.matmul %110, %88, %cst_78 {dimension_numbers = #tpu.dot_dimension_numbers<[1], [0], [0], [1], [0, 0, 1, 1], [], []>} : vector<16x128xbf16>, vector<128x256xbf16>, vector<16x256xf32> -> vector<16x256xf32>
    %112 = vector.broadcast %89 : vector<1x256xf32> to vector<16x256xf32>
    %113 = arith.addf %111, %112 : vector<16x256xf32>
    %114 = vector.extract_strided_slice %113 {offsets = [0, 0], sizes = [16, 128], strides = [1, 1]} : vector<16x256xf32> to vector<16x128xf32>
    %115 = vector.extract_strided_slice %113 {offsets = [0, 128], sizes = [16, 1], strides = [1, 1]} : vector<16x256xf32> to vector<16x1xf32>
    %cst_79 = arith.constant dense<0xFF800000> : vector<1xf32>
    %116 = vector.multi_reduction <maximumf>, %115, %cst_79 [0] : vector<16x1xf32> to vector<1xf32>
    %117 = vector.shape_cast %116 : vector<1xf32> to vector<1x1xf32>
    %118 = vector.broadcast %117 : vector<1x1xf32> to vector<16x1xf32>
    %119 = arith.subf %115, %118 : vector<16x1xf32>
    %120 = math.exp %119 : vector<16x1xf32>
    %121 = vector.broadcast %120 : vector<16x1xf32> to vector<16x256xf32>
    %122 = arith.mulf %121, %113 : vector<16x256xf32>
    %cst_80 = arith.constant dense<0.000000e+00> : vector<8x256xf32>
    %123 = tpu.matmul %23, %122, %cst_80 {dimension_numbers = #tpu.dot_dimension_numbers<[1], [0], [0], [1], [0, 0, 1, 1], [], []>} : vector<8x16xf32>, vector<16x256xf32>, vector<8x256xf32> -> vector<8x256xf32>
    %124 = vector.extract_strided_slice %123 {offsets = [0, 0], sizes = [8, 128], strides = [1, 1]} : vector<8x256xf32> to vector<8x128xf32>
    %125 = vector.extract_strided_slice %123 {offsets = [0, 129], sizes = [8, 1], strides = [1, 1]} : vector<8x256xf32> to vector<8x1xf32>
    %cst_81 = arith.constant 9.99999968E-21 : f32
    %126 = vector.broadcast %cst_81 : f32 to vector<8x1xf32>
    %127 = arith.maximumf %125, %126 : vector<8x1xf32>
    %128 = tpu.reciprocal %127 {approx = true} : vector<8x1xf32> -> vector<8x1xf32>
    %129 = vector.broadcast %128 : vector<8x1xf32> to vector<8x128xf32>
    %130 = arith.mulf %124, %129 : vector<8x128xf32>
    %131 = arith.truncf %83 : vector<8x128xf32> to vector<8x128xbf16>
    %cst_82 = arith.constant dense<0.000000e+00> : vector<8x128xf32>
    %132 = tpu.matmul %131, %90, %cst_82 {dimension_numbers = #tpu.dot_dimension_numbers<[1], [0], [0], [1], [0, 0, 1, 1], [], []>} : vector<8x128xbf16>, vector<128x128xbf16>, vector<8x128xf32> -> vector<8x128xf32>
    %133 = arith.truncf %130 : vector<8x128xf32> to vector<8x128xbf16>
    %cst_83 = arith.constant dense<0.000000e+00> : vector<8x128xf32>
    %134 = tpu.matmul %133, %91, %cst_83 {dimension_numbers = #tpu.dot_dimension_numbers<[1], [0], [0], [1], [0, 0, 1, 1], [], []>} : vector<8x128xbf16>, vector<128x128xbf16>, vector<8x128xf32> -> vector<8x128xf32>
    %135 = arith.addf %132, %134 : vector<8x128xf32>
    %136 = vector.broadcast %92 : vector<1x128xf32> to vector<8x128xf32>
    %137 = arith.addf %135, %136 : vector<8x128xf32>
    %cst_84 = arith.constant 0.000000e+00 : f32
    %138 = vector.broadcast %cst_84 : f32 to vector<8x128xf32>
    %139 = arith.maximumf %137, %138 : vector<8x128xf32>
    %140 = arith.truncf %139 : vector<8x128xf32> to vector<8x128xbf16>
    %cst_85 = arith.constant dense<0.000000e+00> : vector<8x128xf32>
    %141 = tpu.matmul %140, %93, %cst_85 {dimension_numbers = #tpu.dot_dimension_numbers<[1], [0], [0], [1], [0, 0, 1, 1], [], []>} : vector<8x128xbf16>, vector<128x128xbf16>, vector<8x128xf32> -> vector<8x128xf32>
    %142 = vector.broadcast %94 : vector<1x128xf32> to vector<8x128xf32>
    %143 = arith.addf %141, %142 : vector<8x128xf32>
    %c0_86 = arith.constant 0 : index
    %c0_87 = arith.constant 0 : index
    %144 = vector.load %arg28[%c0_86, %c0_87] : memref<128x128xbf16, #tpu.memory_space<vmem>>, vector<128x128xbf16>
    %c0_88 = arith.constant 0 : index
    %c0_89 = arith.constant 0 : index
    %145 = vector.load %arg29[%c0_88, %c0_89] : memref<128x128xbf16, #tpu.memory_space<vmem>>, vector<128x128xbf16>
    %c0_90 = arith.constant 0 : index
    %c0_91 = arith.constant 0 : index
    %146 = vector.load %arg30[%c0_90, %c0_91] : memref<128x128xbf16, #tpu.memory_space<vmem>>, vector<128x128xbf16>
    %c0_92 = arith.constant 0 : index
    %c0_93 = arith.constant 0 : index
    %147 = vector.load %arg31[%c0_92, %c0_93] : memref<1x128xf32, #tpu.memory_space<vmem>>, vector<1x128xf32>
    %c0_94 = arith.constant 0 : index
    %c0_95 = arith.constant 0 : index
    %148 = vector.load %arg32[%c0_94, %c0_95] : memref<128x256xbf16, #tpu.memory_space<vmem>>, vector<128x256xbf16>
    %c0_96 = arith.constant 0 : index
    %c0_97 = arith.constant 0 : index
    %149 = vector.load %arg33[%c0_96, %c0_97] : memref<1x256xf32, #tpu.memory_space<vmem>>, vector<1x256xf32>
    %c0_98 = arith.constant 0 : index
    %c0_99 = arith.constant 0 : index
    %150 = vector.load %arg34[%c0_98, %c0_99] : memref<128x128xbf16, #tpu.memory_space<vmem>>, vector<128x128xbf16>
    %c0_100 = arith.constant 0 : index
    %c0_101 = arith.constant 0 : index
    %151 = vector.load %arg35[%c0_100, %c0_101] : memref<128x128xbf16, #tpu.memory_space<vmem>>, vector<128x128xbf16>
    %c0_102 = arith.constant 0 : index
    %c0_103 = arith.constant 0 : index
    %152 = vector.load %arg36[%c0_102, %c0_103] : memref<1x128xf32, #tpu.memory_space<vmem>>, vector<1x128xf32>
    %c0_104 = arith.constant 0 : index
    %c0_105 = arith.constant 0 : index
    %153 = vector.load %arg37[%c0_104, %c0_105] : memref<128x128xbf16, #tpu.memory_space<vmem>>, vector<128x128xbf16>
    %c0_106 = arith.constant 0 : index
    %c0_107 = arith.constant 0 : index
    %154 = vector.load %arg38[%c0_106, %c0_107] : memref<1x128xf32, #tpu.memory_space<vmem>>, vector<1x128xf32>
    %155 = arith.truncf %143 : vector<8x128xf32> to vector<8x128xbf16>
    %cst_108 = arith.constant dense<0.000000e+00> : vector<16x128xf32>
    %156 = tpu.matmul %11, %155, %cst_108 {dimension_numbers = #tpu.dot_dimension_numbers<[1], [0], [0], [1], [0, 0, 1, 1], [], []>} : vector<16x8xbf16>, vector<8x128xbf16>, vector<16x128xf32> -> vector<16x128xf32>
    %cst_109 = arith.constant dense<0.000000e+00> : vector<16x128xf32>
    %157 = tpu.matmul %17, %155, %cst_109 {dimension_numbers = #tpu.dot_dimension_numbers<[1], [0], [0], [1], [0, 0, 1, 1], [], []>} : vector<16x8xbf16>, vector<8x128xbf16>, vector<16x128xf32> -> vector<16x128xf32>
    %158 = arith.truncf %156 : vector<16x128xf32> to vector<16x128xbf16>
    %cst_110 = arith.constant dense<0.000000e+00> : vector<16x128xf32>
    %159 = tpu.matmul %158, %144, %cst_110 {dimension_numbers = #tpu.dot_dimension_numbers<[1], [0], [0], [1], [0, 0, 1, 1], [], []>} : vector<16x128xbf16>, vector<128x128xbf16>, vector<16x128xf32> -> vector<16x128xf32>
    %160 = arith.truncf %157 : vector<16x128xf32> to vector<16x128xbf16>
    %cst_111 = arith.constant dense<0.000000e+00> : vector<16x128xf32>
    %161 = tpu.matmul %160, %145, %cst_111 {dimension_numbers = #tpu.dot_dimension_numbers<[1], [0], [0], [1], [0, 0, 1, 1], [], []>} : vector<16x128xbf16>, vector<128x128xbf16>, vector<16x128xf32> -> vector<16x128xf32>
    %162 = arith.addf %159, %161 : vector<16x128xf32>
    %163 = arith.truncf %114 : vector<16x128xf32> to vector<16x128xbf16>
    %cst_112 = arith.constant dense<0.000000e+00> : vector<16x128xf32>
    %164 = tpu.matmul %163, %146, %cst_112 {dimension_numbers = #tpu.dot_dimension_numbers<[1], [0], [0], [1], [0, 0, 1, 1], [], []>} : vector<16x128xbf16>, vector<128x128xbf16>, vector<16x128xf32> -> vector<16x128xf32>
    %165 = arith.addf %162, %164 : vector<16x128xf32>
    %166 = vector.broadcast %147 : vector<1x128xf32> to vector<16x128xf32>
    %167 = arith.addf %165, %166 : vector<16x128xf32>
    %cst_113 = arith.constant 0.000000e+00 : f32
    %168 = vector.broadcast %cst_113 : f32 to vector<16x128xf32>
    %169 = arith.maximumf %167, %168 : vector<16x128xf32>
    %170 = arith.truncf %169 : vector<16x128xf32> to vector<16x128xbf16>
    %cst_114 = arith.constant dense<0.000000e+00> : vector<16x256xf32>
    %171 = tpu.matmul %170, %148, %cst_114 {dimension_numbers = #tpu.dot_dimension_numbers<[1], [0], [0], [1], [0, 0, 1, 1], [], []>} : vector<16x128xbf16>, vector<128x256xbf16>, vector<16x256xf32> -> vector<16x256xf32>
    %172 = vector.broadcast %149 : vector<1x256xf32> to vector<16x256xf32>
    %173 = arith.addf %171, %172 : vector<16x256xf32>
    %174 = vector.extract_strided_slice %173 {offsets = [0, 128], sizes = [16, 1], strides = [1, 1]} : vector<16x256xf32> to vector<16x1xf32>
    %cst_115 = arith.constant dense<0xFF800000> : vector<1xf32>
    %175 = vector.multi_reduction <maximumf>, %174, %cst_115 [0] : vector<16x1xf32> to vector<1xf32>
    %176 = vector.shape_cast %175 : vector<1xf32> to vector<1x1xf32>
    %177 = vector.broadcast %176 : vector<1x1xf32> to vector<16x1xf32>
    %178 = arith.subf %174, %177 : vector<16x1xf32>
    %179 = math.exp %178 : vector<16x1xf32>
    %180 = vector.broadcast %179 : vector<16x1xf32> to vector<16x256xf32>
    %181 = arith.mulf %180, %173 : vector<16x256xf32>
    %cst_116 = arith.constant dense<0.000000e+00> : vector<8x256xf32>
    %182 = tpu.matmul %23, %181, %cst_116 {dimension_numbers = #tpu.dot_dimension_numbers<[1], [0], [0], [1], [0, 0, 1, 1], [], []>} : vector<8x16xf32>, vector<16x256xf32>, vector<8x256xf32> -> vector<8x256xf32>
    %183 = vector.extract_strided_slice %182 {offsets = [0, 0], sizes = [8, 128], strides = [1, 1]} : vector<8x256xf32> to vector<8x128xf32>
    %184 = vector.extract_strided_slice %182 {offsets = [0, 129], sizes = [8, 1], strides = [1, 1]} : vector<8x256xf32> to vector<8x1xf32>
    %cst_117 = arith.constant 9.99999968E-21 : f32
    %185 = vector.broadcast %cst_117 : f32 to vector<8x1xf32>
    %186 = arith.maximumf %184, %185 : vector<8x1xf32>
    %187 = tpu.reciprocal %186 {approx = true} : vector<8x1xf32> -> vector<8x1xf32>
    %188 = vector.broadcast %187 : vector<8x1xf32> to vector<8x128xf32>
    %189 = arith.mulf %183, %188 : vector<8x128xf32>
    %190 = arith.truncf %143 : vector<8x128xf32> to vector<8x128xbf16>
    %cst_118 = arith.constant dense<0.000000e+00> : vector<8x128xf32>
    %191 = tpu.matmul %190, %150, %cst_118 {dimension_numbers = #tpu.dot_dimension_numbers<[1], [0], [0], [1], [0, 0, 1, 1], [], []>} : vector<8x128xbf16>, vector<128x128xbf16>, vector<8x128xf32> -> vector<8x128xf32>
    %192 = arith.truncf %189 : vector<8x128xf32> to vector<8x128xbf16>
    %cst_119 = arith.constant dense<0.000000e+00> : vector<8x128xf32>
    %193 = tpu.matmul %192, %151, %cst_119 {dimension_numbers = #tpu.dot_dimension_numbers<[1], [0], [0], [1], [0, 0, 1, 1], [], []>} : vector<8x128xbf16>, vector<128x128xbf16>, vector<8x128xf32> -> vector<8x128xf32>
    %194 = arith.addf %191, %193 : vector<8x128xf32>
    %195 = vector.broadcast %152 : vector<1x128xf32> to vector<8x128xf32>
    %196 = arith.addf %194, %195 : vector<8x128xf32>
    %cst_120 = arith.constant 0.000000e+00 : f32
    %197 = vector.broadcast %cst_120 : f32 to vector<8x128xf32>
    %198 = arith.maximumf %196, %197 : vector<8x128xf32>
    %199 = arith.truncf %198 : vector<8x128xf32> to vector<8x128xbf16>
    %cst_121 = arith.constant dense<0.000000e+00> : vector<8x128xf32>
    %200 = tpu.matmul %199, %153, %cst_121 {dimension_numbers = #tpu.dot_dimension_numbers<[1], [0], [0], [1], [0, 0, 1, 1], [], []>} : vector<8x128xbf16>, vector<128x128xbf16>, vector<8x128xf32> -> vector<8x128xf32>
    %201 = vector.broadcast %154 : vector<1x128xf32> to vector<8x128xf32>
    %202 = arith.addf %200, %201 : vector<8x128xf32>
    %c0_122 = arith.constant 0 : index
    %c0_123 = arith.constant 0 : index
    %203 = vector.load %arg39[%c0_122, %c0_123] : memref<128x64xbf16, #tpu.memory_space<vmem>>, vector<128x64xbf16>
    %c0_124 = arith.constant 0 : index
    %c0_125 = arith.constant 0 : index
    %204 = vector.load %arg40[%c0_124, %c0_125] : memref<1x64xf32, #tpu.memory_space<vmem>>, vector<1x64xf32>
    %205 = arith.truncf %202 : vector<8x128xf32> to vector<8x128xbf16>
    %cst_126 = arith.constant dense<0.000000e+00> : vector<8x64xf32>
    %206 = tpu.matmul %205, %203, %cst_126 {dimension_numbers = #tpu.dot_dimension_numbers<[1], [0], [0], [1], [0, 0, 1, 1], [], []>} : vector<8x128xbf16>, vector<128x64xbf16>, vector<8x64xf32> -> vector<8x64xf32>
    %207 = vector.broadcast %204 : vector<1x64xf32> to vector<8x64xf32>
    %208 = arith.addf %206, %207 : vector<8x64xf32>
    %cst_127 = arith.constant 0.000000e+00 : f32
    %209 = vector.broadcast %cst_127 : f32 to vector<8x64xf32>
    %210 = arith.maximumf %208, %209 : vector<8x64xf32>
    %c0_128 = arith.constant 0 : index
    %c0_129 = arith.constant 0 : index
    %211 = vector.load %arg41[%c0_128, %c0_129] : memref<64x32xbf16, #tpu.memory_space<vmem>>, vector<64x32xbf16>
    %c0_130 = arith.constant 0 : index
    %c0_131 = arith.constant 0 : index
    %212 = vector.load %arg42[%c0_130, %c0_131] : memref<1x32xf32, #tpu.memory_space<vmem>>, vector<1x32xf32>
    %213 = arith.truncf %210 : vector<8x64xf32> to vector<8x64xbf16>
    %cst_132 = arith.constant dense<0.000000e+00> : vector<8x32xf32>
    %214 = tpu.matmul %213, %211, %cst_132 {dimension_numbers = #tpu.dot_dimension_numbers<[1], [0], [0], [1], [0, 0, 1, 1], [], []>} : vector<8x64xbf16>, vector<64x32xbf16>, vector<8x32xf32> -> vector<8x32xf32>
    %215 = vector.broadcast %212 : vector<1x32xf32> to vector<8x32xf32>
    %216 = arith.addf %214, %215 : vector<8x32xf32>
    %cst_133 = arith.constant 0.000000e+00 : f32
    %217 = vector.broadcast %cst_133 : f32 to vector<8x32xf32>
    %218 = arith.maximumf %216, %217 : vector<8x32xf32>
    %c0_134 = arith.constant 0 : index
    %c0_135 = arith.constant 0 : index
    %219 = vector.load %arg43[%c0_134, %c0_135] : memref<32x128xbf16, #tpu.memory_space<vmem>>, vector<32x128xbf16>
    %c0_136 = arith.constant 0 : index
    %c0_137 = arith.constant 0 : index
    %220 = vector.load %arg44[%c0_136, %c0_137] : memref<1x128xf32, #tpu.memory_space<vmem>>, vector<1x128xf32>
    %221 = arith.truncf %218 : vector<8x32xf32> to vector<8x32xbf16>
    %cst_138 = arith.constant dense<0.000000e+00> : vector<8x128xf32>
    %222 = tpu.matmul %221, %219, %cst_138 {dimension_numbers = #tpu.dot_dimension_numbers<[1], [0], [0], [1], [0, 0, 1, 1], [], []>} : vector<8x32xbf16>, vector<32x128xbf16>, vector<8x128xf32> -> vector<8x128xf32>
    %223 = vector.broadcast %220 : vector<1x128xf32> to vector<8x128xf32>
    %224 = arith.addf %222, %223 : vector<8x128xf32>
    %c0_139 = arith.constant 0 : index
    %c0_140 = arith.constant 0 : index
    %225 = vector.load %arg45[%c0_139, %c0_140] : memref<8x128xf32, #tpu.memory_space<vmem>>, vector<8x128xf32>
    tpu.vector_store %arg45[%c0_139, %c0_140], %224 {strides = array<i32>} : memref<8x128xf32, #tpu.memory_space<vmem>>, vector<8x128xf32>,
    return
  }
  func.func @transform_0(%arg0: i32) -> (i32, i32) {
    %c0_i32 = arith.constant 0 : i32
    %c0_i32_0 = arith.constant 0 : i32
    %c0_i32_1 = arith.constant 0 : i32
    return %c0_i32, %c0_i32_0 : i32, i32
  }
  func.func @transform_1(%arg0: i32) -> (i32, i32) {
    %c0_i32 = arith.constant 0 : i32
    %c0_i32_0 = arith.constant 0 : i32
    %c0_i32_1 = arith.constant 0 : i32
    return %c0_i32, %c0_i32_0 : i32, i32
  }
  func.func @transform_2(%arg0: i32) -> (i32, i32) {
    %c0_i32 = arith.constant 0 : i32
    %c0_i32_0 = arith.constant 0 : i32
    %c0_i32_1 = arith.constant 0 : i32
    return %c0_i32, %c0_i32_0 : i32, i32
  }
  func.func @transform_3(%arg0: i32) -> (i32, i32) {
    %c0_i32 = arith.constant 0 : i32
    %c0_i32_0 = arith.constant 0 : i32
    %c0_i32_1 = arith.constant 0 : i32
    return %c0_i32, %c0_i32_0 : i32, i32
  }
  func.func @transform_4(%arg0: i32) -> (i32, i32) {
    %c0_i32 = arith.constant 0 : i32
    %c0_i32_0 = arith.constant 0 : i32
    %c0_i32_1 = arith.constant 0 : i32
    return %c0_i32, %c0_i32_0 : i32, i32
  }
  func.func @transform_5(%arg0: i32) -> (i32, i32) {
    %c0_i32 = arith.constant 0 : i32
    %c0_i32_0 = arith.constant 0 : i32
    %c0_i32_1 = arith.constant 0 : i32
    return %c0_i32, %c0_i32_0 : i32, i32
  }
  func.func @transform_6(%arg0: i32) -> (i32, i32) {
    %c0_i32 = arith.constant 0 : i32
    %c0_i32_0 = arith.constant 0 : i32
    %c0_i32_1 = arith.constant 0 : i32
    return %c0_i32, %c0_i32_0 : i32, i32
  }
  func.func @transform_7(%arg0: i32) -> (i32, i32) {
    %c0_i32 = arith.constant 0 : i32
    %c0_i32_0 = arith.constant 0 : i32
    %c0_i32_1 = arith.constant 0 : i32
    return %c0_i32, %c0_i32_0 : i32, i32
  }
  func.func @transform_8(%arg0: i32) -> (i32, i32) {
    %c0_i32 = arith.constant 0 : i32
    %c0_i32_0 = arith.constant 0 : i32
    %c0_i32_1 = arith.constant 0 : i32
    return %c0_i32, %c0_i32_0 : i32, i32
  }
  func.func @transform_9(%arg0: i32) -> (i32, i32) {
    %c0_i32 = arith.constant 0 : i32
    %c0_i32_0 = arith.constant 0 : i32
    %c0_i32_1 = arith.constant 0 : i32
    return %c0_i32, %c0_i32_0 : i32, i32
  }
  func.func @transform_10(%arg0: i32) -> (i32, i32) {
    %c0_i32 = arith.constant 0 : i32
    %c0_i32_0 = arith.constant 0 : i32
    %c0_i32_1 = arith.constant 0 : i32
    return %c0_i32, %c0_i32_0 : i32, i32
  }
  func.func @transform_11(%arg0: i32) -> (i32, i32) {
    %c0_i32 = arith.constant 0 : i32
    %c0_i32_0 = arith.constant 0 : i32
    %c0_i32_1 = arith.constant 0 : i32
    return %c0_i32, %c0_i32_0 : i32, i32
  }
  func.func @transform_12(%arg0: i32) -> (i32, i32) {
    %c0_i32 = arith.constant 0 : i32
    %c0_i32_0 = arith.constant 0 : i32
    %c0_i32_1 = arith.constant 0 : i32
    return %c0_i32, %c0_i32_0 : i32, i32
  }
  func.func @transform_13(%arg0: i32) -> (i32, i32) {
    %c0_i32 = arith.constant 0 : i32
    %c0_i32_0 = arith.constant 0 : i32
    %c0_i32_1 = arith.constant 0 : i32
    return %c0_i32, %c0_i32_0 : i32, i32
  }
  func.func @transform_14(%arg0: i32) -> (i32, i32) {
    %c0_i32 = arith.constant 0 : i32
    %c0_i32_0 = arith.constant 0 : i32
    %c0_i32_1 = arith.constant 0 : i32
    return %c0_i32, %c0_i32_0 : i32, i32
  }
  func.func @transform_15(%arg0: i32) -> (i32, i32) {
    %c0_i32 = arith.constant 0 : i32
    %c0_i32_0 = arith.constant 0 : i32
    %c0_i32_1 = arith.constant 0 : i32
    return %c0_i32, %c0_i32_0 : i32, i32
  }
  func.func @transform_16(%arg0: i32) -> (i32, i32) {
    %c0_i32 = arith.constant 0 : i32
    %c0_i32_0 = arith.constant 0 : i32
    %c0_i32_1 = arith.constant 0 : i32
    return %c0_i32, %c0_i32_0 : i32, i32
  }
  func.func @transform_17(%arg0: i32) -> (i32, i32) {
    %c0_i32 = arith.constant 0 : i32
    %c0_i32_0 = arith.constant 0 : i32
    %c0_i32_1 = arith.constant 0 : i32
    return %c0_i32, %c0_i32_0 : i32, i32
  }
  func.func @transform_18(%arg0: i32) -> (i32, i32) {
    %c0_i32 = arith.constant 0 : i32
    %c0_i32_0 = arith.constant 0 : i32
    %c0_i32_1 = arith.constant 0 : i32
    return %c0_i32, %c0_i32_0 : i32, i32
  }
  func.func @transform_19(%arg0: i32) -> (i32, i32) {
    %c0_i32 = arith.constant 0 : i32
    %c0_i32_0 = arith.constant 0 : i32
    %c0_i32_1 = arith.constant 0 : i32
    return %c0_i32, %c0_i32_0 : i32, i32
  }
  func.func @transform_20(%arg0: i32) -> (i32, i32) {
    %c0_i32 = arith.constant 0 : i32
    %c0_i32_0 = arith.constant 0 : i32
    %c0_i32_1 = arith.constant 0 : i32
    return %c0_i32, %c0_i32_0 : i32, i32
  }
  func.func @transform_21(%arg0: i32) -> (i32, i32) {
    %c0_i32 = arith.constant 0 : i32
    %c0_i32_0 = arith.constant 0 : i32
    %c0_i32_1 = arith.constant 0 : i32
    return %c0_i32, %c0_i32_0 : i32, i32
  }
  func.func @transform_22(%arg0: i32) -> (i32, i32) {
    %c0_i32 = arith.constant 0 : i32
    %c0_i32_0 = arith.constant 0 : i32
    %c0_i32_1 = arith.constant 0 : i32
    return %c0_i32, %c0_i32_0 : i32, i32
  }
  func.func @transform_23(%arg0: i32) -> (i32, i32) {
    %c0_i32 = arith.constant 0 : i32
    %c0_i32_0 = arith.constant 0 : i32
    %c0_i32_1 = arith.constant 0 : i32
    return %c0_i32, %c0_i32_0 : i32, i32
  }
  func.func @transform_24(%arg0: i32) -> (i32, i32) {
    %c0_i32 = arith.constant 0 : i32
    %c0_i32_0 = arith.constant 0 : i32
    %c0_i32_1 = arith.constant 0 : i32
    return %c0_i32, %c0_i32_0 : i32, i32
  }
  func.func @transform_25(%arg0: i32) -> (i32, i32) {
    %c0_i32 = arith.constant 0 : i32
    %c0_i32_0 = arith.constant 0 : i32
    %c0_i32_1 = arith.constant 0 : i32
    return %c0_i32, %c0_i32_0 : i32, i32
  }
  func.func @transform_26(%arg0: i32) -> (i32, i32) {
    %c0_i32 = arith.constant 0 : i32
    %c0_i32_0 = arith.constant 0 : i32
    %c0_i32_1 = arith.constant 0 : i32
    return %c0_i32, %c0_i32_0 : i32, i32
  }
  func.func @transform_27(%arg0: i32) -> (i32, i32) {
    %c0_i32 = arith.constant 0 : i32
    %c0_i32_0 = arith.constant 0 : i32
    %c0_i32_1 = arith.constant 0 : i32
    return %c0_i32, %c0_i32_0 : i32, i32
  }
  func.func @transform_28(%arg0: i32) -> (i32, i32) {
    %c0_i32 = arith.constant 0 : i32
    %c0_i32_0 = arith.constant 0 : i32
    %c0_i32_1 = arith.constant 0 : i32
    return %c0_i32, %c0_i32_0 : i32, i32
  }
  func.func @transform_29(%arg0: i32) -> (i32, i32) {
    %c0_i32 = arith.constant 0 : i32
    %c0_i32_0 = arith.constant 0 : i32
    %c0_i32_1 = arith.constant 0 : i32
    return %c0_i32, %c0_i32_0 : i32, i32
  }
  func.func @transform_30(%arg0: i32) -> (i32, i32) {
    %c0_i32 = arith.constant 0 : i32
    %c0_i32_0 = arith.constant 0 : i32
    %c0_i32_1 = arith.constant 0 : i32
    return %c0_i32, %c0_i32_0 : i32, i32
  }
  func.func @transform_31(%arg0: i32) -> (i32, i32) {
    %c0_i32 = arith.constant 0 : i32
    %c0_i32_0 = arith.constant 0 : i32
    %c0_i32_1 = arith.constant 0 : i32
    return %c0_i32, %c0_i32_0 : i32, i32
  }
  func.func @transform_32(%arg0: i32) -> (i32, i32) {
    %c0_i32 = arith.constant 0 : i32
    %c0_i32_0 = arith.constant 0 : i32
    %c0_i32_1 = arith.constant 0 : i32
    return %c0_i32, %c0_i32_0 : i32, i32
  }
  func.func @transform_33(%arg0: i32) -> (i32, i32) {
    %c0_i32 = arith.constant 0 : i32
    %c0_i32_0 = arith.constant 0 : i32
    %c0_i32_1 = arith.constant 0 : i32
    return %c0_i32, %c0_i32_0 : i32, i32
  }
  func.func @transform_34(%arg0: i32) -> (i32, i32) {
    %c0_i32 = arith.constant 0 : i32
    %c0_i32_0 = arith.constant 0 : i32
    %c0_i32_1 = arith.constant 0 : i32
    return %c0_i32, %c0_i32_0 : i32, i32
  }
  func.func @transform_35(%arg0: i32) -> (i32, i32) {
    %c0_i32 = arith.constant 0 : i32
    %c0_i32_0 = arith.constant 0 : i32
    %c0_i32_1 = arith.constant 0 : i32
    return %c0_i32, %c0_i32_0 : i32, i32
  }
  func.func @transform_36(%arg0: i32) -> (i32, i32) {
    %c0_i32 = arith.constant 0 : i32
    %c0_i32_0 = arith.constant 0 : i32
    %c0_i32_1 = arith.constant 0 : i32
    return %c0_i32, %c0_i32_0 : i32, i32
  }
  func.func @transform_37(%arg0: i32) -> (i32, i32) {
    %c0_i32 = arith.constant 0 : i32
    %c0_i32_0 = arith.constant 0 : i32
    %c0_i32_1 = arith.constant 0 : i32
    return %c0_i32, %c0_i32_0 : i32, i32
  }
  func.func @transform_38(%arg0: i32) -> (i32, i32) {
    %c0_i32 = arith.constant 0 : i32
    %c0_i32_0 = arith.constant 0 : i32
    %c0_i32_1 = arith.constant 0 : i32
    return %c0_i32, %c0_i32_0 : i32, i32
  }
  func.func @transform_39(%arg0: i32) -> (i32, i32) {
    %c0_i32 = arith.constant 0 : i32
    %c0_i32_0 = arith.constant 0 : i32
    %c0_i32_1 = arith.constant 0 : i32
    return %c0_i32, %c0_i32_0 : i32, i32
  }
  func.func @transform_40(%arg0: i32) -> (i32, i32) {
    %c0_i32 = arith.constant 0 : i32
    %c0_i32_0 = arith.constant 0 : i32
    %c0_i32_1 = arith.constant 0 : i32
    return %c0_i32, %c0_i32_0 : i32, i32
  }
  func.func @transform_41(%arg0: i32) -> (i32, i32) {
    %c0_i32 = arith.constant 0 : i32
    %c0_i32_0 = arith.constant 0 : i32
    %c0_i32_1 = arith.constant 0 : i32
    return %c0_i32, %c0_i32_0 : i32, i32
  }
  func.func @transform_42(%arg0: i32) -> (i32, i32) {
    %c0_i32 = arith.constant 0 : i32
    %c0_i32_0 = arith.constant 0 : i32
    %c0_i32_1 = arith.constant 0 : i32
    return %c0_i32, %c0_i32_0 : i32, i32
  }
  func.func @transform_43(%arg0: i32) -> (i32, i32) {
    %c0_i32 = arith.constant 0 : i32
    %c0_i32_0 = arith.constant 0 : i32
    %c0_i32_1 = arith.constant 0 : i32
    return %c0_i32, %c0_i32_0 : i32, i32
  }
  func.func @transform_44(%arg0: i32) -> (i32, i32) {
    %c0_i32 = arith.constant 0 : i32
    %c0_i32_0 = arith.constant 0 : i32
    %c0_i32_1 = arith.constant 0 : i32
    return %c0_i32, %c0_i32_0 : i32, i32
  }
}

</mosaic_0001>

<llo_original>
// kernel: stack_gnn_forward.1
$region0: #{stack_gnn_forward.1}
  #allocation0 [shape = 'u32[]', space=smem, size = 0x4, offset = 0x4, fixed_abs, tag = 'smem constant byte address 0x4 - core index']
  #allocation1 [shape = 'u32[72,128]{1,0:T(1,128)}', space=vmem, size = 0x9000, scoped, tag = 'internal scratch']
  %s0 = inlined_call_operand.smem [shape: u32[45], index: -1, kind: input, shape index: {}]
  %s1 = sld [smem:[%s0]]
  %s2 = scalar_lea.smem %s0, 1
  %s3 = sld [smem:[%s2]]
  %s4 = scalar_lea.smem %s0, 2
  %s5 = sld [smem:[%s4]]
  %s6 = scalar_lea.smem %s0, 3
  %s7 = sld [smem:[%s6]]
  %s8 = scalar_lea.smem %s0, 4
  %s9 = sld [smem:[%s8]]
  %s10 = scalar_lea.smem %s0, 5
  %s11 = sld [smem:[%s10]]
  %s12 = scalar_lea.smem %s0, 6
  %s13 = sld [smem:[%s12]]
  %s14 = scalar_lea.smem %s0, 7
  %s15 = sld [smem:[%s14]]
  %s16 = scalar_lea.smem %s0, 8
  %s17 = sld [smem:[%s16]]
  %s18 = scalar_lea.smem %s0, 9
  %s19 = sld [smem:[%s18]]
  %s20 = scalar_lea.smem %s0, 10
  %s21 = sld [smem:[%s20]]
  %s22 = scalar_lea.smem %s0, 11
  %s23 = sld [smem:[%s22]]
  %s24 = scalar_lea.smem %s0, 12
  %s25 = sld [smem:[%s24]]
  %s26 = scalar_lea.smem %s0, 13
  %s27 = sld [smem:[%s26]]
  %s28 = scalar_lea.smem %s0, 14
  %s29 = sld [smem:[%s28]]
  %s30 = scalar_lea.smem %s0, 15
  %s31 = sld [smem:[%s30]]
  %s32 = scalar_lea.smem %s0, 16
  %s33 = sld [smem:[%s32]]
  %s34 = scalar_lea.smem %s0, 17
  %s35 = sld [smem:[%s34]]
  %s36 = scalar_lea.smem %s0, 18
  %s37 = sld [smem:[%s36]]
  %s38 = scalar_lea.smem %s0, 19
  %s39 = sld [smem:[%s38]]
  %s40 = scalar_lea.smem %s0, 20
  %s41 = sld [smem:[%s40]]
  %s42 = scalar_lea.smem %s0, 21
  %s43 = sld [smem:[%s42]]
  %s44 = scalar_lea.smem %s0, 22
  %s45 = sld [smem:[%s44]]
  %s46 = scalar_lea.smem %s0, 23
  %s47 = sld [smem:[%s46]]
  %s48 = scalar_lea.smem %s0, 24
  %s49 = sld [smem:[%s48]]
  %s50 = scalar_lea.smem %s0, 25
  %s51 = sld [smem:[%s50]]
  %s52 = scalar_lea.smem %s0, 26
  %s53 = sld [smem:[%s52]]
  %s54 = scalar_lea.smem %s0, 27
  %s55 = sld [smem:[%s54]]
  %s56 = scalar_lea.smem %s0, 28
  %s57 = sld [smem:[%s56]]
  %s58 = scalar_lea.smem %s0, 29
  %s59 = sld [smem:[%s58]]
  %s60 = scalar_lea.smem %s0, 30
  %s61 = sld [smem:[%s60]]
  %s62 = scalar_lea.smem %s0, 31
  %s63 = sld [smem:[%s62]]
  %s64 = scalar_lea.smem %s0, 32
  %s65 = sld [smem:[%s64]]
  %s66 = scalar_lea.smem %s0, 33
  %s67 = sld [smem:[%s66]]
  %s68 = scalar_lea.smem %s0, 34
  %s69 = sld [smem:[%s68]]
  %s70 = scalar_lea.smem %s0, 35
  %s71 = sld [smem:[%s70]]
  %s72 = scalar_lea.smem %s0, 36
  %s73 = sld [smem:[%s72]]
  %s74 = scalar_lea.smem %s0, 37
  %s75 = sld [smem:[%s74]]
  %s76 = scalar_lea.smem %s0, 38
  %s77 = sld [smem:[%s76]]
  %s78 = scalar_lea.smem %s0, 39
  %s79 = sld [smem:[%s78]]
  %s80 = scalar_lea.smem %s0, 40
  %s81 = sld [smem:[%s80]]
  %s82 = scalar_lea.smem %s0, 41
  %s83 = sld [smem:[%s82]]
  %s84 = scalar_lea.smem %s0, 42
  %s85 = sld [smem:[%s84]]
  %s86 = scalar_lea.smem %s0, 43
  %s87 = sld [smem:[%s86]]
  %s88 = scalar_lea.smem %s0, 44
  %s89 = sld [smem:[%s88]]
  %s90 = sld [smem:[#allocation0]]
  $region282: #{stack_gnn_forward.1} parent=0
    _
  %s92 = ssub.s32 1, %s90
  %s93 = scalar_select 0, %s92, %s90
  $region1: #{stack_gnn_forward.1} parent=0
    #allocation2 [shape = 'u8[2048]{0}', space=vmem, size = 0x800, scoped, tag = 'input window, operand 5, single buffered']
    #allocation3 [shape = 's32[1]{0}', space=sflag, size = 0x4, scoped, tag = 'scoped memory for stack_gnn_forward.1']
    #allocation4 [shape = 'u8[2048]{0}', space=vmem, size = 0x800, scoped, tag = 'input window, operand 6, single buffered']
    #allocation5 [shape = 's32[1]{0}', space=sflag, size = 0x4, scoped, tag = 'scoped memory for stack_gnn_forward.1']
    #allocation6 [shape = 'u8[1024]{0}', space=vmem, size = 0x400, scoped, tag = 'input window, operand 7, single buffered']
    #allocation7 [shape = 'u8[1024]{0}', space=vmem, size = 0x400, scoped, tag = 'input window, operand 10, single buffered']
    #allocation8 [shape = 's32[1]{0}', space=sflag, size = 0x4, scoped, tag = 'scoped memory for stack_gnn_forward.1']
    #allocation9 [shape = 'u8[32768]{0}', space=vmem, size = 0x8000, scoped, tag = 'input window, operand 12, single buffered']
    #allocation10 [shape = 'u8[512]{0}', space=vmem, size = 0x400, scoped, tag = 'input window, operand 13, single buffered']
    #allocation11 [shape = 's32[1]{0}', space=sflag, size = 0x4, scoped, tag = 'scoped memory for stack_gnn_forward.1']
    #allocation12 [shape = 'u8[32768]{0}', space=vmem, size = 0x8000, scoped, tag = 'input window, operand 14, single buffered']
    #allocation13 [shape = 'u8[512]{0}', space=vmem, size = 0x400, scoped, tag = 'input window, operand 15, single buffered']
    #allocation14 [shape = 's32[1]{0}', space=sflag, size = 0x4, scoped, tag = 'scoped memory for stack_gnn_forward.1']
    #allocation15 [shape = 'u8[32768]{0}', space=vmem, size = 0x8000, scoped, tag = 'input window, operand 16, single buffered']
    #allocation16 [shape = 'u8[32768]{0}', space=vmem, size = 0x8000, scoped, tag = 'input window, operand 17, single buffered']
    #allocation17 [shape = 's32[1]{0}', space=sflag, size = 0x4, scoped, tag = 'scoped memory for stack_gnn_forward.1']
    #allocation18 [shape = 'u8[32768]{0}', space=vmem, size = 0x8000, scoped, tag = 'input window, operand 18, single buffered']
    #allocation19 [shape = 'u8[512]{0}', space=vmem, size = 0x400, scoped, tag = 'input window, operand 19, single buffered']
    #allocation20 [shape = 's32[1]{0}', space=sflag, size = 0x4, scoped, tag = 'scoped memory for stack_gnn_forward.1']
    #allocation21 [shape = 'u8[65536]{0}', space=vmem, size = 0x10000, scoped, tag = 'input window, operand 20, single buffered']
    #allocation22 [shape = 'u8[1024]{0}', space=vmem, size = 0x400, scoped, tag = 'input window, operand 21, single buffered']
    #allocation23 [shape = 's32[1]{0}', space=sflag, size = 0x4, scoped, tag = 'scoped memory for stack_gnn_forward.1']
    #allocation24 [shape = 'u8[32768]{0}', space=vmem, size = 0x8000, scoped, tag = 'input window, operand 22, single buffered']
    #allocation25 [shape = 'u8[32768]{0}', space=vmem, size = 0x8000, scoped, tag = 'input window, operand 23, single buffered']
    #allocation26 [shape = 's32[1]{0}', space=sflag, size = 0x4, scoped, tag = 'scoped memory for stack_gnn_forward.1']
    #allocation27 [shape = 'u8[32768]{0}', space=vmem, size = 0x8000, scoped, tag = 'input window, operand 25, single buffered']
    #allocation28 [shape = 'u8[32768]{0}', space=vmem, size = 0x8000, scoped, tag = 'input window, operand 27, single buffered']
    #allocation29 [shape = 's32[1]{0}', space=sflag, size = 0x4, scoped, tag = 'scoped memory for stack_gnn_forward.1']
    #allocation30 [shape = 'u8[32768]{0}', space=vmem, size = 0x8000, scoped, tag = 'input window, operand 28, single buffered']
    #allocation31 [shape = 'u8[32768]{0}', space=vmem, size = 0x8000, scoped, tag = 'input window, operand 29, single buffered']
    #allocation32 [shape = 's32[1]{0}', space=sflag, size = 0x4, scoped, tag = 'scoped memory for stack_gnn_forward.1']
    #allocation33 [shape = 'u8[65536]{0}', space=vmem, size = 0x10000, scoped, tag = 'input window, operand 31, single buffered']
    #allocation34 [shape = 'u8[32768]{0}', space=vmem, size = 0x8000, scoped, tag = 'input window, operand 33, single buffered']
    #allocation35 [shape = 's32[1]{0}', space=sflag, size = 0x4, scoped, tag = 'scoped memory for stack_gnn_forward.1']
    #allocation36 [shape = 'u8[32768]{0}', space=vmem, size = 0x8000, scoped, tag = 'input window, operand 34, single buffered']
    #allocation37 [shape = 'u8[32768]{0}', space=vmem, size = 0x8000, scoped, tag = 'input window, operand 36, single buffered']
    #allocation38 [shape = 's32[1]{0}', space=sflag, size = 0x4, scoped, tag = 'scoped memory for stack_gnn_forward.1']
    %94 = vsyncpa [#allocation3], 0
    %95 = vsyncpa [#allocation5], 0
    %96 = vsyncpa [#allocation8], 0
    %97 = vsyncpa [#allocation11], 0
    %98 = vsyncpa [#allocation14], 0
    %99 = vsyncpa [#allocation17], 0
    %100 = vsyncpa [#allocation20], 0
    %101 = vsyncpa [#allocation23], 0
    %102 = vsyncpa [#allocation26], 0
    %103 = vsyncpa [#allocation29], 0
    %104 = vsyncpa [#allocation32], 0
    %105 = vsyncpa [#allocation35], 0
    %106 = vsyncpa [#allocation38], 0
    // Predicated region
    $region2: #{stack_gnn_forward.1} parent=1 // pred_check
      _
    $region3: #{stack_gnn_forward.1} parent=1 // pred_check_branch
      %108 = sbr.rel (0) target = $region5
    $region4: #{stack_gnn_forward.1} parent=1 // pred_region
      _
    $region5: #{stack_gnn_forward.1} parent=1 // pred_fallthru
      _
    // Predicated region
    $region6: #{stack_gnn_forward.1} parent=1 // pred_check
      _
    $region7: #{stack_gnn_forward.1} parent=1 // pred_check_branch
      %110 = sbr.rel (0) target = $region9
    $region8: #{stack_gnn_forward.1} parent=1 // pred_region
      _
    $region9: #{stack_gnn_forward.1} parent=1 // pred_fallthru
      _
    // Predicated region
    $region10: #{stack_gnn_forward.1} parent=1 // pred_check
      _
    $region11: #{stack_gnn_forward.1} parent=1 // pred_check_branch
      %112 = sbr.rel (0) target = $region13
    $region12: #{stack_gnn_forward.1} parent=1 // pred_region
      _
    $region13: #{stack_gnn_forward.1} parent=1 // pred_fallthru
      _
    // Predicated region
    $region14: #{stack_gnn_forward.1} parent=1 // pred_check
      _
    $region15: #{stack_gnn_forward.1} parent=1 // pred_check_branch
      %114 = sbr.rel (0) target = $region17
    $region16: #{stack_gnn_forward.1} parent=1 // pred_region
      _
    $region17: #{stack_gnn_forward.1} parent=1 // pred_fallthru
      _
    // Predicated region
    $region18: #{stack_gnn_forward.1} parent=1 // pred_check
      _
    $region19: #{stack_gnn_forward.1} parent=1 // pred_check_branch
      %116 = sbr.rel (0) target = $region21
    $region20: #{stack_gnn_forward.1} parent=1 // pred_region
      _
    $region21: #{stack_gnn_forward.1} parent=1 // pred_fallthru
      _
    // Predicated region
    $region22: #{stack_gnn_forward.1} parent=1 // pred_check
      _
    $region23: #{stack_gnn_forward.1} parent=1 // pred_check_branch
      %118 = sbr.rel (0) target = $region25
    $region24: #{stack_gnn_forward.1} parent=1 // pred_region
      %120 = vsyncadd [#allocation3], 0
      %s122 = sshll.u32 %s11, 4
      %s123 = int_to_ptr.hbm [resolvable:$true] %s122
      %s124 = sshll.u32 [#allocation2], 4
      %s125 = int_to_ptr.vmem [resolvable:$true] %s124
      %127 = dma.hbm_to_vmem [thread:$0]  %s123, 64, %s125, [#allocation3]
    $region25: #{stack_gnn_forward.1} parent=1 // pred_fallthru
      _
    // Predicated region
    $region26: #{stack_gnn_forward.1} parent=1 // pred_check
      _
    $region27: #{stack_gnn_forward.1} parent=1 // pred_check_branch
      %129 = sbr.rel (0) target = $region29
    $region28: #{stack_gnn_forward.1} parent=1 // pred_region
      %131 = vsyncadd [#allocation5], 0
      %s133 = sshll.u32 %s13, 4
      %s134 = int_to_ptr.hbm [resolvable:$true] %s133
      %s135 = sshll.u32 [#allocation4], 4
      %s136 = int_to_ptr.vmem [resolvable:$true] %s135
      %138 = dma.hbm_to_vmem [thread:$0]  %s134, 64, %s136, [#allocation5]
    $region29: #{stack_gnn_forward.1} parent=1 // pred_fallthru
      _
    // Predicated region
    $region30: #{stack_gnn_forward.1} parent=1 // pred_check
      _
    $region31: #{stack_gnn_forward.1} parent=1 // pred_check_branch
      %140 = sbr.rel (0) target = $region33
    $region32: #{stack_gnn_forward.1} parent=1 // pred_region
      %142 = vsyncadd [#allocation5], 0
      %s144 = sshll.u32 %s15, 4
      %s145 = int_to_ptr.hbm [resolvable:$true] %s144
      %s146 = sshll.u32 [#allocation6], 4
      %s147 = int_to_ptr.vmem [resolvable:$true] %s146
      %149 = dma.hbm_to_vmem [thread:$0]  %s145, 32, %s147, [#allocation5]
    $region33: #{stack_gnn_forward.1} parent=1 // pred_fallthru
      _
    // Predicated region
    $region34: #{stack_gnn_forward.1} parent=1 // pred_check
      _
    $region35: #{stack_gnn_forward.1} parent=1 // pred_check_branch
      %151 = sbr.rel (0) target = $region37
    $region36: #{stack_gnn_forward.1} parent=1 // pred_region
      _
    $region37: #{stack_gnn_forward.1} parent=1 // pred_fallthru
      _
    // Predicated region
    $region38: #{stack_gnn_forward.1} parent=1 // pred_check
      _
    $region39: #{stack_gnn_forward.1} parent=1 // pred_check_branch
      %153 = sbr.rel (0) target = $region41
    $region40: #{stack_gnn_forward.1} parent=1 // pred_region
      _
    $region41: #{stack_gnn_forward.1} parent=1 // pred_fallthru
      _
    // Predicated region
    $region42: #{stack_gnn_forward.1} parent=1 // pred_check
      _
    $region43: #{stack_gnn_forward.1} parent=1 // pred_check_branch
      %155 = sbr.rel (0) target = $region45
    $region44: #{stack_gnn_forward.1} parent=1 // pred_region
      %157 = vsyncadd [#allocation8], 0
      %s159 = sshll.u32 %s21, 4
      %s160 = int_to_ptr.hbm [resolvable:$true] %s159
      %s161 = sshll.u32 [#allocation7], 4
      %s162 = int_to_ptr.vmem [resolvable:$true] %s161
      %164 = dma.hbm_to_vmem [thread:$0]  %s160, 32, %s162, [#allocation8]
    $region45: #{stack_gnn_forward.1} parent=1 // pred_fallthru
      _
    // Predicated region
    $region46: #{stack_gnn_forward.1} parent=1 // pred_check
      _
    $region47: #{stack_gnn_forward.1} parent=1 // pred_check_branch
      %166 = sbr.rel (0) target = $region49
    $region48: #{stack_gnn_forward.1} parent=1 // pred_region
      _
    $region49: #{stack_gnn_forward.1} parent=1 // pred_fallthru
      _
    // Predicated region
    $region50: #{stack_gnn_forward.1} parent=1 // pred_check
      _
    $region51: #{stack_gnn_forward.1} parent=1 // pred_check_branch
      %168 = sbr.rel (0) target = $region53
    $region52: #{stack_gnn_forward.1} parent=1 // pred_region
      %170 = vsyncadd [#allocation8], 0
      %s171 = sshll.u32 %s25, 4
      %s172 = int_to_ptr.hbm [resolvable:$true] %s171
      %s173 = sshll.u32 [#allocation9], 4
      %s174 = int_to_ptr.vmem [resolvable:$true] %s173
      %179 = dma.hbm_to_vmem [thread:$0]  %s172, 1024, %s174, [#allocation8], 64, 64, 4
    $region53: #{stack_gnn_forward.1} parent=1 // pred_fallthru
      _
    // Predicated region
    $region54: #{stack_gnn_forward.1} parent=1 // pred_check
      _
    $region55: #{stack_gnn_forward.1} parent=1 // pred_check_branch
      %181 = sbr.rel (0) target = $region57
    $region56: #{stack_gnn_forward.1} parent=1 // pred_region
      %183 = vsyncadd [#allocation11], 0
      %s185 = sshll.u32 %s27, 4
      %s186 = int_to_ptr.hbm [resolvable:$true] %s185
      %s187 = sshll.u32 [#allocation10], 4
      %s188 = int_to_ptr.vmem [resolvable:$true] %s187
      %190 = dma.hbm_to_vmem [thread:$0]  %s186, 16, %s188, [#allocation11]
    $region57: #{stack_gnn_forward.1} parent=1 // pred_fallthru
      _
    // Predicated region
    $region58: #{stack_gnn_forward.1} parent=1 // pred_check
      _
    $region59: #{stack_gnn_forward.1} parent=1 // pred_check_branch
      %192 = sbr.rel (0) target = $region61
    $region60: #{stack_gnn_forward.1} parent=1 // pred_region
      %194 = vsyncadd [#allocation11], 0
      %s195 = sshll.u32 %s29, 4
      %s196 = int_to_ptr.hbm [resolvable:$true] %s195
      %s197 = sshll.u32 [#allocation12], 4
      %s198 = int_to_ptr.vmem [resolvable:$true] %s197
      %203 = dma.hbm_to_vmem [thread:$0]  %s196, 1024, %s198, [#allocation11], 64, 64, 4
    $region61: #{stack_gnn_forward.1} parent=1 // pred_fallthru
      _
    // Predicated region
    $region62: #{stack_gnn_forward.1} parent=1 // pred_check
      _
    $region63: #{stack_gnn_forward.1} parent=1 // pred_check_branch
      %205 = sbr.rel (0) target = $region65
    $region64: #{stack_gnn_forward.1} parent=1 // pred_region
      %207 = vsyncadd [#allocation14], 0
      %s209 = sshll.u32 %s31, 4
      %s210 = int_to_ptr.hbm [resolvable:$true] %s209
      %s211 = sshll.u32 [#allocation13], 4
      %s212 = int_to_ptr.vmem [resolvable:$true] %s211
      %214 = dma.hbm_to_vmem [thread:$0]  %s210, 16, %s212, [#allocation14]
    $region65: #{stack_gnn_forward.1} parent=1 // pred_fallthru
      _
    // Predicated region
    $region66: #{stack_gnn_forward.1} parent=1 // pred_check
      _
    $region67: #{stack_gnn_forward.1} parent=1 // pred_check_branch
      %216 = sbr.rel (0) target = $region69
    $region68: #{stack_gnn_forward.1} parent=1 // pred_region
      %218 = vsyncadd [#allocation14], 0
      %s219 = sshll.u32 %s33, 4
      %s220 = int_to_ptr.hbm [resolvable:$true] %s219
      %s221 = sshll.u32 [#allocation15], 4
      %s222 = int_to_ptr.vmem [resolvable:$true] %s221
      %227 = dma.hbm_to_vmem [thread:$0]  %s220, 1024, %s222, [#allocation14], 64, 64, 4
    $region69: #{stack_gnn_forward.1} parent=1 // pred_fallthru
      _
    // Predicated region
    $region70: #{stack_gnn_forward.1} parent=1 // pred_check
      _
    $region71: #{stack_gnn_forward.1} parent=1 // pred_check_branch
      %229 = sbr.rel (0) target = $region73
    $region72: #{stack_gnn_forward.1} parent=1 // pred_region
      %231 = vsyncadd [#allocation17], 0
      %s232 = sshll.u32 %s35, 4
      %s233 = int_to_ptr.hbm [resolvable:$true] %s232
      %s234 = sshll.u32 [#allocation16], 4
      %s235 = int_to_ptr.vmem [resolvable:$true] %s234
      %240 = dma.hbm_to_vmem [thread:$0]  %s233, 1024, %s235, [#allocation17], 64, 64, 4
    $region73: #{stack_gnn_forward.1} parent=1 // pred_fallthru
      _
    // Predicated region
    $region74: #{stack_gnn_forward.1} parent=1 // pred_check
      _
    $region75: #{stack_gnn_forward.1} parent=1 // pred_check_branch
      %242 = sbr.rel (0) target = $region77
    $region76: #{stack_gnn_forward.1} parent=1 // pred_region
      %244 = vsyncadd [#allocation17], 0
      %s245 = sshll.u32 %s37, 4
      %s246 = int_to_ptr.hbm [resolvable:$true] %s245
      %s247 = sshll.u32 [#allocation18], 4
      %s248 = int_to_ptr.vmem [resolvable:$true] %s247
      %253 = dma.hbm_to_vmem [thread:$0]  %s246, 1024, %s248, [#allocation17], 64, 64, 4
    $region77: #{stack_gnn_forward.1} parent=1 // pred_fallthru
      _
    // Predicated region
    $region78: #{stack_gnn_forward.1} parent=1 // pred_check
      _
    $region79: #{stack_gnn_forward.1} parent=1 // pred_check_branch
      %255 = sbr.rel (0) target = $region81
    $region80: #{stack_gnn_forward.1} parent=1 // pred_region
      %257 = vsyncadd [#allocation20], 0
      %s259 = sshll.u32 %s39, 4
      %s260 = int_to_ptr.hbm [resolvable:$true] %s259
      %s261 = sshll.u32 [#allocation19], 4
      %s262 = int_to_ptr.vmem [resolvable:$true] %s261
      %264 = dma.hbm_to_vmem [thread:$0]  %s260, 16, %s262, [#allocation20]
    $region81: #{stack_gnn_forward.1} parent=1 // pred_fallthru
      _
    // Predicated region
    $region82: #{stack_gnn_forward.1} parent=1 // pred_check
      _
    $region83: #{stack_gnn_forward.1} parent=1 // pred_check_branch
      %266 = sbr.rel (0) target = $region85
    $region84: #{stack_gnn_forward.1} parent=1 // pred_region
      %268 = vsyncadd [#allocation20], 0
      %s269 = sshll.u32 %s41, 4
      %s270 = int_to_ptr.hbm [resolvable:$true] %s269
      %s271 = sshll.u32 [#allocation21], 4
      %s272 = int_to_ptr.vmem [resolvable:$true] %s271
      %277 = dma.hbm_to_vmem [thread:$0]  %s270, 2048, %s272, [#allocation20], 128, 128, 8
    $region85: #{stack_gnn_forward.1} parent=1 // pred_fallthru
      _
    // Predicated region
    $region86: #{stack_gnn_forward.1} parent=1 // pred_check
      _
    $region87: #{stack_gnn_forward.1} parent=1 // pred_check_branch
      %279 = sbr.rel (0) target = $region89
    $region88: #{stack_gnn_forward.1} parent=1 // pred_region
      %281 = vsyncadd [#allocation23], 0
      %s283 = sshll.u32 %s43, 4
      %s284 = int_to_ptr.hbm [resolvable:$true] %s283
      %s285 = sshll.u32 [#allocation22], 4
      %s286 = int_to_ptr.vmem [resolvable:$true] %s285
      %288 = dma.hbm_to_vmem [thread:$0]  %s284, 32, %s286, [#allocation23]
    $region89: #{stack_gnn_forward.1} parent=1 // pred_fallthru
      _
    // Predicated region
    $region90: #{stack_gnn_forward.1} parent=1 // pred_check
      _
    $region91: #{stack_gnn_forward.1} parent=1 // pred_check_branch
      %290 = sbr.rel (0) target = $region93
    $region92: #{stack_gnn_forward.1} parent=1 // pred_region
      %292 = vsyncadd [#allocation23], 0
      %s293 = sshll.u32 %s45, 4
      %s294 = int_to_ptr.hbm [resolvable:$true] %s293
      %s295 = sshll.u32 [#allocation24], 4
      %s296 = int_to_ptr.vmem [resolvable:$true] %s295
      %301 = dma.hbm_to_vmem [thread:$0]  %s294, 1024, %s296, [#allocation23], 64, 64, 4
    $region93: #{stack_gnn_forward.1} parent=1 // pred_fallthru
      _
    // Predicated region
    $region94: #{stack_gnn_forward.1} parent=1 // pred_check
      _
    $region95: #{stack_gnn_forward.1} parent=1 // pred_check_branch
      %303 = sbr.rel (0) target = $region97
    $region96: #{stack_gnn_forward.1} parent=1 // pred_region
      %305 = vsyncadd [#allocation26], 0
      %s306 = sshll.u32 %s47, 4
      %s307 = int_to_ptr.hbm [resolvable:$true] %s306
      %s308 = sshll.u32 [#allocation25], 4
      %s309 = int_to_ptr.vmem [resolvable:$true] %s308
      %314 = dma.hbm_to_vmem [thread:$0]  %s307, 1024, %s309, [#allocation26], 64, 64, 4
    $region97: #{stack_gnn_forward.1} parent=1 // pred_fallthru
      _
    // Predicated region
    $region98: #{stack_gnn_forward.1} parent=1 // pred_check
      _
    $region99: #{stack_gnn_forward.1} parent=1 // pred_check_branch
      %316 = sbr.rel (0) target = $region101
    $region100: #{stack_gnn_forward.1} parent=1 // pred_region
      _
    $region101: #{stack_gnn_forward.1} parent=1 // pred_fallthru
      _
    // Predicated region
    $region102: #{stack_gnn_forward.1} parent=1 // pred_check
      _
    $region103: #{stack_gnn_forward.1} parent=1 // pred_check_branch
      %318 = sbr.rel (0) target = $region105
    $region104: #{stack_gnn_forward.1} parent=1 // pred_region
      %320 = vsyncadd [#allocation26], 0
      %s321 = sshll.u32 %s51, 4
      %s322 = int_to_ptr.hbm [resolvable:$true] %s321
      %s323 = sshll.u32 [#allocation27], 4
      %s324 = int_to_ptr.vmem [resolvable:$true] %s323
      %329 = dma.hbm_to_vmem [thread:$0]  %s322, 1024, %s324, [#allocation26], 64, 64, 4
    $region105: #{stack_gnn_forward.1} parent=1 // pred_fallthru
      _
    // Predicated region
    $region106: #{stack_gnn_forward.1} parent=1 // pred_check
      _
    $region107: #{stack_gnn_forward.1} parent=1 // pred_check_branch
      %331 = sbr.rel (0) target = $region109
    $region108: #{stack_gnn_forward.1} parent=1 // pred_region
      _
    $region109: #{stack_gnn_forward.1} parent=1 // pred_fallthru
      _
    // Predicated region
    $region110: #{stack_gnn_forward.1} parent=1 // pred_check
      _
    $region111: #{stack_gnn_forward.1} parent=1 // pred_check_branch
      %333 = sbr.rel (0) target = $region113
    $region112: #{stack_gnn_forward.1} parent=1 // pred_region
      %335 = vsyncadd [#allocation29], 0
      %s336 = sshll.u32 %s55, 4
      %s337 = int_to_ptr.hbm [resolvable:$true] %s336
      %s338 = sshll.u32 [#allocation28], 4
      %s339 = int_to_ptr.vmem [resolvable:$true] %s338
      %344 = dma.hbm_to_vmem [thread:$0]  %s337, 1024, %s339, [#allocation29], 64, 64, 4
    $region113: #{stack_gnn_forward.1} parent=1 // pred_fallthru
      _
    // Predicated region
    $region114: #{stack_gnn_forward.1} parent=1 // pred_check
      _
    $region115: #{stack_gnn_forward.1} parent=1 // pred_check_branch
      %346 = sbr.rel (0) target = $region117
    $region116: #{stack_gnn_forward.1} parent=1 // pred_region
      %348 = vsyncadd [#allocation29], 0
      %s349 = sshll.u32 %s57, 4
      %s350 = int_to_ptr.hbm [resolvable:$true] %s349
      %s351 = sshll.u32 [#allocation30], 4
      %s352 = int_to_ptr.vmem [resolvable:$true] %s351
      %357 = dma.hbm_to_vmem [thread:$0]  %s350, 1024, %s352, [#allocation29], 64, 64, 4
    $region117: #{stack_gnn_forward.1} parent=1 // pred_fallthru
      _
    // Predicated region
    $region118: #{stack_gnn_forward.1} parent=1 // pred_check
      _
    $region119: #{stack_gnn_forward.1} parent=1 // pred_check_branch
      %359 = sbr.rel (0) target = $region121
    $region120: #{stack_gnn_forward.1} parent=1 // pred_region
      %361 = vsyncadd [#allocation32], 0
      %s362 = sshll.u32 %s59, 4
      %s363 = int_to_ptr.hbm [resolvable:$true] %s362
      %s364 = sshll.u32 [#allocation31], 4
      %s365 = int_to_ptr.vmem [resolvable:$true] %s364
      %370 = dma.hbm_to_vmem [thread:$0]  %s363, 1024, %s365, [#allocation32], 64, 64, 4
    $region121: #{stack_gnn_forward.1} parent=1 // pred_fallthru
      _
    // Predicated region
    $region122: #{stack_gnn_forward.1} parent=1 // pred_check
      _
    $region123: #{stack_gnn_forward.1} parent=1 // pred_check_branch
      %372 = sbr.rel (0) target = $region125
    $region124: #{stack_gnn_forward.1} parent=1 // pred_region
      _
    $region125: #{stack_gnn_forward.1} parent=1 // pred_fallthru
      _
    // Predicated region
    $region126: #{stack_gnn_forward.1} parent=1 // pred_check
      _
    $region127: #{stack_gnn_forward.1} parent=1 // pred_check_branch
      %374 = sbr.rel (0) target = $region129
    $region128: #{stack_gnn_forward.1} parent=1 // pred_region
      %376 = vsyncadd [#allocation32], 0
      %s377 = sshll.u32 %s63, 4
      %s378 = int_to_ptr.hbm [resolvable:$true] %s377
      %s379 = sshll.u32 [#allocation33], 4
      %s380 = int_to_ptr.vmem [resolvable:$true] %s379
      %385 = dma.hbm_to_vmem [thread:$0]  %s378, 2048, %s380, [#allocation32], 128, 128, 8
    $region129: #{stack_gnn_forward.1} parent=1 // pred_fallthru
      _
    // Predicated region
    $region130: #{stack_gnn_forward.1} parent=1 // pred_check
      _
    $region131: #{stack_gnn_forward.1} parent=1 // pred_check_branch
      %387 = sbr.rel (0) target = $region133
    $region132: #{stack_gnn_forward.1} parent=1 // pred_region
      _
    $region133: #{stack_gnn_forward.1} parent=1 // pred_fallthru
      _
    // Predicated region
    $region134: #{stack_gnn_forward.1} parent=1 // pred_check
      _
    $region135: #{stack_gnn_forward.1} parent=1 // pred_check_branch
      %389 = sbr.rel (0) target = $region137
    $region136: #{stack_gnn_forward.1} parent=1 // pred_region
      %391 = vsyncadd [#allocation35], 0
      %s392 = sshll.u32 %s67, 4
      %s393 = int_to_ptr.hbm [resolvable:$true] %s392
      %s394 = sshll.u32 [#allocation34], 4
      %s395 = int_to_ptr.vmem [resolvable:$true] %s394
      %400 = dma.hbm_to_vmem [thread:$0]  %s393, 1024, %s395, [#allocation35], 64, 64, 4
    $region137: #{stack_gnn_forward.1} parent=1 // pred_fallthru
      _
    // Predicated region
    $region138: #{stack_gnn_forward.1} parent=1 // pred_check
      _
    $region139: #{stack_gnn_forward.1} parent=1 // pred_check_branch
      %402 = sbr.rel (0) target = $region141
    $region140: #{stack_gnn_forward.1} parent=1 // pred_region
      %404 = vsyncadd [#allocation35], 0
      %s405 = sshll.u32 %s69, 4
      %s406 = int_to_ptr.hbm [resolvable:$true] %s405
      %s407 = sshll.u32 [#allocation36], 4
      %s408 = int_to_ptr.vmem [resolvable:$true] %s407
      %413 = dma.hbm_to_vmem [thread:$0]  %s406, 1024, %s408, [#allocation35], 64, 64, 4
    $region141: #{stack_gnn_forward.1} parent=1 // pred_fallthru
      _
    // Predicated region
    $region142: #{stack_gnn_forward.1} parent=1 // pred_check
      _
    $region143: #{stack_gnn_forward.1} parent=1 // pred_check_branch
      %415 = sbr.rel (0) target = $region145
    $region144: #{stack_gnn_forward.1} parent=1 // pred_region
      _
    $region145: #{stack_gnn_forward.1} parent=1 // pred_fallthru
      _
    // Predicated region
    $region146: #{stack_gnn_forward.1} parent=1 // pred_check
      _
    $region147: #{stack_gnn_forward.1} parent=1 // pred_check_branch
      %417 = sbr.rel (0) target = $region149
    $region148: #{stack_gnn_forward.1} parent=1 // pred_region
      %419 = vsyncadd [#allocation38], 0
      %s420 = sshll.u32 %s73, 4
      %s421 = int_to_ptr.hbm [resolvable:$true] %s420
      %s422 = sshll.u32 [#allocation37], 4
      %s423 = int_to_ptr.vmem [resolvable:$true] %s422
      %428 = dma.hbm_to_vmem [thread:$0]  %s421, 1024, %s423, [#allocation38], 64, 64, 4
    $region149: #{stack_gnn_forward.1} parent=1 // pred_fallthru
      _
    // Predicated region
    $region150: #{stack_gnn_forward.1} parent=1 // pred_check
      _
    $region151: #{stack_gnn_forward.1} parent=1 // pred_check_branch
      %430 = sbr.rel (0) target = $region153
    $region152: #{stack_gnn_forward.1} parent=1 // pred_region
      _
    $region153: #{stack_gnn_forward.1} parent=1 // pred_fallthru
      _
    // Predicated region
    $region154: #{stack_gnn_forward.1} parent=1 // pred_check
      _
    $region155: #{stack_gnn_forward.1} parent=1 // pred_check_branch
      %432 = sbr.rel (0) target = $region157
    $region156: #{stack_gnn_forward.1} parent=1 // pred_region
      _
    $region157: #{stack_gnn_forward.1} parent=1 // pred_fallthru
      _
    // Predicated region
    $region158: #{stack_gnn_forward.1} parent=1 // pred_check
      _
    $region159: #{stack_gnn_forward.1} parent=1 // pred_check_branch
      %434 = sbr.rel (0) target = $region161
    $region160: #{stack_gnn_forward.1} parent=1 // pred_region
      _
    $region161: #{stack_gnn_forward.1} parent=1 // pred_fallthru
      _
    // Predicated region
    $region162: #{stack_gnn_forward.1} parent=1 // pred_check
      _
    $region163: #{stack_gnn_forward.1} parent=1 // pred_check_branch
      %436 = sbr.rel (0) target = $region165
    $region164: #{stack_gnn_forward.1} parent=1 // pred_region
      _
    $region165: #{stack_gnn_forward.1} parent=1 // pred_fallthru
      _
    // Predicated region
    $region166: #{stack_gnn_forward.1} parent=1 // pred_check
      _
    $region167: #{stack_gnn_forward.1} parent=1 // pred_check_branch
      %438 = sbr.rel (0) target = $region169
    $region168: #{stack_gnn_forward.1} parent=1 // pred_region
      _
    $region169: #{stack_gnn_forward.1} parent=1 // pred_fallthru
      _
    // Predicated region
    $region170: #{stack_gnn_forward.1} parent=1 // pred_check
      _
    $region171: #{stack_gnn_forward.1} parent=1 // pred_check_branch
      %440 = sbr.rel (0) target = $region173
    $region172: #{stack_gnn_forward.1} parent=1 // pred_region
      _
    $region173: #{stack_gnn_forward.1} parent=1 // pred_fallthru
      _
    // Predicated region
    $region174: #{stack_gnn_forward.1} parent=1 // pred_check
      _
    $region175: #{stack_gnn_forward.1} parent=1 // pred_check_branch
      %442 = sbr.rel (0) target = $region177
    $region176: #{stack_gnn_forward.1} parent=1 // pred_region
      _
    $region177: #{stack_gnn_forward.1} parent=1 // pred_fallthru
      _
    // Predicated region
    $region178: #{stack_gnn_forward.1} parent=1 // pred_check
      _
    $region179: #{stack_gnn_forward.1} parent=1 // pred_check_branch
      %444 = sbr.rel (0) target = $region181
    $region180: #{stack_gnn_forward.1} parent=1 // pred_region
      %446 = dma.done [#allocation3], 64
    $region181: #{stack_gnn_forward.1} parent=1 // pred_fallthru
      _
    // Predicated region
    $region182: #{stack_gnn_forward.1} parent=1 // pred_check
      _
    $region183: #{stack_gnn_forward.1} parent=1 // pred_check_branch
      %448 = sbr.rel (0) target = $region185
    $region184: #{stack_gnn_forward.1} parent=1 // pred_region
      %450 = dma.done [#allocation5], 64
    $region185: #{stack_gnn_forward.1} parent=1 // pred_fallthru
      _
    // Predicated region
    $region186: #{stack_gnn_forward.1} parent=1 // pred_check
      _
    $region187: #{stack_gnn_forward.1} parent=1 // pred_check_branch
      %452 = sbr.rel (0) target = $region189
    $region188: #{stack_gnn_forward.1} parent=1 // pred_region
      %454 = dma.done [#allocation5], 32
    $region189: #{stack_gnn_forward.1} parent=1 // pred_fallthru
      _
    // Predicated region
    $region190: #{stack_gnn_forward.1} parent=1 // pred_check
      _
    $region191: #{stack_gnn_forward.1} parent=1 // pred_check_branch
      %456 = sbr.rel (0) target = $region193
    $region192: #{stack_gnn_forward.1} parent=1 // pred_region
      %458 = dma.done [#allocation8], 32
    $region193: #{stack_gnn_forward.1} parent=1 // pred_fallthru
      _
    // Predicated region
    $region194: #{stack_gnn_forward.1} parent=1 // pred_check
      _
    $region195: #{stack_gnn_forward.1} parent=1 // pred_check_branch
      %460 = sbr.rel (0) target = $region197
    $region196: #{stack_gnn_forward.1} parent=1 // pred_region
      %462 = dma.done [#allocation8], 1024
    $region197: #{stack_gnn_forward.1} parent=1 // pred_fallthru
      _
    // Predicated region
    $region198: #{stack_gnn_forward.1} parent=1 // pred_check
      _
    $region199: #{stack_gnn_forward.1} parent=1 // pred_check_branch
      %464 = sbr.rel (0) target = $region201
    $region200: #{stack_gnn_forward.1} parent=1 // pred_region
      %466 = dma.done [#allocation11], 16
    $region201: #{stack_gnn_forward.1} parent=1 // pred_fallthru
      _
    // Predicated region
    $region202: #{stack_gnn_forward.1} parent=1 // pred_check
      _
    $region203: #{stack_gnn_forward.1} parent=1 // pred_check_branch
      %468 = sbr.rel (0) target = $region205
    $region204: #{stack_gnn_forward.1} parent=1 // pred_region
      %470 = dma.done [#allocation11], 1024
    $region205: #{stack_gnn_forward.1} parent=1 // pred_fallthru
      _
    // Predicated region
    $region206: #{stack_gnn_forward.1} parent=1 // pred_check
      _
    $region207: #{stack_gnn_forward.1} parent=1 // pred_check_branch
      %472 = sbr.rel (0) target = $region209
    $region208: #{stack_gnn_forward.1} parent=1 // pred_region
      %474 = dma.done [#allocation14], 16
    $region209: #{stack_gnn_forward.1} parent=1 // pred_fallthru
      _
    // Predicated region
    $region210: #{stack_gnn_forward.1} parent=1 // pred_check
      _
    $region211: #{stack_gnn_forward.1} parent=1 // pred_check_branch
      %476 = sbr.rel (0) target = $region213
    $region212: #{stack_gnn_forward.1} parent=1 // pred_region
      %478 = dma.done [#allocation14], 1024
    $region213: #{stack_gnn_forward.1} parent=1 // pred_fallthru
      _
    // Predicated region
    $region214: #{stack_gnn_forward.1} parent=1 // pred_check
      _
    $region215: #{stack_gnn_forward.1} parent=1 // pred_check_branch
      %480 = sbr.rel (0) target = $region217
    $region216: #{stack_gnn_forward.1} parent=1 // pred_region
      %482 = dma.done [#allocation17], 1024
    $region217: #{stack_gnn_forward.1} parent=1 // pred_fallthru
      _
    // Predicated region
    $region218: #{stack_gnn_forward.1} parent=1 // pred_check
      _
    $region219: #{stack_gnn_forward.1} parent=1 // pred_check_branch
      %484 = sbr.rel (0) target = $region221
    $region220: #{stack_gnn_forward.1} parent=1 // pred_region
      %486 = dma.done [#allocation17], 1024
    $region221: #{stack_gnn_forward.1} parent=1 // pred_fallthru
      _
    // Predicated region
    $region222: #{stack_gnn_forward.1} parent=1 // pred_check
      _
    $region223: #{stack_gnn_forward.1} parent=1 // pred_check_branch
      %488 = sbr.rel (0) target = $region225
    $region224: #{stack_gnn_forward.1} parent=1 // pred_region
      %490 = dma.done [#allocation20], 16
    $region225: #{stack_gnn_forward.1} parent=1 // pred_fallthru
      _
    // Predicated region
    $region226: #{stack_gnn_forward.1} parent=1 // pred_check
      _
    $region227: #{stack_gnn_forward.1} parent=1 // pred_check_branch
      %492 = sbr.rel (0) target = $region229
    $region228: #{stack_gnn_forward.1} parent=1 // pred_region
      %494 = dma.done [#allocation20], 2048
    $region229: #{stack_gnn_forward.1} parent=1 // pred_fallthru
      _
    // Predicated region
    $region230: #{stack_gnn_forward.1} parent=1 // pred_check
      _
    $region231: #{stack_gnn_forward.1} parent=1 // pred_check_branch
      %496 = sbr.rel (0) target = $region233
    $region232: #{stack_gnn_forward.1} parent=1 // pred_region
      %498 = dma.done [#allocation23], 32
    $region233: #{stack_gnn_forward.1} parent=1 // pred_fallthru
      _
    // Predicated region
    $region234: #{stack_gnn_forward.1} parent=1 // pred_check
      _
    $region235: #{stack_gnn_forward.1} parent=1 // pred_check_branch
      %500 = sbr.rel (0) target = $region237
    $region236: #{stack_gnn_forward.1} parent=1 // pred_region
      %502 = dma.done [#allocation23], 1024
    $region237: #{stack_gnn_forward.1} parent=1 // pred_fallthru
      _
    // Predicated region
    $region238: #{stack_gnn_forward.1} parent=1 // pred_check
      _
    $region239: #{stack_gnn_forward.1} parent=1 // pred_check_branch
      %504 = sbr.rel (0) target = $region241
    $region240: #{stack_gnn_forward.1} parent=1 // pred_region
      %506 = dma.done [#allocation26], 1024
    $region241: #{stack_gnn_forward.1} parent=1 // pred_fallthru
      _
    // Predicated region
    $region242: #{stack_gnn_forward.1} parent=1 // pred_check
      _
    $region243: #{stack_gnn_forward.1} parent=1 // pred_check_branch
      %508 = sbr.rel (0) target = $region245
    $region244: #{stack_gnn_forward.1} parent=1 // pred_region
      %510 = dma.done [#allocation26], 1024
    $region245: #{stack_gnn_forward.1} parent=1 // pred_fallthru
      _
    // Predicated region
    $region246: #{stack_gnn_forward.1} parent=1 // pred_check
      _
    $region247: #{stack_gnn_forward.1} parent=1 // pred_check_branch
      %512 = sbr.rel (0) target = $region249
    $region248: #{stack_gnn_forward.1} parent=1 // pred_region
      %514 = dma.done [#allocation29], 1024
    $region249: #{stack_gnn_forward.1} parent=1 // pred_fallthru
      _
    // Predicated region
    $region250: #{stack_gnn_forward.1} parent=1 // pred_check
      _
    $region251: #{stack_gnn_forward.1} parent=1 // pred_check_branch
      %516 = sbr.rel (0) target = $region253
    $region252: #{stack_gnn_forward.1} parent=1 // pred_region
      %518 = dma.done [#allocation29], 1024
    $region253: #{stack_gnn_forward.1} parent=1 // pred_fallthru
      _
    // Predicated region
    $region254: #{stack_gnn_forward.1} parent=1 // pred_check
      _
    $region255: #{stack_gnn_forward.1} parent=1 // pred_check_branch
      %520 = sbr.rel (0) target = $region257
    $region256: #{stack_gnn_forward.1} parent=1 // pred_region
      %522 = dma.done [#allocation32], 1024
    $region257: #{stack_gnn_forward.1} parent=1 // pred_fallthru
      _
    // Predicated region
    $region258: #{stack_gnn_forward.1} parent=1 // pred_check
      _
    $region259: #{stack_gnn_forward.1} parent=1 // pred_check_branch
      %524 = sbr.rel (0) target = $region261
    $region260: #{stack_gnn_forward.1} parent=1 // pred_region
      %526 = dma.done [#allocation32], 2048
    $region261: #{stack_gnn_forward.1} parent=1 // pred_fallthru
      _
    // Predicated region
    $region262: #{stack_gnn_forward.1} parent=1 // pred_check
      _
    $region263: #{stack_gnn_forward.1} parent=1 // pred_check_branch
      %528 = sbr.rel (0) target = $region265
    $region264: #{stack_gnn_forward.1} parent=1 // pred_region
      %530 = dma.done [#allocation35], 1024
    $region265: #{stack_gnn_forward.1} parent=1 // pred_fallthru
      _
    // Predicated region
    $region266: #{stack_gnn_forward.1} parent=1 // pred_check
      _
    $region267: #{stack_gnn_forward.1} parent=1 // pred_check_branch
      %532 = sbr.rel (0) target = $region269
    $region268: #{stack_gnn_forward.1} parent=1 // pred_region
      %534 = dma.done [#allocation35], 1024
    $region269: #{stack_gnn_forward.1} parent=1 // pred_fallthru
      _
    // Predicated region
    $region270: #{stack_gnn_forward.1} parent=1 // pred_check
      _
    $region271: #{stack_gnn_forward.1} parent=1 // pred_check_branch
      %536 = sbr.rel (0) target = $region273
    $region272: #{stack_gnn_forward.1} parent=1 // pred_region
      %538 = dma.done [#allocation38], 1024
    $region273: #{stack_gnn_forward.1} parent=1 // pred_fallthru
      _
    %v540 = vld [vmem:[%s1] sm:$0xff]
    %v541 = vld [vmem:[%s3] sm:$0xff]
    %v542 = vld [vmem:[%s3 + $0x8] sm:$0xff]
    %v543 = vld [vmem:[%s5] sm:$0xff]
    %v544 = vld [vmem:[%s5 + $0x8] sm:$0xff]
    %v545 = vld [vmem:[%s7] sm:$0xff]
    %v546 = vld [vmem:[%s7 + $0x8] sm:$0xff]
    %v547 = vld [vmem:[%s9] sm:$0x1]
    %v548 = vlaneseq
    %v549 = vand.u32 %v548, 127
    %550 = vset.pattern.permute.xlu0 0
    %551 = vperm.xlu0 %550, %v543
    %v552 = vpop.permute.xlu0 %551
    %553 = vset.pattern.permute.xlu0 0
    %554 = vperm.xlu0 %553, %v544
    %v555 = vpop.permute.xlu0 %554
    %vm556 = vcmp.eq.s32.totalorder %v549, %v552
    %vm557 = vcmp.eq.s32.totalorder %v549, %v555
    %v558 = vsel %vm556, 1.0, 0.0
    %v559 = vsel %vm557, 1.0, 0.0
    %v560 = vpack.c.bf16 %v559, %v558
    %561 = vset.pattern.permute.xlu0 0
    %562 = vperm.xlu0 %561, %v545
    %v563 = vpop.permute.xlu0 %562
    %564 = vset.pattern.permute.xlu0 0
    %565 = vperm.xlu0 %564, %v546
    %v566 = vpop.permute.xlu0 %565
    %vm567 = vcmp.eq.s32.totalorder %v549, %v563
    %vm568 = vcmp.eq.s32.totalorder %v549, %v566
    %v569 = vsel %vm567, 1.0, 0.0
    %v570 = vsel %vm568, 1.0, 0.0
    %v571 = vpack.c.bf16 %v570, %v569
    %v572 = vlaneseq
    %v573 = vshrl.u32 %v572, 7
    %v574 = vperm.slane %v547, 0
    %vm575 = vcmp.eq.s32.totalorder %v573, %v574
    %v576 = vsel %vm575, 1.0, 0.0
    %v577 = vld [vmem:[#allocation2] sm:$0x7]
    %v578 = vld [vmem:[#allocation4] sm:$0x7]
    %v579 = vld [vmem:[#allocation6] sm:$0x3]
    %v580 = vld [vmem:[%s17] sm:$0x1]
    %v581 = vld [vmem:[%s19] sm:$0xff]
    %v582 = vld [vmem:[%s19 + $0x8] sm:$0xff]
    %v583 = vld [vmem:[%s19 + $0x10] sm:$0xff]
    %v584 = vld [vmem:[%s19 + $0x18] sm:$0xff]
    %v585 = vld [vmem:[%s19 + $0x20] sm:$0xff]
    %v586 = vld [vmem:[%s19 + $0x28] sm:$0xff]
    %v587 = vld [vmem:[%s19 + $0x30] sm:$0xff]
    %v588 = vld [vmem:[%s19 + $0x38] sm:$0xff]
    %v589 = vld [vmem:[%s19 + $0x40] sm:$0xff]
    %v590 = vld [vmem:[%s19 + $0x48] sm:$0xff]
    %v591 = vld [vmem:[%s19 + $0x50] sm:$0xff]
    %v592 = vld [vmem:[%s19 + $0x58] sm:$0xff]
    %v593 = vld [vmem:[%s19 + $0x60] sm:$0xff]
    %v594 = vld [vmem:[%s19 + $0x68] sm:$0xff]
    %v595 = vld [vmem:[%s19 + $0x70] sm:$0xff]
    %v596 = vld [vmem:[%s19 + $0x78] sm:$0xff]
    %v597 = vld [vmem:[#allocation7] sm:$0x3]
    %v598 = vld [vmem:[%s23] sm:$0x7]
    %v599 = vld [vmem:[#allocation9] sm:$0xf]
    %v600 = vld [vmem:[#allocation9 + $0x4] sm:$0xf]
    %v601 = vld [vmem:[#allocation9 + $0x8] sm:$0xf]
    %v602 = vld [vmem:[#allocation9 + $0xc] sm:$0xf]
    %v603 = vld [vmem:[#allocation9 + $0x10] sm:$0xf]
    %v604 = vld [vmem:[#allocation9 + $0x14] sm:$0xf]
    %v605 = vld [vmem:[#allocation9 + $0x18] sm:$0xf]
    %v606 = vld [vmem:[#allocation9 + $0x1c] sm:$0xf]
    %v607 = vld [vmem:[#allocation9 + $0x20] sm:$0xf]
    %v608 = vld [vmem:[#allocation9 + $0x24] sm:$0xf]
    %v609 = vld [vmem:[#allocation9 + $0x28] sm:$0xf]
    %v610 = vld [vmem:[#allocation9 + $0x2c] sm:$0xf]
    %v611 = vld [vmem:[#allocation9 + $0x30] sm:$0xf]
    %v612 = vld [vmem:[#allocation9 + $0x34] sm:$0xf]
    %v613 = vld [vmem:[#allocation9 + $0x38] sm:$0xf]
    %v614 = vld [vmem:[#allocation9 + $0x3c] sm:$0xf]
    %v615 = vld [vmem:[#allocation10] sm:$0x1]
    %v616 = vld [vmem:[#allocation12] sm:$0xf]
    %v617 = vld [vmem:[#allocation12 + $0x4] sm:$0xf]
    %v618 = vld [vmem:[#allocation12 + $0x8] sm:$0xf]
    %v619 = vld [vmem:[#allocation12 + $0xc] sm:$0xf]
    %v620 = vld [vmem:[#allocation12 + $0x10] sm:$0xf]
    %v621 = vld [vmem:[#allocation12 + $0x14] sm:$0xf]
    %v622 = vld [vmem:[#allocation12 + $0x18] sm:$0xf]
    %v623 = vld [vmem:[#allocation12 + $0x1c] sm:$0xf]
    %v624 = vld [vmem:[#allocation12 + $0x20] sm:$0xf]
    %v625 = vld [vmem:[#allocation12 + $0x24] sm:$0xf]
    %v626 = vld [vmem:[#allocation12 + $0x28] sm:$0xf]
    %v627 = vld [vmem:[#allocation12 + $0x2c] sm:$0xf]
    %v628 = vld [vmem:[#allocation12 + $0x30] sm:$0xf]
    %v629 = vld [vmem:[#allocation12 + $0x34] sm:$0xf]
    %v630 = vld [vmem:[#allocation12 + $0x38] sm:$0xf]
    %v631 = vld [vmem:[#allocation12 + $0x3c] sm:$0xf]
    %v632 = vld [vmem:[#allocation13] sm:$0x1]
    %v633 = vpack.c.bf16 %v540, %v540
    %vm634 = vcmask 64512
    %v636 = vsel %vm634, %v560, 0
    %vm638 = vcmask 1043456
    %v640 = vsel %vm638, %v633, 0
    %642 = vmatpush.bf16.msra.mxu0 0
    %643 = vmatpush.bf16.msra.mxu0 0
    %644 = vmatpush.bf16.msra.mxu0 0
    %645 = vmatpush.bf16.msra.mxu0 0
    %646 = vmatpush.bf16.msra.mxu0 0
    %647 = vmatpush.bf16.msra.mxu0 0
    %648 = vmatpush.bf16.msra.mxu0 0
    %649 = vmatpush.bf16.msra.mxu0 %v640
    %650 = vmatmul.bf16.gmra.mxu0 %v636
    %v651 = vpop.f32.mrf.mxu0
    %v652 = vadd.f32 0.0, %v651
    %v653 = vpop.f32.mrf.mxu0
    %v654 = vadd.f32 0.0, %v653
    %655 = vdwg.mxu0
    %v657 = vsel %vm634, %v571, 0
    %659 = vmatpush.bf16.msra.mxu0 0
    %660 = vmatpush.bf16.msra.mxu0 0
    %661 = vmatpush.bf16.msra.mxu0 0
    %662 = vmatpush.bf16.msra.mxu0 0
    %663 = vmatpush.bf16.msra.mxu0 0
    %664 = vmatpush.bf16.msra.mxu0 0
    %665 = vmatpush.bf16.msra.mxu0 0
    %666 = vmatpush.bf16.msra.mxu0 %v640
    %667 = vmatmul.bf16.gmra.mxu0 %v657
    %v668 = vpop.f32.mrf.mxu0
    %v669 = vadd.f32 0.0, %v668
    %v670 = vpop.f32.mrf.mxu0
    %v671 = vadd.f32 0.0, %v670
    %672 = vdwg.mxu0
    %v673 = vpack.c.bf16 %v654, %v652
    %v674 = vpack.c.bf16 %v671, %v669
    %vm675 = vcmask 48128
    %v677 = vsel %vm675, %v674, 0
    %vm679 = vcmask 1042432
    %v681 = vsel %vm679, %v578, 0
    %683 = vmatpush.bf16.msra.mxu0 0
    %684 = vmatpush.bf16.msra.mxu0 0
    %685 = vmatpush.bf16.msra.mxu0 0
    %686 = vmatpush.bf16.msra.mxu0 0
    %687 = vmatpush.bf16.msra.mxu0 0
    %688 = vmatpush.bf16.msra.mxu0 0
    %689 = vmatpush.bf16.msra.mxu0 0
    %690 = vmatpush.bf16.msra.mxu0 %v681
    %691 = vmatmul.bf16.gmra.mxu0 %v677
    %v692 = vpop.f32.mrf.mxu0
    %v693 = vadd.f32 0.0, %v692
    %v694 = vpop.f32.mrf.mxu0
    %v695 = vadd.f32 0.0, %v694
    %696 = vdwg.mxu0
    %v698 = vsel %vm675, %v673, 0
    %v701 = vsel %vm679, %v577, 0
    %703 = vmatpush.bf16.msra.mxu0 0
    %704 = vmatpush.bf16.msra.mxu0 0
    %705 = vmatpush.bf16.msra.mxu0 0
    %706 = vmatpush.bf16.msra.mxu0 0
    %707 = vmatpush.bf16.msra.mxu0 0
    %708 = vmatpush.bf16.msra.mxu0 0
    %709 = vmatpush.bf16.msra.mxu0 0
    %710 = vmatpush.bf16.msra.mxu0 %v701
    %711 = vmatmul.bf16.gmra.mxu0 %v698
    %v712 = vpop.f32.mrf.mxu0
    %v713 = vadd.f32 %v693, %v712
    %v714 = vpop.f32.mrf.mxu0
    %v715 = vadd.f32 %v695, %v714
    %716 = vdwg.mxu0
    %v717 = vpack.c.bf16 %v542, %v541
    %vm718 = vcmask 31744
    %v720 = vsel %vm718, %v717, 0
    %vm722 = vcmask 1041408
    %v724 = vsel %vm722, %v579, 0
    %726 = vmatpush.bf16.msra.mxu0 0
    %727 = vmatpush.bf16.msra.mxu0 0
    %728 = vmatpush.bf16.msra.mxu0 0
    %729 = vmatpush.bf16.msra.mxu0 0
    %730 = vmatpush.bf16.msra.mxu0 0
    %731 = vmatpush.bf16.msra.mxu0 0
    %732 = vmatpush.bf16.msra.mxu0 0
    %733 = vmatpush.bf16.msra.mxu0 %v724
    %734 = vmatmul.bf16.gmra.mxu0 %v720
    %v735 = vpop.f32.mrf.mxu0
    %v736 = vadd.f32 0.0, %v735
    %v737 = vpop.f32.mrf.mxu0
    %v738 = vadd.f32 0.0, %v737
    %739 = vdwg.mxu0
    %v740 = vadd.f32 %v713, %v736
    %v741 = vadd.f32 %v715, %v738
    %v743 = vperm.slane %v580, 0
    %v745 = vadd.f32 %v740, %v743
    %v746 = vadd.f32 %v741, %v743
    %v747 = vmax.f32 %v745, 0.0
    %v748 = vmax.f32 %v746, 0.0
    %v749 = vpack.c.bf16 %v748, %v747
    %v751 = vperm.slane %v597, 0
    %v752 = vperm.slane %v597, 1
    %v771 = vunpack.c.l.b16 %v581
    %v772 = vunpack.c.h.b16 %v581
    %v773 = vunpack.c.l.b16 %v582
    %v774 = vunpack.c.h.b16 %v582
    %v775 = vunpack.c.l.b16 %v583
    %v776 = vunpack.c.h.b16 %v583
    %v777 = vunpack.c.l.b16 %v584
    %v778 = vunpack.c.h.b16 %v584
    %v779 = vunpack.c.l.b16 %v585
    %v780 = vunpack.c.h.b16 %v585
    %v781 = vunpack.c.l.b16 %v586
    %v782 = vunpack.c.h.b16 %v586
    %v783 = vunpack.c.l.b16 %v587
    %v784 = vunpack.c.h.b16 %v587
    %v785 = vunpack.c.l.b16 %v588
    %v786 = vunpack.c.h.b16 %v588
    %v787 = vunpack.c.l.b16 %v589
    %v788 = vunpack.c.h.b16 %v589
    %v789 = vunpack.c.l.b16 %v590
    %v790 = vunpack.c.h.b16 %v590
    %v791 = vunpack.c.l.b16 %v591
    %v792 = vunpack.c.h.b16 %v591
    %v793 = vunpack.c.l.b16 %v592
    %v794 = vunpack.c.h.b16 %v592
    %v795 = vunpack.c.l.b16 %v593
    %v796 = vunpack.c.h.b16 %v593
    %v797 = vunpack.c.l.b16 %v594
    %v798 = vunpack.c.h.b16 %v594
    %v799 = vunpack.c.l.b16 %v595
    %v800 = vunpack.c.h.b16 %v595
    %v801 = vunpack.c.l.b16 %v596
    %v802 = vunpack.c.h.b16 %v596
    %v803 = vpack.c.b16 %v773, %v771
    %v804 = vpack.c.b16 %v774, %v772
    %v805 = vpack.c.b16 %v777, %v775
    %v806 = vpack.c.b16 %v778, %v776
    %v807 = vpack.c.b16 %v781, %v779
    %v808 = vpack.c.b16 %v782, %v780
    %v809 = vpack.c.b16 %v785, %v783
    %v810 = vpack.c.b16 %v786, %v784
    %v811 = vpack.c.b16 %v789, %v787
    %v812 = vpack.c.b16 %v790, %v788
    %v813 = vpack.c.b16 %v793, %v791
    %v814 = vpack.c.b16 %v794, %v792
    %v815 = vpack.c.b16 %v797, %v795
    %v816 = vpack.c.b16 %v798, %v796
    %v817 = vpack.c.b16 %v801, %v799
    %v818 = vpack.c.b16 %v802, %v800
    %835 = vmatpush.bf16.msra.mxu0 %v817
    %836 = vmatpush.bf16.msra.mxu0 %v815
    %837 = vmatpush.bf16.msra.mxu0 %v813
    %838 = vmatpush.bf16.msra.mxu0 %v811
    %839 = vmatpush.bf16.msra.mxu0 %v809
    %840 = vmatpush.bf16.msra.mxu0 %v807
    %841 = vmatpush.bf16.msra.mxu0 %v805
    %842 = vmatpush.bf16.msra.mxu0 %v803
    %843 = vmatmul.bf16.gmra.mxu0 %v749
    %v844 = vpop.f32.mrf.mxu0
    %v845 = vadd.f32 %v751, %v844
    %v846 = vpop.f32.mrf.mxu0
    %v847 = vadd.f32 %v751, %v846
    %848 = vdwg.mxu0
    %849 = vmatpush.bf16.msra.mxu0 %v818
    %850 = vmatpush.bf16.msra.mxu0 %v816
    %851 = vmatpush.bf16.msra.mxu0 %v814
    %852 = vmatpush.bf16.msra.mxu0 %v812
    %853 = vmatpush.bf16.msra.mxu0 %v810
    %854 = vmatpush.bf16.msra.mxu0 %v808
    %855 = vmatpush.bf16.msra.mxu0 %v806
    %856 = vmatpush.bf16.msra.mxu0 %v804
    %857 = vmatmul.bf16.gmra.mxu0 %v749
    %v858 = vpop.f32.mrf.mxu0
    %v859 = vadd.f32 %v752, %v858
    %v860 = vpop.f32.mrf.mxu0
    %v861 = vadd.f32 %v752, %v860
    %862 = vdwg.mxu0
    %vm863 = vcmask 7168
    %v864 = vsel %vm863, %v859, -inf
    %v865 = vsel %vm863, %v861, -inf
    %v866 = vmax.f32 %v864, %v865
    %v867 = vrot.slane %v866, 4
    %v868 = vmax.f32 %v866, %v867
    %v869 = vrot.slane %v868, 2
    %v870 = vmax.f32 %v868, %v869
    %v871 = vrot.slane %v870, 1
    %v872 = vmax.f32 %v870, %v871
    %v873 = vsub.f32 %v859, %v872
    %v874 = vsub.f32 %v861, %v872
    %v875 = vmul.f32 %v873, 1.442695
    %v876 = vpow.pop %v875
    %v877 = vmul.f32 %v874, 1.442695
    %v878 = vpow.pop %v877
    %880 = vset.pattern.permute.xlu0 0
    %881 = vperm.xlu0 %880, %v876
    %v882 = vpop.permute.xlu0 %881
    %885 = vset.pattern.permute.xlu0 0
    %886 = vperm.xlu0 %885, %v878
    %v887 = vpop.permute.xlu0 %886
    %v889 = vmul.f32 %v882, %v845
    %v890 = vmul.f32 %v882, %v859
    %v891 = vmul.f32 %v887, %v847
    %v892 = vmul.f32 %v887, %v861
    %vm893 = vcmask 130048
    %v895 = vsel %vm893, %v576, 0
    %897 = vmatpush.msra.mxu0 0.0
    %898 = vmatpush.msra.mxu0 0.0
    %899 = vmatpush.msra.mxu0 0.0
    %900 = vmatpush.msra.mxu0 0.0
    %901 = vmatpush.msra.mxu0 0.0
    %902 = vmatpush.msra.mxu0 0.0
    %903 = vmatpush.msra.mxu0 0.0
    %904 = vmatpush.msra.mxu0 0.0
    %905 = vmatpush.msra.mxu0 0.0
    %906 = vmatpush.msra.mxu0 0.0
    %907 = vmatpush.msra.mxu0 0.0
    %908 = vmatpush.msra.mxu0 0.0
    %909 = vmatpush.msra.mxu0 0.0
    %910 = vmatpush.msra.mxu0 0.0
    %911 = vmatpush.msra.mxu0 %v891
    %912 = vmatpush.msra.mxu0 %v889
    %913 = vmatmul.f32.gmra.mxu0 %v895
    %v914 = vpop.f32.mrf.mxu0
    %v915 = vadd.f32 0.0, %v914
    %916 = vdwg.mxu0
    %917 = vmatpush.msra.mxu0 0.0
    %918 = vmatpush.msra.mxu0 0.0
    %919 = vmatpush.msra.mxu0 0.0
    %920 = vmatpush.msra.mxu0 0.0
    %921 = vmatpush.msra.mxu0 0.0
    %922 = vmatpush.msra.mxu0 0.0
    %923 = vmatpush.msra.mxu0 0.0
    %924 = vmatpush.msra.mxu0 0.0
    %925 = vmatpush.msra.mxu0 0.0
    %926 = vmatpush.msra.mxu0 0.0
    %927 = vmatpush.msra.mxu0 0.0
    %928 = vmatpush.msra.mxu0 0.0
    %929 = vmatpush.msra.mxu0 0.0
    %930 = vmatpush.msra.mxu0 0.0
    %931 = vmatpush.msra.mxu0 %v892
    %932 = vmatpush.msra.mxu0 %v890
    %933 = vmatmul.f32.gmra.mxu0 %v895
    %v934 = vpop.f32.mrf.mxu0
    %v935 = vadd.f32 0.0, %v934
    %936 = vdwg.mxu0
    %v937 = vmax.f32 %v935, 1e-20
    %v938 = vrcp.pop %v937
    %940 = vset.pattern.permute.xlu0 1
    %941 = vperm.xlu0 %940, %v938
    %v942 = vpop.permute.xlu0 %941
    %v944 = vmul.f32 %v915, %v942
    %v945 = vpack.c.bf16 %v944, %v944
    %v962 = vunpack.c.l.b16 %v599
    %v963 = vunpack.c.l.b16 %v600
    %v964 = vunpack.c.l.b16 %v601
    %v965 = vunpack.c.l.b16 %v602
    %v966 = vunpack.c.l.b16 %v603
    %v967 = vunpack.c.l.b16 %v604
    %v968 = vunpack.c.l.b16 %v605
    %v969 = vunpack.c.l.b16 %v606
    %v970 = vunpack.c.l.b16 %v607
    %v971 = vunpack.c.l.b16 %v608
    %v972 = vunpack.c.l.b16 %v609
    %v973 = vunpack.c.l.b16 %v610
    %v974 = vunpack.c.l.b16 %v611
    %v975 = vunpack.c.l.b16 %v612
    %v976 = vunpack.c.l.b16 %v613
    %v977 = vunpack.c.l.b16 %v614
    %v978 = vpack.c.b16 %v963, %v962
    %v979 = vpack.c.b16 %v965, %v964
    %v980 = vpack.c.b16 %v967, %v966
    %v981 = vpack.c.b16 %v969, %v968
    %v982 = vpack.c.b16 %v971, %v970
    %v983 = vpack.c.b16 %v973, %v972
    %v984 = vpack.c.b16 %v975, %v974
    %v985 = vpack.c.b16 %v977, %v976
    %994 = vmatpush.bf16.msra.mxu0 %v985
    %995 = vmatpush.bf16.msra.mxu0 %v984
    %996 = vmatpush.bf16.msra.mxu0 %v983
    %997 = vmatpush.bf16.msra.mxu0 %v982
    %998 = vmatpush.bf16.msra.mxu0 %v981
    %999 = vmatpush.bf16.msra.mxu0 %v980
    %1000 = vmatpush.bf16.msra.mxu0 %v979
    %1001 = vmatpush.bf16.msra.mxu0 %v978
    %1002 = vmatmul.bf16.gmra.mxu0 %v945
    %v1003 = vpop.f32.mrf.mxu0
    %v1004 = vadd.f32 0.0, %v1003
    %v1005 = vpop.f32.mrf.mxu0
    %1006 = vdwg.mxu0
    %v1007 = vsel %vm675, %v633, 0
    %v1010 = vsel %vm679, %v598, 0
    %1012 = vmatpush.bf16.msra.mxu0 0
    %1013 = vmatpush.bf16.msra.mxu0 0
    %1014 = vmatpush.bf16.msra.mxu0 0
    %1015 = vmatpush.bf16.msra.mxu0 0
    %1016 = vmatpush.bf16.msra.mxu0 0
    %1017 = vmatpush.bf16.msra.mxu0 0
    %1018 = vmatpush.bf16.msra.mxu0 0
    %1019 = vmatpush.bf16.msra.mxu0 %v1010
    %1020 = vmatmul.bf16.gmra.mxu0 %v1007
    %v1021 = vpop.f32.mrf.mxu0
    %v1022 = vadd.f32 %v1004, %v1021
    %v1023 = vpop.f32.mrf.mxu0
    %1024 = vdwg.mxu0
    %v1026 = vperm.slane %v615, 0
    %v1028 = vadd.f32 %v1022, %v1026
    %v1029 = vmax.f32 %v1028, 0.0
    %v1030 = vpack.c.bf16 %v1029, %v1029
    %v1032 = vperm.slane %v632, 0
    %v1050 = vunpack.c.l.b16 %v616
    %v1051 = vunpack.c.l.b16 %v617
    %v1052 = vunpack.c.l.b16 %v618
    %v1053 = vunpack.c.l.b16 %v619
    %v1054 = vunpack.c.l.b16 %v620
    %v1055 = vunpack.c.l.b16 %v621
    %v1056 = vunpack.c.l.b16 %v622
    %v1057 = vunpack.c.l.b16 %v623
    %v1058 = vunpack.c.l.b16 %v624
    %v1059 = vunpack.c.l.b16 %v625
    %v1060 = vunpack.c.l.b16 %v626
    %v1061 = vunpack.c.l.b16 %v627
    %v1062 = vunpack.c.l.b16 %v628
    %v1063 = vunpack.c.l.b16 %v629
    %v1064 = vunpack.c.l.b16 %v630
    %v1065 = vunpack.c.l.b16 %v631
    %v1066 = vpack.c.b16 %v1051, %v1050
    %v1067 = vpack.c.b16 %v1053, %v1052
    %v1068 = vpack.c.b16 %v1055, %v1054
    %v1069 = vpack.c.b16 %v1057, %v1056
    %v1070 = vpack.c.b16 %v1059, %v1058
    %v1071 = vpack.c.b16 %v1061, %v1060
    %v1072 = vpack.c.b16 %v1063, %v1062
    %v1073 = vpack.c.b16 %v1065, %v1064
    %1082 = vmatpush.bf16.msra.mxu0 %v1073
    %1083 = vmatpush.bf16.msra.mxu0 %v1072
    %1084 = vmatpush.bf16.msra.mxu0 %v1071
    %1085 = vmatpush.bf16.msra.mxu0 %v1070
    %1086 = vmatpush.bf16.msra.mxu0 %v1069
    %1087 = vmatpush.bf16.msra.mxu0 %v1068
    %1088 = vmatpush.bf16.msra.mxu0 %v1067
    %1089 = vmatpush.bf16.msra.mxu0 %v1066
    %1090 = vmatmul.bf16.gmra.mxu0 %v1030
    %v1091 = vpop.f32.mrf.mxu0
    %v1092 = vadd.f32 %v1032, %v1091
    %v1093 = vpop.f32.mrf.mxu0
    %1094 = vdwg.mxu0
    %v1095 = vld [vmem:[#allocation15] sm:$0xf]
    %v1096 = vld [vmem:[#allocation15 + $0x4] sm:$0xf]
    %v1097 = vld [vmem:[#allocation15 + $0x8] sm:$0xf]
    %v1098 = vld [vmem:[#allocation15 + $0xc] sm:$0xf]
    %v1099 = vld [vmem:[#allocation15 + $0x10] sm:$0xf]
    %v1100 = vld [vmem:[#allocation15 + $0x14] sm:$0xf]
    %v1101 = vld [vmem:[#allocation15 + $0x18] sm:$0xf]
    %v1102 = vld [vmem:[#allocation15 + $0x1c] sm:$0xf]
    %v1103 = vld [vmem:[#allocation15 + $0x20] sm:$0xf]
    %v1104 = vld [vmem:[#allocation15 + $0x24] sm:$0xf]
    %v1105 = vld [vmem:[#allocation15 + $0x28] sm:$0xf]
    %v1106 = vld [vmem:[#allocation15 + $0x2c] sm:$0xf]
    %v1107 = vld [vmem:[#allocation15 + $0x30] sm:$0xf]
    %v1108 = vld [vmem:[#allocation15 + $0x34] sm:$0xf]
    %v1109 = vld [vmem:[#allocation15 + $0x38] sm:$0xf]
    %v1110 = vld [vmem:[#allocation15 + $0x3c] sm:$0xf]
    %v1111 = vld [vmem:[#allocation16] sm:$0xf]
    %v1112 = vld [vmem:[#allocation16 + $0x4] sm:$0xf]
    %v1113 = vld [vmem:[#allocation16 + $0x8] sm:$0xf]
    %v1114 = vld [vmem:[#allocation16 + $0xc] sm:$0xf]
    %v1115 = vld [vmem:[#allocation16 + $0x10] sm:$0xf]
    %v1116 = vld [vmem:[#allocation16 + $0x14] sm:$0xf]
    %v1117 = vld [vmem:[#allocation16 + $0x18] sm:$0xf]
    %v1118 = vld [vmem:[#allocation16 + $0x1c] sm:$0xf]
    %v1119 = vld [vmem:[#allocation16 + $0x20] sm:$0xf]
    %v1120 = vld [vmem:[#allocation16 + $0x24] sm:$0xf]
    %v1121 = vld [vmem:[#allocation16 + $0x28] sm:$0xf]
    %v1122 = vld [vmem:[#allocation16 + $0x2c] sm:$0xf]
    %v1123 = vld [vmem:[#allocation16 + $0x30] sm:$0xf]
    %v1124 = vld [vmem:[#allocation16 + $0x34] sm:$0xf]
    %v1125 = vld [vmem:[#allocation16 + $0x38] sm:$0xf]
    %v1126 = vld [vmem:[#allocation16 + $0x3c] sm:$0xf]
    %v1127 = vld [vmem:[#allocation18] sm:$0xf]
    %v1128 = vld [vmem:[#allocation18 + $0x4] sm:$0xf]
    %v1129 = vld [vmem:[#allocation18 + $0x8] sm:$0xf]
    %v1130 = vld [vmem:[#allocation18 + $0xc] sm:$0xf]
    %v1131 = vld [vmem:[#allocation18 + $0x10] sm:$0xf]
    %v1132 = vld [vmem:[#allocation18 + $0x14] sm:$0xf]
    %v1133 = vld [vmem:[#allocation18 + $0x18] sm:$0xf]
    %v1134 = vld [vmem:[#allocation18 + $0x1c] sm:$0xf]
    %v1135 = vld [vmem:[#allocation18 + $0x20] sm:$0xf]
    %v1136 = vld [vmem:[#allocation18 + $0x24] sm:$0xf]
    %v1137 = vld [vmem:[#allocation18 + $0x28] sm:$0xf]
    %v1138 = vld [vmem:[#allocation18 + $0x2c] sm:$0xf]
    %v1139 = vld [vmem:[#allocation18 + $0x30] sm:$0xf]
    %v1140 = vld [vmem:[#allocation18 + $0x34] sm:$0xf]
    %v1141 = vld [vmem:[#allocation18 + $0x38] sm:$0xf]
    %v1142 = vld [vmem:[#allocation18 + $0x3c] sm:$0xf]
    %v1143 = vld [vmem:[#allocation19] sm:$0x1]
    %v1144 = vld [vmem:[#allocation21] sm:$0xff]
    %v1145 = vld [vmem:[#allocation21 + $0x8] sm:$0xff]
    %v1146 = vld [vmem:[#allocation21 + $0x10] sm:$0xff]
    %v1147 = vld [vmem:[#allocation21 + $0x18] sm:$0xff]
    %v1148 = vld [vmem:[#allocation21 + $0x20] sm:$0xff]
    %v1149 = vld [vmem:[#allocation21 + $0x28] sm:$0xff]
    %v1150 = vld [vmem:[#allocation21 + $0x30] sm:$0xff]
    %v1151 = vld [vmem:[#allocation21 + $0x38] sm:$0xff]
    %v1152 = vld [vmem:[#allocation21 + $0x40] sm:$0xff]
    %v1153 = vld [vmem:[#allocation21 + $0x48] sm:$0xff]
    %v1154 = vld [vmem:[#allocation21 + $0x50] sm:$0xff]
    %v1155 = vld [vmem:[#allocation21 + $0x58] sm:$0xff]
    %v1156 = vld [vmem:[#allocation21 + $0x60] sm:$0xff]
    %v1157 = vld [vmem:[#allocation21 + $0x68] sm:$0xff]
    %v1158 = vld [vmem:[#allocation21 + $0x70] sm:$0xff]
    %v1159 = vld [vmem:[#allocation21 + $0x78] sm:$0xff]
    %v1160 = vld [vmem:[#allocation22] sm:$0x3]
    %v1161 = vld [vmem:[#allocation24] sm:$0xf]
    %v1162 = vld [vmem:[#allocation24 + $0x4] sm:$0xf]
    %v1163 = vld [vmem:[#allocation24 + $0x8] sm:$0xf]
    %v1164 = vld [vmem:[#allocation24 + $0xc] sm:$0xf]
    %v1165 = vld [vmem:[#allocation24 + $0x10] sm:$0xf]
    %v1166 = vld [vmem:[#allocation24 + $0x14] sm:$0xf]
    %v1167 = vld [vmem:[#allocation24 + $0x18] sm:$0xf]
    %v1168 = vld [vmem:[#allocation24 + $0x1c] sm:$0xf]
    %v1169 = vld [vmem:[#allocation24 + $0x20] sm:$0xf]
    %v1170 = vld [vmem:[#allocation24 + $0x24] sm:$0xf]
    %v1171 = vld [vmem:[#allocation24 + $0x28] sm:$0xf]
    %v1172 = vld [vmem:[#allocation24 + $0x2c] sm:$0xf]
    %v1173 = vld [vmem:[#allocation24 + $0x30] sm:$0xf]
    %v1174 = vld [vmem:[#allocation24 + $0x34] sm:$0xf]
    %v1175 = vld [vmem:[#allocation24 + $0x38] sm:$0xf]
    %v1176 = vld [vmem:[#allocation24 + $0x3c] sm:$0xf]
    %v1177 = vld [vmem:[#allocation25] sm:$0xf]
    %v1178 = vld [vmem:[#allocation25 + $0x4] sm:$0xf]
    %v1179 = vld [vmem:[#allocation25 + $0x8] sm:$0xf]
    %v1180 = vld [vmem:[#allocation25 + $0xc] sm:$0xf]
    %v1181 = vld [vmem:[#allocation25 + $0x10] sm:$0xf]
    %v1182 = vld [vmem:[#allocation25 + $0x14] sm:$0xf]
    %v1183 = vld [vmem:[#allocation25 + $0x18] sm:$0xf]
    %v1184 = vld [vmem:[#allocation25 + $0x1c] sm:$0xf]
    %v1185 = vld [vmem:[#allocation25 + $0x20] sm:$0xf]
    %v1186 = vld [vmem:[#allocation25 + $0x24] sm:$0xf]
    %v1187 = vld [vmem:[#allocation25 + $0x28] sm:$0xf]
    %v1188 = vld [vmem:[#allocation25 + $0x2c] sm:$0xf]
    %v1189 = vld [vmem:[#allocation25 + $0x30] sm:$0xf]
    %v1190 = vld [vmem:[#allocation25 + $0x34] sm:$0xf]
    %v1191 = vld [vmem:[#allocation25 + $0x38] sm:$0xf]
    %v1192 = vld [vmem:[#allocation25 + $0x3c] sm:$0xf]
    %v1193 = vld [vmem:[%s49] sm:$0x1]
    %v1194 = vld [vmem:[#allocation27] sm:$0xf]
    %v1195 = vld [vmem:[#allocation27 + $0x4] sm:$0xf]
    %v1196 = vld [vmem:[#allocation27 + $0x8] sm:$0xf]
    %v1197 = vld [vmem:[#allocation27 + $0xc] sm:$0xf]
    %v1198 = vld [vmem:[#allocation27 + $0x10] sm:$0xf]
    %v1199 = vld [vmem:[#allocation27 + $0x14] sm:$0xf]
    %v1200 = vld [vmem:[#allocation27 + $0x18] sm:$0xf]
    %v1201 = vld [vmem:[#allocation27 + $0x1c] sm:$0xf]
    %v1202 = vld [vmem:[#allocation27 + $0x20] sm:$0xf]
    %v1203 = vld [vmem:[#allocation27 + $0x24] sm:$0xf]
    %v1204 = vld [vmem:[#allocation27 + $0x28] sm:$0xf]
    %v1205 = vld [vmem:[#allocation27 + $0x2c] sm:$0xf]
    %v1206 = vld [vmem:[#allocation27 + $0x30] sm:$0xf]
    %v1207 = vld [vmem:[#allocation27 + $0x34] sm:$0xf]
    %v1208 = vld [vmem:[#allocation27 + $0x38] sm:$0xf]
    %v1209 = vld [vmem:[#allocation27 + $0x3c] sm:$0xf]
    %v1210 = vld [vmem:[%s53] sm:$0x1]
    %v1211 = vpack.c.bf16 %v1092, %v1092
    %v1213 = vsel %vm638, %v1211, 0
    %1215 = vmatpush.bf16.msra.mxu0 0
    %1216 = vmatpush.bf16.msra.mxu0 0
    %1217 = vmatpush.bf16.msra.mxu0 0
    %1218 = vmatpush.bf16.msra.mxu0 0
    %1219 = vmatpush.bf16.msra.mxu0 0
    %1220 = vmatpush.bf16.msra.mxu0 0
    %1221 = vmatpush.bf16.msra.mxu0 0
    %1222 = vmatpush.bf16.msra.mxu0 %v1213
    %1223 = vmatmul.bf16.gmra.mxu0 %v636
    %v1224 = vpop.f32.mrf.mxu0
    %v1225 = vadd.f32 0.0, %v1224
    %v1226 = vpop.f32.mrf.mxu0
    %v1227 = vadd.f32 0.0, %v1226
    %1228 = vdwg.mxu0
    %1229 = vmatpush.bf16.msra.mxu0 0
    %1230 = vmatpush.bf16.msra.mxu0 0
    %1231 = vmatpush.bf16.msra.mxu0 0
    %1232 = vmatpush.bf16.msra.mxu0 0
    %1233 = vmatpush.bf16.msra.mxu0 0
    %1234 = vmatpush.bf16.msra.mxu0 0
    %1235 = vmatpush.bf16.msra.mxu0 0
    %1236 = vmatpush.bf16.msra.mxu0 %v1213
    %1237 = vmatmul.bf16.gmra.mxu0 %v657
    %v1238 = vpop.f32.mrf.mxu0
    %v1239 = vadd.f32 0.0, %v1238
    %v1240 = vpop.f32.mrf.mxu0
    %v1241 = vadd.f32 0.0, %v1240
    %1242 = vdwg.mxu0
    %v1243 = vpack.c.bf16 %v1227, %v1225
    %v1244 = vpack.c.bf16 %v1241, %v1239
    %v1261 = vunpack.c.l.b16 %v1111
    %v1262 = vunpack.c.l.b16 %v1112
    %v1263 = vunpack.c.l.b16 %v1113
    %v1264 = vunpack.c.l.b16 %v1114
    %v1265 = vunpack.c.l.b16 %v1115
    %v1266 = vunpack.c.l.b16 %v1116
    %v1267 = vunpack.c.l.b16 %v1117
    %v1268 = vunpack.c.l.b16 %v1118
    %v1269 = vunpack.c.l.b16 %v1119
    %v1270 = vunpack.c.l.b16 %v1120
    %v1271 = vunpack.c.l.b16 %v1121
    %v1272 = vunpack.c.l.b16 %v1122
    %v1273 = vunpack.c.l.b16 %v1123
    %v1274 = vunpack.c.l.b16 %v1124
    %v1275 = vunpack.c.l.b16 %v1125
    %v1276 = vunpack.c.l.b16 %v1126
    %v1277 = vpack.c.b16 %v1262, %v1261
    %v1278 = vpack.c.b16 %v1264, %v1263
    %v1279 = vpack.c.b16 %v1266, %v1265
    %v1280 = vpack.c.b16 %v1268, %v1267
    %v1281 = vpack.c.b16 %v1270, %v1269
    %v1282 = vpack.c.b16 %v1272, %v1271
    %v1283 = vpack.c.b16 %v1274, %v1273
    %v1284 = vpack.c.b16 %v1276, %v1275
    %1293 = vmatpush.bf16.msra.mxu0 %v1284
    %1294 = vmatpush.bf16.msra.mxu0 %v1283
    %1295 = vmatpush.bf16.msra.mxu0 %v1282
    %1296 = vmatpush.bf16.msra.mxu0 %v1281
    %1297 = vmatpush.bf16.msra.mxu0 %v1280
    %1298 = vmatpush.bf16.msra.mxu0 %v1279
    %1299 = vmatpush.bf16.msra.mxu0 %v1278
    %1300 = vmatpush.bf16.msra.mxu0 %v1277
    %1301 = vmatmul.bf16.gmra.mxu0 %v1244
    %v1302 = vpop.f32.mrf.mxu0
    %v1303 = vadd.f32 0.0, %v1302
    %v1304 = vpop.f32.mrf.mxu0
    %v1305 = vadd.f32 0.0, %v1304
    %1306 = vdwg.mxu0
    %v1323 = vunpack.c.l.b16 %v1095
    %v1324 = vunpack.c.l.b16 %v1096
    %v1325 = vunpack.c.l.b16 %v1097
    %v1326 = vunpack.c.l.b16 %v1098
    %v1327 = vunpack.c.l.b16 %v1099
    %v1328 = vunpack.c.l.b16 %v1100
    %v1329 = vunpack.c.l.b16 %v1101
    %v1330 = vunpack.c.l.b16 %v1102
    %v1331 = vunpack.c.l.b16 %v1103
    %v1332 = vunpack.c.l.b16 %v1104
    %v1333 = vunpack.c.l.b16 %v1105
    %v1334 = vunpack.c.l.b16 %v1106
    %v1335 = vunpack.c.l.b16 %v1107
    %v1336 = vunpack.c.l.b16 %v1108
    %v1337 = vunpack.c.l.b16 %v1109
    %v1338 = vunpack.c.l.b16 %v1110
    %v1339 = vpack.c.b16 %v1324, %v1323
    %v1340 = vpack.c.b16 %v1326, %v1325
    %v1341 = vpack.c.b16 %v1328, %v1327
    %v1342 = vpack.c.b16 %v1330, %v1329
    %v1343 = vpack.c.b16 %v1332, %v1331
    %v1344 = vpack.c.b16 %v1334, %v1333
    %v1345 = vpack.c.b16 %v1336, %v1335
    %v1346 = vpack.c.b16 %v1338, %v1337
    %1355 = vmatpush.bf16.msra.mxu0 %v1346
    %1356 = vmatpush.bf16.msra.mxu0 %v1345
    %1357 = vmatpush.bf16.msra.mxu0 %v1344
    %1358 = vmatpush.bf16.msra.mxu0 %v1343
    %1359 = vmatpush.bf16.msra.mxu0 %v1342
    %1360 = vmatpush.bf16.msra.mxu0 %v1341
    %1361 = vmatpush.bf16.msra.mxu0 %v1340
    %1362 = vmatpush.bf16.msra.mxu0 %v1339
    %1363 = vmatmul.bf16.gmra.mxu0 %v1243
    %v1364 = vpop.f32.mrf.mxu0
    %v1365 = vadd.f32 %v1303, %v1364
    %v1366 = vpop.f32.mrf.mxu0
    %v1367 = vadd.f32 %v1305, %v1366
    %1368 = vdwg.mxu0
    %v1369 = vpack.c.bf16 %v847, %v845
    %v1386 = vunpack.c.l.b16 %v1127
    %v1387 = vunpack.c.l.b16 %v1128
    %v1388 = vunpack.c.l.b16 %v1129
    %v1389 = vunpack.c.l.b16 %v1130
    %v1390 = vunpack.c.l.b16 %v1131
    %v1391 = vunpack.c.l.b16 %v1132
    %v1392 = vunpack.c.l.b16 %v1133
    %v1393 = vunpack.c.l.b16 %v1134
    %v1394 = vunpack.c.l.b16 %v1135
    %v1395 = vunpack.c.l.b16 %v1136
    %v1396 = vunpack.c.l.b16 %v1137
    %v1397 = vunpack.c.l.b16 %v1138
    %v1398 = vunpack.c.l.b16 %v1139
    %v1399 = vunpack.c.l.b16 %v1140
    %v1400 = vunpack.c.l.b16 %v1141
    %v1401 = vunpack.c.l.b16 %v1142
    %v1402 = vpack.c.b16 %v1387, %v1386
    %v1403 = vpack.c.b16 %v1389, %v1388
    %v1404 = vpack.c.b16 %v1391, %v1390
    %v1405 = vpack.c.b16 %v1393, %v1392
    %v1406 = vpack.c.b16 %v1395, %v1394
    %v1407 = vpack.c.b16 %v1397, %v1396
    %v1408 = vpack.c.b16 %v1399, %v1398
    %v1409 = vpack.c.b16 %v1401, %v1400
    %1418 = vmatpush.bf16.msra.mxu0 %v1409
    %1419 = vmatpush.bf16.msra.mxu0 %v1408
    %1420 = vmatpush.bf16.msra.mxu0 %v1407
    %1421 = vmatpush.bf16.msra.mxu0 %v1406
    %1422 = vmatpush.bf16.msra.mxu0 %v1405
    %1423 = vmatpush.bf16.msra.mxu0 %v1404
    %1424 = vmatpush.bf16.msra.mxu0 %v1403
    %1425 = vmatpush.bf16.msra.mxu0 %v1402
    %1426 = vmatmul.bf16.gmra.mxu0 %v1369
    %v1427 = vpop.f32.mrf.mxu0
    %v1428 = vadd.f32 0.0, %v1427
    %v1429 = vpop.f32.mrf.mxu0
    %v1430 = vadd.f32 0.0, %v1429
    %1431 = vdwg.mxu0
    %v1432 = vadd.f32 %v1365, %v1428
    %v1433 = vadd.f32 %v1367, %v1430
    %v1435 = vperm.slane %v1143, 0
    %v1437 = vadd.f32 %v1432, %v1435
    %v1438 = vadd.f32 %v1433, %v1435
    %v1439 = vmax.f32 %v1437, 0.0
    %v1440 = vmax.f32 %v1438, 0.0
    %v1441 = vpack.c.bf16 %v1440, %v1439
    %v1443 = vperm.slane %v1160, 0
    %v1444 = vperm.slane %v1160, 1
    %v1463 = vunpack.c.l.b16 %v1144
    %v1464 = vunpack.c.h.b16 %v1144
    %v1465 = vunpack.c.l.b16 %v1145
    %v1466 = vunpack.c.h.b16 %v1145
    %v1467 = vunpack.c.l.b16 %v1146
    %v1468 = vunpack.c.h.b16 %v1146
    %v1469 = vunpack.c.l.b16 %v1147
    %v1470 = vunpack.c.h.b16 %v1147
    %v1471 = vunpack.c.l.b16 %v1148
    %v1472 = vunpack.c.h.b16 %v1148
    %v1473 = vunpack.c.l.b16 %v1149
    %v1474 = vunpack.c.h.b16 %v1149
    %v1475 = vunpack.c.l.b16 %v1150
    %v1476 = vunpack.c.h.b16 %v1150
    %v1477 = vunpack.c.l.b16 %v1151
    %v1478 = vunpack.c.h.b16 %v1151
    %v1479 = vunpack.c.l.b16 %v1152
    %v1480 = vunpack.c.h.b16 %v1152
    %v1481 = vunpack.c.l.b16 %v1153
    %v1482 = vunpack.c.h.b16 %v1153
    %v1483 = vunpack.c.l.b16 %v1154
    %v1484 = vunpack.c.h.b16 %v1154
    %v1485 = vunpack.c.l.b16 %v1155
    %v1486 = vunpack.c.h.b16 %v1155
    %v1487 = vunpack.c.l.b16 %v1156
    %v1488 = vunpack.c.h.b16 %v1156
    %v1489 = vunpack.c.l.b16 %v1157
    %v1490 = vunpack.c.h.b16 %v1157
    %v1491 = vunpack.c.l.b16 %v1158
    %v1492 = vunpack.c.h.b16 %v1158
    %v1493 = vunpack.c.l.b16 %v1159
    %v1494 = vunpack.c.h.b16 %v1159
    %v1495 = vpack.c.b16 %v1465, %v1463
    %v1496 = vpack.c.b16 %v1466, %v1464
    %v1497 = vpack.c.b16 %v1469, %v1467
    %v1498 = vpack.c.b16 %v1470, %v1468
    %v1499 = vpack.c.b16 %v1473, %v1471
    %v1500 = vpack.c.b16 %v1474, %v1472
    %v1501 = vpack.c.b16 %v1477, %v1475
    %v1502 = vpack.c.b16 %v1478, %v1476
    %v1503 = vpack.c.b16 %v1481, %v1479
    %v1504 = vpack.c.b16 %v1482, %v1480
    %v1505 = vpack.c.b16 %v1485, %v1483
    %v1506 = vpack.c.b16 %v1486, %v1484
    %v1507 = vpack.c.b16 %v1489, %v1487
    %v1508 = vpack.c.b16 %v1490, %v1488
    %v1509 = vpack.c.b16 %v1493, %v1491
    %v1510 = vpack.c.b16 %v1494, %v1492
    %1527 = vmatpush.bf16.msra.mxu0 %v1509
    %1528 = vmatpush.bf16.msra.mxu0 %v1507
    %1529 = vmatpush.bf16.msra.mxu0 %v1505
    %1530 = vmatpush.bf16.msra.mxu0 %v1503
    %1531 = vmatpush.bf16.msra.mxu0 %v1501
    %1532 = vmatpush.bf16.msra.mxu0 %v1499
    %1533 = vmatpush.bf16.msra.mxu0 %v1497
    %1534 = vmatpush.bf16.msra.mxu0 %v1495
    %1535 = vmatmul.bf16.gmra.mxu0 %v1441
    %v1536 = vpop.f32.mrf.mxu0
    %v1537 = vadd.f32 %v1443, %v1536
    %v1538 = vpop.f32.mrf.mxu0
    %v1539 = vadd.f32 %v1443, %v1538
    %1540 = vdwg.mxu0
    %1541 = vmatpush.bf16.msra.mxu0 %v1510
    %1542 = vmatpush.bf16.msra.mxu0 %v1508
    %1543 = vmatpush.bf16.msra.mxu0 %v1506
    %1544 = vmatpush.bf16.msra.mxu0 %v1504
    %1545 = vmatpush.bf16.msra.mxu0 %v1502
    %1546 = vmatpush.bf16.msra.mxu0 %v1500
    %1547 = vmatpush.bf16.msra.mxu0 %v1498
    %1548 = vmatpush.bf16.msra.mxu0 %v1496
    %1549 = vmatmul.bf16.gmra.mxu0 %v1441
    %v1550 = vpop.f32.mrf.mxu0
    %v1551 = vadd.f32 %v1444, %v1550
    %v1552 = vpop.f32.mrf.mxu0
    %v1553 = vadd.f32 %v1444, %v1552
    %1554 = vdwg.mxu0
    %v1555 = vsel %vm863, %v1551, -inf
    %v1556 = vsel %vm863, %v1553, -inf
    %v1557 = vmax.f32 %v1555, %v1556
    %v1558 = vrot.slane %v1557, 4
    %v1559 = vmax.f32 %v1557, %v1558
    %v1560 = vrot.slane %v1559, 2
    %v1561 = vmax.f32 %v1559, %v1560
    %v1562 = vrot.slane %v1561, 1
    %v1563 = vmax.f32 %v1561, %v1562
    %v1564 = vsub.f32 %v1551, %v1563
    %v1565 = vsub.f32 %v1553, %v1563
    %v1566 = vmul.f32 %v1564, 1.442695
    %v1567 = vpow.pop %v1566
    %v1568 = vmul.f32 %v1565, 1.442695
    %v1569 = vpow.pop %v1568
    %1571 = vset.pattern.permute.xlu0 0
    %1572 = vperm.xlu0 %1571, %v1567
    %v1573 = vpop.permute.xlu0 %1572
    %1576 = vset.pattern.permute.xlu0 0
    %1577 = vperm.xlu0 %1576, %v1569
    %v1578 = vpop.permute.xlu0 %1577
    %v1580 = vmul.f32 %v1573, %v1537
    %v1581 = vmul.f32 %v1573, %v1551
    %v1582 = vmul.f32 %v1578, %v1539
    %v1583 = vmul.f32 %v1578, %v1553
    %1584 = vmatpush.msra.mxu0 0.0
    %1585 = vmatpush.msra.mxu0 0.0
    %1586 = vmatpush.msra.mxu0 0.0
    %1587 = vmatpush.msra.mxu0 0.0
    %1588 = vmatpush.msra.mxu0 0.0
    %1589 = vmatpush.msra.mxu0 0.0
    %1590 = vmatpush.msra.mxu0 0.0
    %1591 = vmatpush.msra.mxu0 0.0
    %1592 = vmatpush.msra.mxu0 0.0
    %1593 = vmatpush.msra.mxu0 0.0
    %1594 = vmatpush.msra.mxu0 0.0
    %1595 = vmatpush.msra.mxu0 0.0
    %1596 = vmatpush.msra.mxu0 0.0
    %1597 = vmatpush.msra.mxu0 0.0
    %1598 = vmatpush.msra.mxu0 %v1582
    %1599 = vmatpush.msra.mxu0 %v1580
    %1600 = vmatmul.f32.gmra.mxu0 %v895
    %v1601 = vpop.f32.mrf.mxu0
    %v1602 = vadd.f32 0.0, %v1601
    %1603 = vdwg.mxu0
    %1604 = vmatpush.msra.mxu0 0.0
    %1605 = vmatpush.msra.mxu0 0.0
    %1606 = vmatpush.msra.mxu0 0.0
    %1607 = vmatpush.msra.mxu0 0.0
    %1608 = vmatpush.msra.mxu0 0.0
    %1609 = vmatpush.msra.mxu0 0.0
    %1610 = vmatpush.msra.mxu0 0.0
    %1611 = vmatpush.msra.mxu0 0.0
    %1612 = vmatpush.msra.mxu0 0.0
    %1613 = vmatpush.msra.mxu0 0.0
    %1614 = vmatpush.msra.mxu0 0.0
    %1615 = vmatpush.msra.mxu0 0.0
    %1616 = vmatpush.msra.mxu0 0.0
    %1617 = vmatpush.msra.mxu0 0.0
    %1618 = vmatpush.msra.mxu0 %v1583
    %1619 = vmatpush.msra.mxu0 %v1581
    %1620 = vmatmul.f32.gmra.mxu0 %v895
    %v1621 = vpop.f32.mrf.mxu0
    %v1622 = vadd.f32 0.0, %v1621
    %1623 = vdwg.mxu0
    %v1624 = vmax.f32 %v1622, 1e-20
    %v1625 = vrcp.pop %v1624
    %1627 = vset.pattern.permute.xlu0 1
    %1628 = vperm.xlu0 %1627, %v1625
    %v1629 = vpop.permute.xlu0 %1628
    %v1631 = vmul.f32 %v1602, %v1629
    %v1632 = vpack.c.bf16 %v1631, %v1631
    %v1649 = vunpack.c.l.b16 %v1177
    %v1650 = vunpack.c.l.b16 %v1178
    %v1651 = vunpack.c.l.b16 %v1179
    %v1652 = vunpack.c.l.b16 %v1180
    %v1653 = vunpack.c.l.b16 %v1181
    %v1654 = vunpack.c.l.b16 %v1182
    %v1655 = vunpack.c.l.b16 %v1183
    %v1656 = vunpack.c.l.b16 %v1184
    %v1657 = vunpack.c.l.b16 %v1185
    %v1658 = vunpack.c.l.b16 %v1186
    %v1659 = vunpack.c.l.b16 %v1187
    %v1660 = vunpack.c.l.b16 %v1188
    %v1661 = vunpack.c.l.b16 %v1189
    %v1662 = vunpack.c.l.b16 %v1190
    %v1663 = vunpack.c.l.b16 %v1191
    %v1664 = vunpack.c.l.b16 %v1192
    %v1665 = vpack.c.b16 %v1650, %v1649
    %v1666 = vpack.c.b16 %v1652, %v1651
    %v1667 = vpack.c.b16 %v1654, %v1653
    %v1668 = vpack.c.b16 %v1656, %v1655
    %v1669 = vpack.c.b16 %v1658, %v1657
    %v1670 = vpack.c.b16 %v1660, %v1659
    %v1671 = vpack.c.b16 %v1662, %v1661
    %v1672 = vpack.c.b16 %v1664, %v1663
    %1681 = vmatpush.bf16.msra.mxu0 %v1672
    %1682 = vmatpush.bf16.msra.mxu0 %v1671
    %1683 = vmatpush.bf16.msra.mxu0 %v1670
    %1684 = vmatpush.bf16.msra.mxu0 %v1669
    %1685 = vmatpush.bf16.msra.mxu0 %v1668
    %1686 = vmatpush.bf16.msra.mxu0 %v1667
    %1687 = vmatpush.bf16.msra.mxu0 %v1666
    %1688 = vmatpush.bf16.msra.mxu0 %v1665
    %1689 = vmatmul.bf16.gmra.mxu0 %v1632
    %v1690 = vpop.f32.mrf.mxu0
    %v1691 = vadd.f32 0.0, %v1690
    %v1692 = vpop.f32.mrf.mxu0
    %1693 = vdwg.mxu0
    %v1710 = vunpack.c.l.b16 %v1161
    %v1711 = vunpack.c.l.b16 %v1162
    %v1712 = vunpack.c.l.b16 %v1163
    %v1713 = vunpack.c.l.b16 %v1164
    %v1714 = vunpack.c.l.b16 %v1165
    %v1715 = vunpack.c.l.b16 %v1166
    %v1716 = vunpack.c.l.b16 %v1167
    %v1717 = vunpack.c.l.b16 %v1168
    %v1718 = vunpack.c.l.b16 %v1169
    %v1719 = vunpack.c.l.b16 %v1170
    %v1720 = vunpack.c.l.b16 %v1171
    %v1721 = vunpack.c.l.b16 %v1172
    %v1722 = vunpack.c.l.b16 %v1173
    %v1723 = vunpack.c.l.b16 %v1174
    %v1724 = vunpack.c.l.b16 %v1175
    %v1725 = vunpack.c.l.b16 %v1176
    %v1726 = vpack.c.b16 %v1711, %v1710
    %v1727 = vpack.c.b16 %v1713, %v1712
    %v1728 = vpack.c.b16 %v1715, %v1714
    %v1729 = vpack.c.b16 %v1717, %v1716
    %v1730 = vpack.c.b16 %v1719, %v1718
    %v1731 = vpack.c.b16 %v1721, %v1720
    %v1732 = vpack.c.b16 %v1723, %v1722
    %v1733 = vpack.c.b16 %v1725, %v1724
    %1742 = vmatpush.bf16.msra.mxu0 %v1733
    %1743 = vmatpush.bf16.msra.mxu0 %v1732
    %1744 = vmatpush.bf16.msra.mxu0 %v1731
    %1745 = vmatpush.bf16.msra.mxu0 %v1730
    %1746 = vmatpush.bf16.msra.mxu0 %v1729
    %1747 = vmatpush.bf16.msra.mxu0 %v1728
    %1748 = vmatpush.bf16.msra.mxu0 %v1727
    %1749 = vmatpush.bf16.msra.mxu0 %v1726
    %1750 = vmatmul.bf16.gmra.mxu0 %v1211
    %v1751 = vpop.f32.mrf.mxu0
    %v1752 = vadd.f32 %v1691, %v1751
    %v1753 = vpop.f32.mrf.mxu0
    %1754 = vdwg.mxu0
    %v1756 = vperm.slane %v1193, 0
    %v1758 = vadd.f32 %v1752, %v1756
    %v1759 = vmax.f32 %v1758, 0.0
    %v1760 = vpack.c.bf16 %v1759, %v1759
    %v1762 = vperm.slane %v1210, 0
    %v1780 = vunpack.c.l.b16 %v1194
    %v1781 = vunpack.c.l.b16 %v1195
    %v1782 = vunpack.c.l.b16 %v1196
    %v1783 = vunpack.c.l.b16 %v1197
    %v1784 = vunpack.c.l.b16 %v1198
    %v1785 = vunpack.c.l.b16 %v1199
    %v1786 = vunpack.c.l.b16 %v1200
    %v1787 = vunpack.c.l.b16 %v1201
    %v1788 = vunpack.c.l.b16 %v1202
    %v1789 = vunpack.c.l.b16 %v1203
    %v1790 = vunpack.c.l.b16 %v1204
    %v1791 = vunpack.c.l.b16 %v1205
    %v1792 = vunpack.c.l.b16 %v1206
    %v1793 = vunpack.c.l.b16 %v1207
    %v1794 = vunpack.c.l.b16 %v1208
    %v1795 = vunpack.c.l.b16 %v1209
    %v1796 = vpack.c.b16 %v1781, %v1780
    %v1797 = vpack.c.b16 %v1783, %v1782
    %v1798 = vpack.c.b16 %v1785, %v1784
    %v1799 = vpack.c.b16 %v1787, %v1786
    %v1800 = vpack.c.b16 %v1789, %v1788
    %v1801 = vpack.c.b16 %v1791, %v1790
    %v1802 = vpack.c.b16 %v1793, %v1792
    %v1803 = vpack.c.b16 %v1795, %v1794
    %1812 = vmatpush.bf16.msra.mxu0 %v1803
    %1813 = vmatpush.bf16.msra.mxu0 %v1802
    %1814 = vmatpush.bf16.msra.mxu0 %v1801
    %1815 = vmatpush.bf16.msra.mxu0 %v1800
    %1816 = vmatpush.bf16.msra.mxu0 %v1799
    %1817 = vmatpush.bf16.msra.mxu0 %v1798
    %1818 = vmatpush.bf16.msra.mxu0 %v1797
    %1819 = vmatpush.bf16.msra.mxu0 %v1796
    %1820 = vmatmul.bf16.gmra.mxu0 %v1760
    %v1821 = vpop.f32.mrf.mxu0
    %v1822 = vadd.f32 %v1762, %v1821
    %v1823 = vpop.f32.mrf.mxu0
    %1824 = vdwg.mxu0
    %v1825 = vld [vmem:[#allocation28] sm:$0xf]
    %v1826 = vld [vmem:[#allocation28 + $0x4] sm:$0xf]
    %v1827 = vld [vmem:[#allocation28 + $0x8] sm:$0xf]
    %v1828 = vld [vmem:[#allocation28 + $0xc] sm:$0xf]
    %v1829 = vld [vmem:[#allocation28 + $0x10] sm:$0xf]
    %v1830 = vld [vmem:[#allocation28 + $0x14] sm:$0xf]
    %v1831 = vld [vmem:[#allocation28 + $0x18] sm:$0xf]
    %v1832 = vld [vmem:[#allocation28 + $0x1c] sm:$0xf]
    %v1833 = vld [vmem:[#allocation28 + $0x20] sm:$0xf]
    %v1834 = vld [vmem:[#allocation28 + $0x24] sm:$0xf]
    %v1835 = vld [vmem:[#allocation28 + $0x28] sm:$0xf]
    %v1836 = vld [vmem:[#allocation28 + $0x2c] sm:$0xf]
    %v1837 = vld [vmem:[#allocation28 + $0x30] sm:$0xf]
    %v1838 = vld [vmem:[#allocation28 + $0x34] sm:$0xf]
    %v1839 = vld [vmem:[#allocation28 + $0x38] sm:$0xf]
    %v1840 = vld [vmem:[#allocation28 + $0x3c] sm:$0xf]
    %v1841 = vld [vmem:[#allocation30] sm:$0xf]
    %v1842 = vld [vmem:[#allocation30 + $0x4] sm:$0xf]
    %v1843 = vld [vmem:[#allocation30 + $0x8] sm:$0xf]
    %v1844 = vld [vmem:[#allocation30 + $0xc] sm:$0xf]
    %v1845 = vld [vmem:[#allocation30 + $0x10] sm:$0xf]
    %v1846 = vld [vmem:[#allocation30 + $0x14] sm:$0xf]
    %v1847 = vld [vmem:[#allocation30 + $0x18] sm:$0xf]
    %v1848 = vld [vmem:[#allocation30 + $0x1c] sm:$0xf]
    %v1849 = vld [vmem:[#allocation30 + $0x20] sm:$0xf]
    %v1850 = vld [vmem:[#allocation30 + $0x24] sm:$0xf]
    %v1851 = vld [vmem:[#allocation30 + $0x28] sm:$0xf]
    %v1852 = vld [vmem:[#allocation30 + $0x2c] sm:$0xf]
    %v1853 = vld [vmem:[#allocation30 + $0x30] sm:$0xf]
    %v1854 = vld [vmem:[#allocation30 + $0x34] sm:$0xf]
    %v1855 = vld [vmem:[#allocation30 + $0x38] sm:$0xf]
    %v1856 = vld [vmem:[#allocation30 + $0x3c] sm:$0xf]
    %v1857 = vld [vmem:[#allocation31] sm:$0xf]
    %v1858 = vld [vmem:[#allocation31 + $0x4] sm:$0xf]
    %v1859 = vld [vmem:[#allocation31 + $0x8] sm:$0xf]
    %v1860 = vld [vmem:[#allocation31 + $0xc] sm:$0xf]
    %v1861 = vld [vmem:[#allocation31 + $0x10] sm:$0xf]
    %v1862 = vld [vmem:[#allocation31 + $0x14] sm:$0xf]
    %v1863 = vld [vmem:[#allocation31 + $0x18] sm:$0xf]
    %v1864 = vld [vmem:[#allocation31 + $0x1c] sm:$0xf]
    %v1865 = vld [vmem:[#allocation31 + $0x20] sm:$0xf]
    %v1866 = vld [vmem:[#allocation31 + $0x24] sm:$0xf]
    %v1867 = vld [vmem:[#allocation31 + $0x28] sm:$0xf]
    %v1868 = vld [vmem:[#allocation31 + $0x2c] sm:$0xf]
    %v1869 = vld [vmem:[#allocation31 + $0x30] sm:$0xf]
    %v1870 = vld [vmem:[#allocation31 + $0x34] sm:$0xf]
    %v1871 = vld [vmem:[#allocation31 + $0x38] sm:$0xf]
    %v1872 = vld [vmem:[#allocation31 + $0x3c] sm:$0xf]
    %v1873 = vld [vmem:[%s61] sm:$0x1]
    %v1874 = vld [vmem:[#allocation33] sm:$0xff]
    %v1875 = vld [vmem:[#allocation33 + $0x8] sm:$0xff]
    %v1876 = vld [vmem:[#allocation33 + $0x10] sm:$0xff]
    %v1877 = vld [vmem:[#allocation33 + $0x18] sm:$0xff]
    %v1878 = vld [vmem:[#allocation33 + $0x20] sm:$0xff]
    %v1879 = vld [vmem:[#allocation33 + $0x28] sm:$0xff]
    %v1880 = vld [vmem:[#allocation33 + $0x30] sm:$0xff]
    %v1881 = vld [vmem:[#allocation33 + $0x38] sm:$0xff]
    %v1882 = vld [vmem:[#allocation33 + $0x40] sm:$0xff]
    %v1883 = vld [vmem:[#allocation33 + $0x48] sm:$0xff]
    %v1884 = vld [vmem:[#allocation33 + $0x50] sm:$0xff]
    %v1885 = vld [vmem:[#allocation33 + $0x58] sm:$0xff]
    %v1886 = vld [vmem:[#allocation33 + $0x60] sm:$0xff]
    %v1887 = vld [vmem:[#allocation33 + $0x68] sm:$0xff]
    %v1888 = vld [vmem:[#allocation33 + $0x70] sm:$0xff]
    %v1889 = vld [vmem:[#allocation33 + $0x78] sm:$0xff]
    %v1890 = vld [vmem:[%s65] sm:$0x3]
    %v1891 = vld [vmem:[#allocation34] sm:$0xf]
    %v1892 = vld [vmem:[#allocation34 + $0x4] sm:$0xf]
    %v1893 = vld [vmem:[#allocation34 + $0x8] sm:$0xf]
    %v1894 = vld [vmem:[#allocation34 + $0xc] sm:$0xf]
    %v1895 = vld [vmem:[#allocation34 + $0x10] sm:$0xf]
    %v1896 = vld [vmem:[#allocation34 + $0x14] sm:$0xf]
    %v1897 = vld [vmem:[#allocation34 + $0x18] sm:$0xf]
    %v1898 = vld [vmem:[#allocation34 + $0x1c] sm:$0xf]
    %v1899 = vld [vmem:[#allocation34 + $0x20] sm:$0xf]
    %v1900 = vld [vmem:[#allocation34 + $0x24] sm:$0xf]
    %v1901 = vld [vmem:[#allocation34 + $0x28] sm:$0xf]
    %v1902 = vld [vmem:[#allocation34 + $0x2c] sm:$0xf]
    %v1903 = vld [vmem:[#allocation34 + $0x30] sm:$0xf]
    %v1904 = vld [vmem:[#allocation34 + $0x34] sm:$0xf]
    %v1905 = vld [vmem:[#allocation34 + $0x38] sm:$0xf]
    %v1906 = vld [vmem:[#allocation34 + $0x3c] sm:$0xf]
    %v1907 = vld [vmem:[#allocation36] sm:$0xf]
    %v1908 = vld [vmem:[#allocation36 + $0x4] sm:$0xf]
    %v1909 = vld [vmem:[#allocation36 + $0x8] sm:$0xf]
    %v1910 = vld [vmem:[#allocation36 + $0xc] sm:$0xf]
    %v1911 = vld [vmem:[#allocation36 + $0x10] sm:$0xf]
    %v1912 = vld [vmem:[#allocation36 + $0x14] sm:$0xf]
    %v1913 = vld [vmem:[#allocation36 + $0x18] sm:$0xf]
    %v1914 = vld [vmem:[#allocation36 + $0x1c] sm:$0xf]
    %v1915 = vld [vmem:[#allocation36 + $0x20] sm:$0xf]
    %v1916 = vld [vmem:[#allocation36 + $0x24] sm:$0xf]
    %v1917 = vld [vmem:[#allocation36 + $0x28] sm:$0xf]
    %v1918 = vld [vmem:[#allocation36 + $0x2c] sm:$0xf]
    %v1919 = vld [vmem:[#allocation36 + $0x30] sm:$0xf]
    %v1920 = vld [vmem:[#allocation36 + $0x34] sm:$0xf]
    %v1921 = vld [vmem:[#allocation36 + $0x38] sm:$0xf]
    %v1922 = vld [vmem:[#allocation36 + $0x3c] sm:$0xf]
    %v1923 = vld [vmem:[%s71] sm:$0x1]
    %v1924 = vld [vmem:[#allocation37] sm:$0xf]
    %v1925 = vld [vmem:[#allocation37 + $0x4] sm:$0xf]
    %v1926 = vld [vmem:[#allocation37 + $0x8] sm:$0xf]
    %v1927 = vld [vmem:[#allocation37 + $0xc] sm:$0xf]
    %v1928 = vld [vmem:[#allocation37 + $0x10] sm:$0xf]
    %v1929 = vld [vmem:[#allocation37 + $0x14] sm:$0xf]
    %v1930 = vld [vmem:[#allocation37 + $0x18] sm:$0xf]
    %v1931 = vld [vmem:[#allocation37 + $0x1c] sm:$0xf]
    %v1932 = vld [vmem:[#allocation37 + $0x20] sm:$0xf]
    %v1933 = vld [vmem:[#allocation37 + $0x24] sm:$0xf]
    %v1934 = vld [vmem:[#allocation37 + $0x28] sm:$0xf]
    %v1935 = vld [vmem:[#allocation37 + $0x2c] sm:$0xf]
    %v1936 = vld [vmem:[#allocation37 + $0x30] sm:$0xf]
    %v1937 = vld [vmem:[#allocation37 + $0x34] sm:$0xf]
    %v1938 = vld [vmem:[#allocation37 + $0x38] sm:$0xf]
    %v1939 = vld [vmem:[#allocation37 + $0x3c] sm:$0xf]
    %v1940 = vld [vmem:[%s75] sm:$0x1]
    %v1941 = vpack.c.bf16 %v1822, %v1822
    %v1943 = vsel %vm638, %v1941, 0
    %1945 = vmatpush.bf16.msra.mxu0 0
    %1946 = vmatpush.bf16.msra.mxu0 0
    %1947 = vmatpush.bf16.msra.mxu0 0
    %1948 = vmatpush.bf16.msra.mxu0 0
    %1949 = vmatpush.bf16.msra.mxu0 0
    %1950 = vmatpush.bf16.msra.mxu0 0
    %1951 = vmatpush.bf16.msra.mxu0 0
    %1952 = vmatpush.bf16.msra.mxu0 %v1943
    %1953 = vmatmul.bf16.gmra.mxu0 %v636
    %v1954 = vpop.f32.mrf.mxu0
    %v1955 = vadd.f32 0.0, %v1954
    %v1956 = vpop.f32.mrf.mxu0
    %v1957 = vadd.f32 0.0, %v1956
    %1958 = vdwg.mxu0
    %1959 = vmatpush.bf16.msra.mxu0 0
    %1960 = vmatpush.bf16.msra.mxu0 0
    %1961 = vmatpush.bf16.msra.mxu0 0
    %1962 = vmatpush.bf16.msra.mxu0 0
    %1963 = vmatpush.bf16.msra.mxu0 0
    %1964 = vmatpush.bf16.msra.mxu0 0
    %1965 = vmatpush.bf16.msra.mxu0 0
    %1966 = vmatpush.bf16.msra.mxu0 %v1943
    %1967 = vmatmul.bf16.gmra.mxu0 %v657
    %v1968 = vpop.f32.mrf.mxu0
    %v1969 = vadd.f32 0.0, %v1968
    %v1970 = vpop.f32.mrf.mxu0
    %v1971 = vadd.f32 0.0, %v1970
    %1972 = vdwg.mxu0
    %v1973 = vpack.c.bf16 %v1957, %v1955
    %v1974 = vpack.c.bf16 %v1971, %v1969
    %v1991 = vunpack.c.l.b16 %v1841
    %v1992 = vunpack.c.l.b16 %v1842
    %v1993 = vunpack.c.l.b16 %v1843
    %v1994 = vunpack.c.l.b16 %v1844
    %v1995 = vunpack.c.l.b16 %v1845
    %v1996 = vunpack.c.l.b16 %v1846
    %v1997 = vunpack.c.l.b16 %v1847
    %v1998 = vunpack.c.l.b16 %v1848
    %v1999 = vunpack.c.l.b16 %v1849
    %v2000 = vunpack.c.l.b16 %v1850
    %v2001 = vunpack.c.l.b16 %v1851
    %v2002 = vunpack.c.l.b16 %v1852
    %v2003 = vunpack.c.l.b16 %v1853
    %v2004 = vunpack.c.l.b16 %v1854
    %v2005 = vunpack.c.l.b16 %v1855
    %v2006 = vunpack.c.l.b16 %v1856
    %v2007 = vpack.c.b16 %v1992, %v1991
    %v2008 = vpack.c.b16 %v1994, %v1993
    %v2009 = vpack.c.b16 %v1996, %v1995
    %v2010 = vpack.c.b16 %v1998, %v1997
    %v2011 = vpack.c.b16 %v2000, %v1999
    %v2012 = vpack.c.b16 %v2002, %v2001
    %v2013 = vpack.c.b16 %v2004, %v2003
    %v2014 = vpack.c.b16 %v2006, %v2005
    %2023 = vmatpush.bf16.msra.mxu0 %v2014
    %2024 = vmatpush.bf16.msra.mxu0 %v2013
    %2025 = vmatpush.bf16.msra.mxu0 %v2012
    %2026 = vmatpush.bf16.msra.mxu0 %v2011
    %2027 = vmatpush.bf16.msra.mxu0 %v2010
    %2028 = vmatpush.bf16.msra.mxu0 %v2009
    %2029 = vmatpush.bf16.msra.mxu0 %v2008
    %2030 = vmatpush.bf16.msra.mxu0 %v2007
    %2031 = vmatmul.bf16.gmra.mxu0 %v1974
    %v2032 = vpop.f32.mrf.mxu0
    %v2033 = vadd.f32 0.0, %v2032
    %v2034 = vpop.f32.mrf.mxu0
    %v2035 = vadd.f32 0.0, %v2034
    %2036 = vdwg.mxu0
    %v2053 = vunpack.c.l.b16 %v1825
    %v2054 = vunpack.c.l.b16 %v1826
    %v2055 = vunpack.c.l.b16 %v1827
    %v2056 = vunpack.c.l.b16 %v1828
    %v2057 = vunpack.c.l.b16 %v1829
    %v2058 = vunpack.c.l.b16 %v1830
    %v2059 = vunpack.c.l.b16 %v1831
    %v2060 = vunpack.c.l.b16 %v1832
    %v2061 = vunpack.c.l.b16 %v1833
    %v2062 = vunpack.c.l.b16 %v1834
    %v2063 = vunpack.c.l.b16 %v1835
    %v2064 = vunpack.c.l.b16 %v1836
    %v2065 = vunpack.c.l.b16 %v1837
    %v2066 = vunpack.c.l.b16 %v1838
    %v2067 = vunpack.c.l.b16 %v1839
    %v2068 = vunpack.c.l.b16 %v1840
    %v2069 = vpack.c.b16 %v2054, %v2053
    %v2070 = vpack.c.b16 %v2056, %v2055
    %v2071 = vpack.c.b16 %v2058, %v2057
    %v2072 = vpack.c.b16 %v2060, %v2059
    %v2073 = vpack.c.b16 %v2062, %v2061
    %v2074 = vpack.c.b16 %v2064, %v2063
    %v2075 = vpack.c.b16 %v2066, %v2065
    %v2076 = vpack.c.b16 %v2068, %v2067
    %2085 = vmatpush.bf16.msra.mxu0 %v2076
    %2086 = vmatpush.bf16.msra.mxu0 %v2075
    %2087 = vmatpush.bf16.msra.mxu0 %v2074
    %2088 = vmatpush.bf16.msra.mxu0 %v2073
    %2089 = vmatpush.bf16.msra.mxu0 %v2072
    %2090 = vmatpush.bf16.msra.mxu0 %v2071
    %2091 = vmatpush.bf16.msra.mxu0 %v2070
    %2092 = vmatpush.bf16.msra.mxu0 %v2069
    %2093 = vmatmul.bf16.gmra.mxu0 %v1973
    %v2094 = vpop.f32.mrf.mxu0
    %v2095 = vadd.f32 %v2033, %v2094
    %v2096 = vpop.f32.mrf.mxu0
    %v2097 = vadd.f32 %v2035, %v2096
    %2098 = vdwg.mxu0
    %v2099 = vpack.c.bf16 %v1539, %v1537
    %v2116 = vunpack.c.l.b16 %v1857
    %v2117 = vunpack.c.l.b16 %v1858
    %v2118 = vunpack.c.l.b16 %v1859
    %v2119 = vunpack.c.l.b16 %v1860
    %v2120 = vunpack.c.l.b16 %v1861
    %v2121 = vunpack.c.l.b16 %v1862
    %v2122 = vunpack.c.l.b16 %v1863
    %v2123 = vunpack.c.l.b16 %v1864
    %v2124 = vunpack.c.l.b16 %v1865
    %v2125 = vunpack.c.l.b16 %v1866
    %v2126 = vunpack.c.l.b16 %v1867
    %v2127 = vunpack.c.l.b16 %v1868
    %v2128 = vunpack.c.l.b16 %v1869
    %v2129 = vunpack.c.l.b16 %v1870
    %v2130 = vunpack.c.l.b16 %v1871
    %v2131 = vunpack.c.l.b16 %v1872
    %v2132 = vpack.c.b16 %v2117, %v2116
    %v2133 = vpack.c.b16 %v2119, %v2118
    %v2134 = vpack.c.b16 %v2121, %v2120
    %v2135 = vpack.c.b16 %v2123, %v2122
    %v2136 = vpack.c.b16 %v2125, %v2124
    %v2137 = vpack.c.b16 %v2127, %v2126
    %v2138 = vpack.c.b16 %v2129, %v2128
    %v2139 = vpack.c.b16 %v2131, %v2130
    %2148 = vmatpush.bf16.msra.mxu0 %v2139
    %2149 = vmatpush.bf16.msra.mxu0 %v2138
    %2150 = vmatpush.bf16.msra.mxu0 %v2137
    %2151 = vmatpush.bf16.msra.mxu0 %v2136
    %2152 = vmatpush.bf16.msra.mxu0 %v2135
    %2153 = vmatpush.bf16.msra.mxu0 %v2134
    %2154 = vmatpush.bf16.msra.mxu0 %v2133
    %2155 = vmatpush.bf16.msra.mxu0 %v2132
    %2156 = vmatmul.bf16.gmra.mxu0 %v2099
    %v2157 = vpop.f32.mrf.mxu0
    %v2158 = vadd.f32 0.0, %v2157
    %v2159 = vpop.f32.mrf.mxu0
    %v2160 = vadd.f32 0.0, %v2159
    %2161 = vdwg.mxu0
    %v2162 = vadd.f32 %v2095, %v2158
    %v2163 = vadd.f32 %v2097, %v2160
    %v2165 = vperm.slane %v1873, 0
    %v2167 = vadd.f32 %v2162, %v2165
    %v2168 = vadd.f32 %v2163, %v2165
    %v2169 = vmax.f32 %v2167, 0.0
    %v2170 = vmax.f32 %v2168, 0.0
    %v2171 = vpack.c.bf16 %v2170, %v2169
    %v2173 = vperm.slane %v1890, 0
    %v2174 = vperm.slane %v1890, 1
    %v2193 = vunpack.c.l.b16 %v1874
    %v2194 = vunpack.c.h.b16 %v1874
    %v2195 = vunpack.c.l.b16 %v1875
    %v2196 = vunpack.c.h.b16 %v1875
    %v2197 = vunpack.c.l.b16 %v1876
    %v2198 = vunpack.c.h.b16 %v1876
    %v2199 = vunpack.c.l.b16 %v1877
    %v2200 = vunpack.c.h.b16 %v1877
    %v2201 = vunpack.c.l.b16 %v1878
    %v2202 = vunpack.c.h.b16 %v1878
    %v2203 = vunpack.c.l.b16 %v1879
    %v2204 = vunpack.c.h.b16 %v1879
    %v2205 = vunpack.c.l.b16 %v1880
    %v2206 = vunpack.c.h.b16 %v1880
    %v2207 = vunpack.c.l.b16 %v1881
    %v2208 = vunpack.c.h.b16 %v1881
    %v2209 = vunpack.c.l.b16 %v1882
    %v2210 = vunpack.c.h.b16 %v1882
    %v2211 = vunpack.c.l.b16 %v1883
    %v2212 = vunpack.c.h.b16 %v1883
    %v2213 = vunpack.c.l.b16 %v1884
    %v2214 = vunpack.c.h.b16 %v1884
    %v2215 = vunpack.c.l.b16 %v1885
    %v2216 = vunpack.c.h.b16 %v1885
    %v2217 = vunpack.c.l.b16 %v1886
    %v2218 = vunpack.c.h.b16 %v1886
    %v2219 = vunpack.c.l.b16 %v1887
    %v2220 = vunpack.c.h.b16 %v1887
    %v2221 = vunpack.c.l.b16 %v1888
    %v2222 = vunpack.c.h.b16 %v1888
    %v2223 = vunpack.c.l.b16 %v1889
    %v2224 = vunpack.c.h.b16 %v1889
    %v2225 = vpack.c.b16 %v2195, %v2193
    %v2226 = vpack.c.b16 %v2196, %v2194
    %v2227 = vpack.c.b16 %v2199, %v2197
    %v2228 = vpack.c.b16 %v2200, %v2198
    %v2229 = vpack.c.b16 %v2203, %v2201
    %v2230 = vpack.c.b16 %v2204, %v2202
    %v2231 = vpack.c.b16 %v2207, %v2205
    %v2232 = vpack.c.b16 %v2208, %v2206
    %v2233 = vpack.c.b16 %v2211, %v2209
    %v2234 = vpack.c.b16 %v2212, %v2210
    %v2235 = vpack.c.b16 %v2215, %v2213
    %v2236 = vpack.c.b16 %v2216, %v2214
    %v2237 = vpack.c.b16 %v2219, %v2217
    %v2238 = vpack.c.b16 %v2220, %v2218
    %v2239 = vpack.c.b16 %v2223, %v2221
    %v2240 = vpack.c.b16 %v2224, %v2222
    %2257 = vmatpush.bf16.msra.mxu0 %v2239
    %2258 = vmatpush.bf16.msra.mxu0 %v2237
    %2259 = vmatpush.bf16.msra.mxu0 %v2235
    %2260 = vmatpush.bf16.msra.mxu0 %v2233
    %2261 = vmatpush.bf16.msra.mxu0 %v2231
    %2262 = vmatpush.bf16.msra.mxu0 %v2229
    %2263 = vmatpush.bf16.msra.mxu0 %v2227
    %2264 = vmatpush.bf16.msra.mxu0 %v2225
    %2265 = vmatmul.bf16.gmra.mxu0 %v2171
    %v2266 = vpop.f32.mrf.mxu0
    %v2267 = vadd.f32 %v2173, %v2266
    %v2268 = vpop.f32.mrf.mxu0
    %v2269 = vadd.f32 %v2173, %v2268
    %2270 = vdwg.mxu0
    %2271 = vmatpush.bf16.msra.mxu0 %v2240
    %2272 = vmatpush.bf16.msra.mxu0 %v2238
    %2273 = vmatpush.bf16.msra.mxu0 %v2236
    %2274 = vmatpush.bf16.msra.mxu0 %v2234
    %2275 = vmatpush.bf16.msra.mxu0 %v2232
    %2276 = vmatpush.bf16.msra.mxu0 %v2230
    %2277 = vmatpush.bf16.msra.mxu0 %v2228
    %2278 = vmatpush.bf16.msra.mxu0 %v2226
    %2279 = vmatmul.bf16.gmra.mxu0 %v2171
    %v2280 = vpop.f32.mrf.mxu0
    %v2281 = vadd.f32 %v2174, %v2280
    %v2282 = vpop.f32.mrf.mxu0
    %v2283 = vadd.f32 %v2174, %v2282
    %2284 = vdwg.mxu0
    %v2285 = vsel %vm863, %v2281, -inf
    %v2286 = vsel %vm863, %v2283, -inf
    %v2287 = vmax.f32 %v2285, %v2286
    %v2288 = vrot.slane %v2287, 4
    %v2289 = vmax.f32 %v2287, %v2288
    %v2290 = vrot.slane %v2289, 2
    %v2291 = vmax.f32 %v2289, %v2290
    %v2292 = vrot.slane %v2291, 1
    %v2293 = vmax.f32 %v2291, %v2292
    %v2294 = vsub.f32 %v2281, %v2293
    %v2295 = vsub.f32 %v2283, %v2293
    %v2296 = vmul.f32 %v2294, 1.442695
    %v2297 = vpow.pop %v2296
    %v2298 = vmul.f32 %v2295, 1.442695
    %v2299 = vpow.pop %v2298
    %2301 = vset.pattern.permute.xlu0 0
    %2302 = vperm.xlu0 %2301, %v2297
    %v2303 = vpop.permute.xlu0 %2302
    %2306 = vset.pattern.permute.xlu0 0
    %2307 = vperm.xlu0 %2306, %v2299
    %v2308 = vpop.permute.xlu0 %2307
    %v2310 = vmul.f32 %v2303, %v2267
    %v2311 = vmul.f32 %v2303, %v2281
    %v2312 = vmul.f32 %v2308, %v2269
    %v2313 = vmul.f32 %v2308, %v2283
    %2314 = vmatpush.msra.mxu0 0.0
    %2315 = vmatpush.msra.mxu0 0.0
    %2316 = vmatpush.msra.mxu0 0.0
    %2317 = vmatpush.msra.mxu0 0.0
    %2318 = vmatpush.msra.mxu0 0.0
    %2319 = vmatpush.msra.mxu0 0.0
    %2320 = vmatpush.msra.mxu0 0.0
    %2321 = vmatpush.msra.mxu0 0.0
    %2322 = vmatpush.msra.mxu0 0.0
    %2323 = vmatpush.msra.mxu0 0.0
    %2324 = vmatpush.msra.mxu0 0.0
    %2325 = vmatpush.msra.mxu0 0.0
    %2326 = vmatpush.msra.mxu0 0.0
    %2327 = vmatpush.msra.mxu0 0.0
    %2328 = vmatpush.msra.mxu0 %v2312
    %2329 = vmatpush.msra.mxu0 %v2310
    %2330 = vmatmul.f32.gmra.mxu0 %v895
    %v2331 = vpop.f32.mrf.mxu0
    %v2332 = vadd.f32 0.0, %v2331
    %2333 = vdwg.mxu0
    %2334 = vmatpush.msra.mxu0 0.0
    %2335 = vmatpush.msra.mxu0 0.0
    %2336 = vmatpush.msra.mxu0 0.0
    %2337 = vmatpush.msra.mxu0 0.0
    %2338 = vmatpush.msra.mxu0 0.0
    %2339 = vmatpush.msra.mxu0 0.0
    %2340 = vmatpush.msra.mxu0 0.0
    %2341 = vmatpush.msra.mxu0 0.0
    %2342 = vmatpush.msra.mxu0 0.0
    %2343 = vmatpush.msra.mxu0 0.0
    %2344 = vmatpush.msra.mxu0 0.0
    %2345 = vmatpush.msra.mxu0 0.0
    %2346 = vmatpush.msra.mxu0 0.0
    %2347 = vmatpush.msra.mxu0 0.0
    %2348 = vmatpush.msra.mxu0 %v2313
    %2349 = vmatpush.msra.mxu0 %v2311
    %2350 = vmatmul.f32.gmra.mxu0 %v895
    %v2351 = vpop.f32.mrf.mxu0
    %v2352 = vadd.f32 0.0, %v2351
    %2353 = vdwg.mxu0
    %v2354 = vmax.f32 %v2352, 1e-20
    %v2355 = vrcp.pop %v2354
    %2357 = vset.pattern.permute.xlu0 1
    %2358 = vperm.xlu0 %2357, %v2355
    %v2359 = vpop.permute.xlu0 %2358
    %v2361 = vmul.f32 %v2332, %v2359
    %v2362 = vpack.c.bf16 %v2361, %v2361
    %v2379 = vunpack.c.l.b16 %v1907
    %v2380 = vunpack.c.l.b16 %v1908
    %v2381 = vunpack.c.l.b16 %v1909
    %v2382 = vunpack.c.l.b16 %v1910
    %v2383 = vunpack.c.l.b16 %v1911
    %v2384 = vunpack.c.l.b16 %v1912
    %v2385 = vunpack.c.l.b16 %v1913
    %v2386 = vunpack.c.l.b16 %v1914
    %v2387 = vunpack.c.l.b16 %v1915
    %v2388 = vunpack.c.l.b16 %v1916
    %v2389 = vunpack.c.l.b16 %v1917
    %v2390 = vunpack.c.l.b16 %v1918
    %v2391 = vunpack.c.l.b16 %v1919
    %v2392 = vunpack.c.l.b16 %v1920
    %v2393 = vunpack.c.l.b16 %v1921
    %v2394 = vunpack.c.l.b16 %v1922
    %v2395 = vpack.c.b16 %v2380, %v2379
    %v2396 = vpack.c.b16 %v2382, %v2381
    %v2397 = vpack.c.b16 %v2384, %v2383
    %v2398 = vpack.c.b16 %v2386, %v2385
    %v2399 = vpack.c.b16 %v2388, %v2387
    %v2400 = vpack.c.b16 %v2390, %v2389
    %v2401 = vpack.c.b16 %v2392, %v2391
    %v2402 = vpack.c.b16 %v2394, %v2393
    %2411 = vmatpush.bf16.msra.mxu0 %v2402
    %2412 = vmatpush.bf16.msra.mxu0 %v2401
    %2413 = vmatpush.bf16.msra.mxu0 %v2400
    %2414 = vmatpush.bf16.msra.mxu0 %v2399
    %2415 = vmatpush.bf16.msra.mxu0 %v2398
    %2416 = vmatpush.bf16.msra.mxu0 %v2397
    %2417 = vmatpush.bf16.msra.mxu0 %v2396
    %2418 = vmatpush.bf16.msra.mxu0 %v2395
    %2419 = vmatmul.bf16.gmra.mxu0 %v2362
    %v2420 = vpop.f32.mrf.mxu0
    %v2421 = vadd.f32 0.0, %v2420
    %v2422 = vpop.f32.mrf.mxu0
    %2423 = vdwg.mxu0
    %v2440 = vunpack.c.l.b16 %v1891
    %v2441 = vunpack.c.l.b16 %v1892
    %v2442 = vunpack.c.l.b16 %v1893
    %v2443 = vunpack.c.l.b16 %v1894
    %v2444 = vunpack.c.l.b16 %v1895
    %v2445 = vunpack.c.l.b16 %v1896
    %v2446 = vunpack.c.l.b16 %v1897
    %v2447 = vunpack.c.l.b16 %v1898
    %v2448 = vunpack.c.l.b16 %v1899
    %v2449 = vunpack.c.l.b16 %v1900
    %v2450 = vunpack.c.l.b16 %v1901
    %v2451 = vunpack.c.l.b16 %v1902
    %v2452 = vunpack.c.l.b16 %v1903
    %v2453 = vunpack.c.l.b16 %v1904
    %v2454 = vunpack.c.l.b16 %v1905
    %v2455 = vunpack.c.l.b16 %v1906
    %v2456 = vpack.c.b16 %v2441, %v2440
    %v2457 = vpack.c.b16 %v2443, %v2442
    %v2458 = vpack.c.b16 %v2445, %v2444
    %v2459 = vpack.c.b16 %v2447, %v2446
    %v2460 = vpack.c.b16 %v2449, %v2448
    %v2461 = vpack.c.b16 %v2451, %v2450
    %v2462 = vpack.c.b16 %v2453, %v2452
    %v2463 = vpack.c.b16 %v2455, %v2454
    %2472 = vmatpush.bf16.msra.mxu0 %v2463
    %2473 = vmatpush.bf16.msra.mxu0 %v2462
    %2474 = vmatpush.bf16.msra.mxu0 %v2461
    %2475 = vmatpush.bf16.msra.mxu0 %v2460
    %2476 = vmatpush.bf16.msra.mxu0 %v2459
    %2477 = vmatpush.bf16.msra.mxu0 %v2458
    %2478 = vmatpush.bf16.msra.mxu0 %v2457
    %2479 = vmatpush.bf16.msra.mxu0 %v2456
    %2480 = vmatmul.bf16.gmra.mxu0 %v1941
    %v2481 = vpop.f32.mrf.mxu0
    %v2482 = vadd.f32 %v2421, %v2481
    %v2483 = vpop.f32.mrf.mxu0
    %2484 = vdwg.mxu0
    %v2486 = vperm.slane %v1923, 0
    %v2488 = vadd.f32 %v2482, %v2486
    %v2489 = vmax.f32 %v2488, 0.0
    %v2490 = vpack.c.bf16 %v2489, %v2489
    %v2492 = vperm.slane %v1940, 0
    %v2510 = vunpack.c.l.b16 %v1924
    %v2511 = vunpack.c.l.b16 %v1925
    %v2512 = vunpack.c.l.b16 %v1926
    %v2513 = vunpack.c.l.b16 %v1927
    %v2514 = vunpack.c.l.b16 %v1928
    %v2515 = vunpack.c.l.b16 %v1929
    %v2516 = vunpack.c.l.b16 %v1930
    %v2517 = vunpack.c.l.b16 %v1931
    %v2518 = vunpack.c.l.b16 %v1932
    %v2519 = vunpack.c.l.b16 %v1933
    %v2520 = vunpack.c.l.b16 %v1934
    %v2521 = vunpack.c.l.b16 %v1935
    %v2522 = vunpack.c.l.b16 %v1936
    %v2523 = vunpack.c.l.b16 %v1937
    %v2524 = vunpack.c.l.b16 %v1938
    %v2525 = vunpack.c.l.b16 %v1939
    %v2526 = vpack.c.b16 %v2511, %v2510
    %v2527 = vpack.c.b16 %v2513, %v2512
    %v2528 = vpack.c.b16 %v2515, %v2514
    %v2529 = vpack.c.b16 %v2517, %v2516
    %v2530 = vpack.c.b16 %v2519, %v2518
    %v2531 = vpack.c.b16 %v2521, %v2520
    %v2532 = vpack.c.b16 %v2523, %v2522
    %v2533 = vpack.c.b16 %v2525, %v2524
    %2542 = vmatpush.bf16.msra.mxu0 %v2533
    %2543 = vmatpush.bf16.msra.mxu0 %v2532
    %2544 = vmatpush.bf16.msra.mxu0 %v2531
    %2545 = vmatpush.bf16.msra.mxu0 %v2530
    %2546 = vmatpush.bf16.msra.mxu0 %v2529
    %2547 = vmatpush.bf16.msra.mxu0 %v2528
    %2548 = vmatpush.bf16.msra.mxu0 %v2527
    %2549 = vmatpush.bf16.msra.mxu0 %v2526
    %2550 = vmatmul.bf16.gmra.mxu0 %v2490
    %v2551 = vpop.f32.mrf.mxu0
    %v2552 = vadd.f32 %v2492, %v2551
    %v2553 = vpop.f32.mrf.mxu0
    %2554 = vdwg.mxu0
    %v2555 = vld [vmem:[%s77] sm:$0xf]
    %v2556 = vld [vmem:[%s77 + $0x4] sm:$0xf]
    %v2557 = vld [vmem:[%s77 + $0x8] sm:$0xf]
    %v2558 = vld [vmem:[%s77 + $0xc] sm:$0xf]
    %v2559 = vld [vmem:[%s77 + $0x10] sm:$0xf]
    %v2560 = vld [vmem:[%s77 + $0x14] sm:$0xf]
    %v2561 = vld [vmem:[%s77 + $0x18] sm:$0xf]
    %v2562 = vld [vmem:[%s77 + $0x1c] sm:$0xf]
    %v2563 = vld [vmem:[%s77 + $0x20] sm:$0xf]
    %v2564 = vld [vmem:[%s77 + $0x24] sm:$0xf]
    %v2565 = vld [vmem:[%s77 + $0x28] sm:$0xf]
    %v2566 = vld [vmem:[%s77 + $0x2c] sm:$0xf]
    %v2567 = vld [vmem:[%s77 + $0x30] sm:$0xf]
    %v2568 = vld [vmem:[%s77 + $0x34] sm:$0xf]
    %v2569 = vld [vmem:[%s77 + $0x38] sm:$0xf]
    %v2570 = vld [vmem:[%s77 + $0x3c] sm:$0xf]
    %v2571 = vld [vmem:[%s79] sm:$0x1]
    %v2572 = vpack.c.bf16 %v2552, %v2552
    %v2574 = vperm.slane %v2571, 0
    %v2592 = vunpack.c.l.b16 %v2555
    %v2593 = vunpack.c.l.b16 %v2556
    %v2594 = vunpack.c.l.b16 %v2557
    %v2595 = vunpack.c.l.b16 %v2558
    %v2596 = vunpack.c.l.b16 %v2559
    %v2597 = vunpack.c.l.b16 %v2560
    %v2598 = vunpack.c.l.b16 %v2561
    %v2599 = vunpack.c.l.b16 %v2562
    %v2600 = vunpack.c.l.b16 %v2563
    %v2601 = vunpack.c.l.b16 %v2564
    %v2602 = vunpack.c.l.b16 %v2565
    %v2603 = vunpack.c.l.b16 %v2566
    %v2604 = vunpack.c.l.b16 %v2567
    %v2605 = vunpack.c.l.b16 %v2568
    %v2606 = vunpack.c.l.b16 %v2569
    %v2607 = vunpack.c.l.b16 %v2570
    %v2608 = vpack.c.b16 %v2593, %v2592
    %v2609 = vpack.c.b16 %v2595, %v2594
    %v2610 = vpack.c.b16 %v2597, %v2596
    %v2611 = vpack.c.b16 %v2599, %v2598
    %v2612 = vpack.c.b16 %v2601, %v2600
    %v2613 = vpack.c.b16 %v2603, %v2602
    %v2614 = vpack.c.b16 %v2605, %v2604
    %v2615 = vpack.c.b16 %v2607, %v2606
    %2624 = vmatpush.bf16.msra.mxu0 %v2615
    %2625 = vmatpush.bf16.msra.mxu0 %v2614
    %2626 = vmatpush.bf16.msra.mxu0 %v2613
    %2627 = vmatpush.bf16.msra.mxu0 %v2612
    %2628 = vmatpush.bf16.msra.mxu0 %v2611
    %2629 = vmatpush.bf16.msra.mxu0 %v2610
    %2630 = vmatpush.bf16.msra.mxu0 %v2609
    %2631 = vmatpush.bf16.msra.mxu0 %v2608
    %2632 = vmatmul.bf16.gmra.mxu0 %v2572
    %v2633 = vpop.f32.mrf.mxu0
    %v2634 = vadd.f32 %v2574, %v2633
    %v2635 = vpop.f32.mrf.mxu0
    %2636 = vdwg.mxu0
    %v2637 = vmax.f32 %v2634, 0.0
    %v2638 = vld [vmem:[%s81] sm:$0xf]
    %v2639 = vld [vmem:[%s81 + $0x4] sm:$0xf]
    %v2640 = vld [vmem:[%s81 + $0x8] sm:$0xf]
    %v2641 = vld [vmem:[%s81 + $0xc] sm:$0xf]
    %v2642 = vld [vmem:[%s81 + $0x10] sm:$0xf]
    %v2643 = vld [vmem:[%s81 + $0x14] sm:$0xf]
    %v2644 = vld [vmem:[%s81 + $0x18] sm:$0xf]
    %v2645 = vld [vmem:[%s81 + $0x1c] sm:$0xf]
    %v2646 = vld [vmem:[%s83] sm:$0x1]
    %v2647 = vpack.c.bf16 %v2637, %v2637
    %v2649 = vperm.slane %v2646, 0
    %v2659 = vunpack.c.l.b16 %v2638
    %v2660 = vunpack.c.l.b16 %v2639
    %v2661 = vunpack.c.l.b16 %v2640
    %v2662 = vunpack.c.l.b16 %v2641
    %v2663 = vunpack.c.l.b16 %v2642
    %v2664 = vunpack.c.l.b16 %v2643
    %v2665 = vunpack.c.l.b16 %v2644
    %v2666 = vunpack.c.l.b16 %v2645
    %v2667 = vpack.c.b16 %v2660, %v2659
    %v2668 = vpack.c.b16 %v2662, %v2661
    %v2669 = vpack.c.b16 %v2664, %v2663
    %v2670 = vpack.c.b16 %v2666, %v2665
    %vm2675 = vcmask 523264
    %v2677 = vsel %vm2675, %v2647, 0
    %2679 = vmatpush.bf16.msra.mxu0 0
    %2680 = vmatpush.bf16.msra.mxu0 0
    %2681 = vmatpush.bf16.msra.mxu0 0
    %2682 = vmatpush.bf16.msra.mxu0 0
    %2683 = vmatpush.bf16.msra.mxu0 %v2670
    %2684 = vmatpush.bf16.msra.mxu0 %v2669
    %2685 = vmatpush.bf16.msra.mxu0 %v2668
    %2686 = vmatpush.bf16.msra.mxu0 %v2667
    %2687 = vmatmul.bf16.gmra.mxu0 %v2677
    %v2688 = vpop.f32.mrf.mxu0
    %v2689 = vadd.f32 %v2649, %v2688
    %v2690 = vpop.f32.mrf.mxu0
    %2691 = vdwg.mxu0
    %v2692 = vmax.f32 %v2689, 0.0
    %v2693 = vld [vmem:[%s85] sm:$0xf]
    %v2694 = vld [vmem:[%s85 + $0x4] sm:$0xf]
    %v2695 = vld [vmem:[%s85 + $0x8] sm:$0xf]
    %v2696 = vld [vmem:[%s85 + $0xc] sm:$0xf]
    %v2697 = vld [vmem:[%s87] sm:$0x1]
    %v2698 = vpack.c.bf16 %v2692, %v2692
    %v2700 = vperm.slane %v2697, 0
    %v2706 = vunpack.c.l.b16 %v2693
    %v2707 = vunpack.c.l.b16 %v2694
    %v2708 = vunpack.c.l.b16 %v2695
    %v2709 = vunpack.c.l.b16 %v2696
    %v2710 = vpack.c.b16 %v2707, %v2706
    %v2711 = vpack.c.b16 %v2709, %v2708
    %vm2714 = vcmask 261120
    %v2716 = vsel %vm2714, %v2698, 0
    %2718 = vmatpush.bf16.msra.mxu0 0
    %2719 = vmatpush.bf16.msra.mxu0 0
    %2720 = vmatpush.bf16.msra.mxu0 0
    %2721 = vmatpush.bf16.msra.mxu0 0
    %2722 = vmatpush.bf16.msra.mxu0 0
    %2723 = vmatpush.bf16.msra.mxu0 0
    %2724 = vmatpush.bf16.msra.mxu0 %v2711
    %2725 = vmatpush.bf16.msra.mxu0 %v2710
    %2726 = vmatmul.bf16.gmra.mxu0 %v2716
    %v2727 = vpop.f32.mrf.mxu0
    %v2728 = vadd.f32 %v2700, %v2727
    %v2729 = vpop.f32.mrf.mxu0
    %2730 = vdwg.mxu0
    %2731 = vst [vmem:[%s89] sm:$0xff] %v2728
    // Predicated region
    $region274: #{stack_gnn_forward.1} parent=1 // pred_check
      _
    $region275: #{stack_gnn_forward.1} parent=1 // pred_check_branch
      %2733 = sbr.rel (0) target = $region277
    $region276: #{stack_gnn_forward.1} parent=1 // pred_region
      _
    $region277: #{stack_gnn_forward.1} parent=1 // pred_fallthru
      _
    // Predicated region
    $region278: #{stack_gnn_forward.1} parent=1 // pred_check
      _
    $region279: #{stack_gnn_forward.1} parent=1 // pred_check_branch
      %2735 = sbr.rel (0) target = $region281
    $region280: #{stack_gnn_forward.1} parent=1 // pred_region
      _
    $region281: #{stack_gnn_forward.1} parent=1 // pred_fallthru
      _
    %2736 = vsyncpa [#allocation3], 1
    %2737 = vsyncpa [#allocation5], 1
    %2738 = vsyncpa [#allocation8], 1
    %2739 = vsyncpa [#allocation11], 1
    %2740 = vsyncpa [#allocation14], 1
    %2741 = vsyncpa [#allocation17], 1
    %2742 = vsyncpa [#allocation20], 1
    %2743 = vsyncpa [#allocation23], 1
    %2744 = vsyncpa [#allocation26], 1
    %2745 = vsyncpa [#allocation29], 1
    %2746 = vsyncpa [#allocation32], 1
    %2747 = vsyncpa [#allocation35], 1
    %2748 = vsyncpa [#allocation38], 1

</llo_original>
